<compile_context>
chip_gen: v7x
topology: tpu7x:2x2x1
jax: 0.10.0
libtpu: 0.0.40
codegen_flags: <defaults>
</compile_context>

<pallas_src>
import functools

import jax
import jax.numpy as jnp
from jax import lax
from jax.experimental import pallas as pl
from jax.experimental.pallas import tpu as pltpu

# ----------------------------- config ---------------------------------------
B = 2            # batch
CIN = 3          # RGB
H = W = 16       # spatial
SEG_CLASSES = 8  # stand-in for DeepLab's 21 classes
C1 = 32          # stem / residual-block width
FEAT = 64        # stand-in for ResNet's 2048-dim feature
STATE_H = 128    # state_processor hidden width (as in the module)
NUM_OUT = 2      # classifier outputs
OUT_LANES = 128  # lane-dense output block width (sliced to NUM_OUT outside)


# ----------------------------- packing helper --------------------------------
def _pack_slab(entries, dtype, align, width=128):
    """Stack 2-D (k, n<=width) arrays into one (rows, width) slab.

    Each entry starts at a row offset aligned to `align` sublanes (8 for f32,
    16 for bf16) so every in-kernel slice is sublane-aligned.
    Returns (slab, {name: (row_offset, k, n)}).
    """
    offs, parts, off = {}, [], 0
    for name, arr in entries:
        k, n = arr.shape
        assert n <= width
        pad_k = (-k) % align
        parts.append(jnp.pad(arr.astype(dtype), ((0, pad_k), (0, width - n))))
        offs[name] = (off, k, n)
        off += k + pad_k
    return jnp.concatenate(parts, axis=0), offs


# ----------------------------- fused Pallas kernel ---------------------------
def _fused_forward_kernel(*refs, use_states, woffs, boffs, bpb, hw, img_w,
                          margin):
    if use_states:
        x_ref, w_ref, b_ref, st_ref, o_ref, pad_ref, patch_ref = refs
    else:
        x_ref, w_ref, b_ref, o_ref, pad_ref, patch_ref = refs
        st_ref = None

    f32, bf16 = jnp.float32, jnp.bfloat16
    c_in = x_ref.shape[-1]
    seg_classes = boffs["seg_w"][2]
    pad_len = hw + 2 * margin

    def Wm(name):                                   # bf16 weight slab slice
        off, k, n = woffs[name]
        return w_ref[pl.ds(off, k), pl.ds(0, n)]

    def Bv(name):                                   # f32 bias slab slice (1,n)
        off, _, n = boffs[name]
        return b_ref[pl.ds(off, 1), pl.ds(0, n)]

    x = x_ref[...]                                  # (bpb*hw, c_in) f32

    # -- segmentation head on the VPU (exact f32 so the argmax decision is
    #    bit-faithful to the f32 reference; K=c_in is far too small for MXU).
    wseg = b_ref[pl.ds(boffs["seg_w"][0], c_in), pl.ds(0, seg_classes)]
    logits = x[:, 0:1] * wseg[0:1, :]
    for c in range(1, c_in):
        logits = logits + x[:, c:c + 1] * wseg[c:c + 1, :]
    logits = logits + Bv("seg_b")
    mmax = jnp.max(logits, axis=-1, keepdims=True)
    ids = lax.broadcasted_iota(jnp.int32, logits.shape, 1)
    cls = jnp.min(jnp.where(logits == mmax, ids, seg_classes),
                  axis=-1, keepdims=True)           # first-max index (= argmax)
    masked = x * cls.astype(f32)                    # (bpb*hw, c_in)

    # -- 3x3 stem conv (padding=1): build ONE lane-concatenated (hw, 9*c_in)
    #    patch slab per image (static lane offsets 0,3,...,24) and run a
    #    single K=27 MXU matmul instead of nine K=3 matmuls.
    row = lax.broadcasted_iota(jnp.int32, (hw, 1), 0)
    if (img_w & (img_w - 1)) == 0:                  # power-of-two width
        col = row & (img_w - 1)
    else:
        col = row % img_w
    keep_l = (col > 0).astype(f32)                  # tap column offset -1 valid
    keep_r = (col < img_w - 1).astype(f32)          # tap column offset +1 valid
    zmargin = jnp.zeros((margin, c_in), f32)

    for im in range(bpb):
        base = im * pad_len
        # Zero only the margin strips; the interior rows are fully overwritten
        # every step.  Unconditional (not program_id==0-gated) so it stays
        # correct when the parallel grid is split across TensorCores.
        pad_ref[pl.ds(base, margin), :] = zmargin
        pad_ref[pl.ds(base + margin + hw, margin), :] = zmargin
        pad_ref[pl.ds(base + margin, hw), :] = masked[im * hw:(im + 1) * hw, :]
        for t in range(9):
            dy, dx = divmod(t, 3)
            shift = (dy - 1) * img_w + (dx - 1)
            tap = pad_ref[pl.ds(base + margin + shift, hw), :]   # (hw, c_in)
            if dx == 0:
                tap = tap * keep_l
            elif dx == 2:
                tap = tap * keep_r
            patch_ref[pl.ds(im * hw, hw), pl.ds(t * c_in, c_in)] = tap

    patch = patch_ref[...].astype(bf16)                          # (bpb*hw, 27)
    f = jnp.dot(patch, Wm("stem"), preferred_element_type=f32) + Bv("stem_b")
    f = jnp.maximum(f, 0.0)                                      # (bpb*hw, C1)

    # -- residual block + head (bf16 MXU operands, f32 accumulation) ----------
    r = jnp.maximum(jnp.dot(f.astype(bf16), Wm("res_a"),
                            preferred_element_type=f32) + Bv("res_a_b"), 0.0)
    f = jnp.maximum(jnp.dot(r.astype(bf16), Wm("res_b"),
                            preferred_element_type=f32) + Bv("res_b_b") + f,
                    0.0)
    hf = jnp.maximum(jnp.dot(f.astype(bf16), Wm("head"),
                             preferred_element_type=f32) + Bv("head_b"), 0.0)

    # -- global average pool as a (bpb, bpb*hw) block-diagonal MXU matmul -----
    if bpb == 1:
        pool = jnp.full((1, hw), 1.0 / hw, f32)
    else:
        prow = lax.broadcasted_iota(jnp.int32, (bpb, bpb * hw), 0)
        pcol = lax.broadcasted_iota(jnp.int32, (bpb, bpb * hw), 1)
        lo = prow * hw
        pool = jnp.where((pcol >= lo) & (pcol < lo + hw), 1.0 / hw, 0.0)
    gfeat = jnp.dot(pool.astype(bf16), hf.astype(bf16),
                    preferred_element_type=f32)                  # (bpb, FEAT)

    # -- classifier (+ optional state branch); lane-dense 128-wide output -----
    out = jnp.dot(gfeat.astype(bf16), Wm("cls_img"),
                  preferred_element_type=f32) + Bv("cls_b")      # (bpb, 128)
    if use_states:
        s = st_ref[0]                                            # (bpb, 3) f32
        s = jnp.maximum(jnp.dot(s.astype(bf16), Wm("st1"),
                                preferred_element_type=f32) + Bv("st1_b"), 0.0)
        s = jnp.maximum(jnp.dot(s.astype(bf16), Wm("st2"),
                                preferred_element_type=f32) + Bv("st2_b"), 0.0)
        out = out + jnp.dot(s.astype(bf16), Wm("cls_state"),
                            preferred_element_type=f32)
    o_ref[0] = out.astype(o_ref.dtype)


# ----------------------------- wrapper ---------------------------------------
@functools.partial(jax.jit, static_argnames=("use_states", "num_steps"))
def forward(params, images, states=None, use_states=False, num_steps=None):
    # images: (B, C, H, W) NCHW -> (B*HW, C) pixel slab for the kernel.
    b, c_in, h, w = images.shape
    hw = h * w
    if num_steps is None:
        num_steps = 2 if b % 2 == 0 else 1     # 2: feeds both v7x cores
    assert b % num_steps == 0
    bpb = b // num_steps                       # images per grid step

    margin = ((w + 1 + 7) // 8) * 8            # 8-aligned vertical pad margin
    assert margin >= w + 1, "tap reads must stay inside the per-image region"
    pad_len = hw + 2 * margin
    assert hw % 8 == 0 and pad_len % 8 == 0

    x = jnp.transpose(images, (0, 2, 3, 1)).reshape(b * hw, c_in)

    seg_w, seg_b = params["seg"]
    stem_w, stem_b = params["stem"]            # (9*c_in, C1)
    wa, ba = params["res_a"]
    wb, bb = params["res_b"]
    wh, bh = params["head"]
    wc, bc = params["classifier"]
    feat = wh.shape[1]
    num_out = wc.shape[1]

    pad_cols = lambda a, n: jnp.pad(a, ((0, 0), (0, n - a.shape[1])))

    # bf16 weight slab (matmul operands) and f32 bias/seg slab.
    w_entries = [("stem", stem_w), ("res_a", wa), ("res_b", wb), ("head", wh),
                 ("cls_img", pad_cols(wc[:feat], OUT_LANES))]
    b_entries = [("seg_w", seg_w),
                 ("seg_b", seg_b.reshape(1, -1)),
                 ("stem_b", stem_b.reshape(1, -1)),
                 ("res_a_b", ba.reshape(1, -1)),
                 ("res_b_b", bb.reshape(1, -1)),
                 ("head_b", bh.reshape(1, -1)),
                 ("cls_b", pad_cols(bc.reshape(1, -1), OUT_LANES))]
    if use_states:
        w1, b1 = params["state1"]
        w2, b2 = params["state2"]
        w_entries += [("st1", w1), ("st2", w2),
                      ("cls_state", pad_cols(wc[feat:], OUT_LANES))]
        b_entries += [("st1_b", b1.reshape(1, -1)), ("st2_b", b2.reshape(1, -1))]

    wslab, woffs = _pack_slab(w_entries, jnp.bfloat16, align=16)
    bslab, boffs = _pack_slab(b_entries, jnp.float32, align=8)

    args = [x, wslab, bslab]
    in_specs = [pl.BlockSpec((bpb * hw, c_in), lambda i: (i, 0)),
                pl.BlockSpec(wslab.shape, lambda i: (0, 0)),
                pl.BlockSpec(bslab.shape, lambda i: (0, 0))]
    if use_states:
        sdim = states.shape[-1]
        args.append(states.reshape(num_steps, bpb, sdim))
        in_specs.append(pl.BlockSpec((1, bpb, sdim), lambda i: (i, 0, 0)))

    kernel = functools.partial(
        _fused_forward_kernel, use_states=use_states, woffs=woffs, boffs=boffs,
        bpb=bpb, hw=hw, img_w=w, margin=margin)

    out = pl.pallas_call(
        kernel,
        out_shape=jax.ShapeDtypeStruct((num_steps, bpb, OUT_LANES), jnp.float32),
        grid=(num_steps,),
        in_specs=in_specs,
        out_specs=pl.BlockSpec((1, bpb, OUT_LANES), lambda i: (i, 0, 0)),
        scratch_shapes=[pltpu.VMEM((bpb * pad_len, c_in), jnp.float32),   # pad
                        pltpu.VMEM((bpb * hw, 9 * c_in), jnp.float32)],   # patch
        compiler_params=pltpu.CompilerParams(dimension_semantics=("parallel",)),
    )(*args)
    # Lane-dense (.,128) block leaves the kernel; slice to the real logits.
    return out.reshape(b, OUT_LANES)[:, :num_out]


# ----------------------------- pure-JAX reference ----------------------------
def reference_forward(params, images, states=None, use_states=False):
    hp = lax.Precision.HIGHEST
    b, c, h, w = images.shape
    pix = jnp.transpose(images, (0, 2, 3, 1)).reshape(b, h * w, c)
    wseg, bseg = params["seg"]
    logits = jnp.einsum("bpc,cs->bps", pix, wseg, precision=hp) + bseg
    cls = jnp.argmax(logits, axis=-1)[..., None].astype(jnp.float32)
    masked = (pix * cls).reshape(b, h, w, c)
    xp = jnp.pad(masked, ((0, 0), (1, 1), (1, 1), (0, 0)))
    cols = [xp[:, dy:dy + h, dx:dx + w, :] for dy in range(3) for dx in range(3)]
    patches = jnp.concatenate(cols, axis=-1).reshape(b, h * w, 9 * c)

    def lin(t, wb_, res=None, relu=True):
        y = jnp.einsum("bpk,kn->bpn", t, wb_[0], precision=hp) + wb_[1]
        if res is not None:
            y = y + res
        return jnp.maximum(y, 0.0) if relu else y

    f = lin(patches, params["stem"])
    r = lin(f, params["res_a"])
    f = lin(r, params["res_b"], res=f)
    hf = lin(f, params["head"])
    feat = jnp.mean(hf, axis=1)
    if use_states and states is not None:
        s = jnp.maximum(jnp.dot(states, params["state1"][0], precision=hp)
                        + params["state1"][1], 0.0)
        s = jnp.maximum(jnp.dot(s, params["state2"][0], precision=hp)
                        + params["state2"][1], 0.0)
        feat = jnp.concatenate([feat, s], axis=1)
    wc, bc = params["classifier"]
    return jnp.dot(feat, wc, precision=hp) + bc


# ----------------------------- params ----------------------------------------
def init_params(key, use_states=False):
    def dense(k, fan_in, fan_out):
        kw, kb = jax.random.split(k)
        w = jax.random.normal(kw, (fan_in, fan_out), jnp.float32) / jnp.sqrt(fan_in)
        b = jax.random.normal(kb, (fan_out,), jnp.float32) * 0.01
        return w, b

    keys = jax.random.split(key, 8)
    p = {
        "seg": dense(keys[0], CIN, SEG_CLASSES),      # 1x1 segmentation head
        "stem": dense(keys[1], 9 * CIN, C1),          # 3x3 conv (in-kernel im2col)
        "res_a": dense(keys[2], C1, C1),              # residual block conv a
        "res_b": dense(keys[3], C1, C1),              # residual block conv b
        "head": dense(keys[4], C1, FEAT),             # 1x1 conv to feature width
    }
    feat_dim = FEAT
    if use_states:
        p["state1"] = dense(keys[5], 3, STATE_H)
        p["state2"] = dense(keys[6], STATE_H, STATE_H)
        feat_dim += STATE_H
    p["classifier"] = dense(keys[7], feat_dim, NUM_OUT)
    return p


# ----------------------------- main -------------------------------------------
if __name__ == "__main__":
    key = jax.random.PRNGKey(0)
    k_img, k_state, k_params = jax.random.split(key, 3)
    images = jax.random.normal(k_img, (B, CIN, H, W), jnp.float32)
    states = jax.random.normal(k_state, (B, 3), jnp.float32)

    # Tolerances: kernel uses bf16 MXU operands (f32 accumulation); reference
    # is f32 with Precision.HIGHEST, so allow ~1e-2-level absolute slack.
    RTOL, ATOL = 5e-2, 7.5e-2

    # default path: use_states=False, num_steps=2 (one image per core on v7x)
    params = init_params(k_params, use_states=False)
    ref = reference_forward(params, images, use_states=False)
    out = jax.block_until_ready(forward(params, images, use_states=False))
    assert out.shape == (B, NUM_OUT)
    assert bool(jnp.allclose(out, ref, rtol=RTOL, atol=ATOL))

    # single-grid-step batched path (preferred on v5e/v6e: no per-step overhead)
    out1 = jax.block_until_ready(
        forward(params, images, use_states=False, num_steps=1))
    assert out1.shape == (B, NUM_OUT)
    assert bool(jnp.allclose(out1, ref, rtol=RTOL, atol=ATOL))

    # optional path: use_states=True (state_processor + concat + wider classifier)
    params_s = init_params(k_params, use_states=True)
    ref_s = reference_forward(params_s, images, states=states, use_states=True)
    out_s = jax.block_until_ready(
        forward(params_s, images, states=states, use_states=True))
    assert out_s.shape == (B, NUM_OUT)
    assert bool(jnp.allclose(out_s, ref_s, rtol=RTOL, atol=ATOL))

    print("KERNEL_OK")
</pallas_src>

<mosaic_0001>
module attributes {stable_mosaic.version = 11 : i64} {
  func.func @_fused_forward_kernel(%arg0: i32, %arg1: memref<256x3xf32, #tpu.memory_space<vmem>>, %arg2: memref<192x128xbf16, #tpu.memory_space<vmem>>, %arg3: memref<56x128xf32, #tpu.memory_space<vmem>>, %arg4: memref<1x1x128xf32, #tpu.memory_space<vmem>>, %arg5: memref<304x3xf32, #tpu.memory_space<vmem>>, %arg6: memref<256x27xf32, #tpu.memory_space<vmem>>) attributes {dimension_semantics = [#tpu.dimension_semantics<parallel>], iteration_bounds = array<i64: 2>, scalar_prefetch = 0 : i64, scratch_operands = 2 : i64, tpu.core_type = #tpu.core_type<tc>, window_params = [{transform_indices = @transform_0, window_bounds = array<i64: 256, 3>}, {pipeline_mode = #tpu.pipeline_mode<synchronous>, transform_indices = @transform_1, window_bounds = array<i64: 192, 128>}, {pipeline_mode = #tpu.pipeline_mode<synchronous>, transform_indices = @transform_2, window_bounds = array<i64: 56, 128>}, {transform_indices = @transform_3, window_bounds = array<i64: 1, 1, 128>}]} {
    %c0 = arith.constant 0 : index
    %c0_0 = arith.constant 0 : index
    %0 = vector.load %arg1[%c0, %c0_0] : memref<256x3xf32, #tpu.memory_space<vmem>>, vector<256x3xf32>
    %c0_1 = arith.constant 0 : index
    %c0_2 = arith.constant 0 : index
    %1 = vector.load %arg3[%c0_1, %c0_2] : memref<56x128xf32, #tpu.memory_space<vmem>>, vector<3x8xf32>
    %2 = vector.extract_strided_slice %0 {offsets = [0, 0], sizes = [256, 1], strides = [1, 1]} : vector<256x3xf32> to vector<256x1xf32>
    %3 = vector.extract_strided_slice %1 {offsets = [0, 0], sizes = [1, 8], strides = [1, 1]} : vector<3x8xf32> to vector<1x8xf32>
    %4 = vector.broadcast %2 : vector<256x1xf32> to vector<256x8xf32>
    %5 = vector.broadcast %3 : vector<1x8xf32> to vector<256x8xf32>
    %6 = arith.mulf %4, %5 : vector<256x8xf32>
    %7 = vector.extract_strided_slice %0 {offsets = [0, 1], sizes = [256, 1], strides = [1, 1]} : vector<256x3xf32> to vector<256x1xf32>
    %8 = vector.extract_strided_slice %1 {offsets = [1, 0], sizes = [1, 8], strides = [1, 1]} : vector<3x8xf32> to vector<1x8xf32>
    %9 = vector.broadcast %7 : vector<256x1xf32> to vector<256x8xf32>
    %10 = vector.broadcast %8 : vector<1x8xf32> to vector<256x8xf32>
    %11 = arith.mulf %9, %10 : vector<256x8xf32>
    %12 = arith.addf %6, %11 : vector<256x8xf32>
    %13 = vector.extract_strided_slice %0 {offsets = [0, 2], sizes = [256, 1], strides = [1, 1]} : vector<256x3xf32> to vector<256x1xf32>
    %14 = vector.extract_strided_slice %1 {offsets = [2, 0], sizes = [1, 8], strides = [1, 1]} : vector<3x8xf32> to vector<1x8xf32>
    %15 = vector.broadcast %13 : vector<256x1xf32> to vector<256x8xf32>
    %16 = vector.broadcast %14 : vector<1x8xf32> to vector<256x8xf32>
    %17 = arith.mulf %15, %16 : vector<256x8xf32>
    %18 = arith.addf %12, %17 : vector<256x8xf32>
    %c8 = arith.constant 8 : index
    %c0_3 = arith.constant 0 : index
    %19 = vector.load %arg3[%c8, %c0_3] : memref<56x128xf32, #tpu.memory_space<vmem>>, vector<1x8xf32>
    %20 = vector.broadcast %19 : vector<1x8xf32> to vector<256x8xf32>
    %21 = arith.addf %18, %20 : vector<256x8xf32>
    %cst = arith.constant dense<0xFF800000> : vector<256xf32>
    %22 = vector.multi_reduction <maximumf>, %21, %cst [1] : vector<256x8xf32> to vector<256xf32>
    %23 = vector.shape_cast %22 : vector<256xf32> to vector<256x1xf32>
    %24 = tpu.iota {dimensions = array<i32: 1>} : vector<256x8xi32>
    %25 = vector.broadcast %23 : vector<256x1xf32> to vector<256x8xf32>
    %26 = arith.cmpf oeq, %21, %25 : vector<256x8xf32>
    %c8_i32 = arith.constant 8 : i32
    %27 = vector.broadcast %c8_i32 : i32 to vector<256x8xi32>
    %28 = arith.select %26, %24, %27 : vector<256x8xi1>, vector<256x8xi32>
    %cst_4 = arith.constant dense<2147483647> : vector<256xi32>
    %29 = vector.multi_reduction <minsi>, %28, %cst_4 [1] : vector<256x8xi32> to vector<256xi32>
    %30 = vector.shape_cast %29 : vector<256xi32> to vector<256x1xi32>
    %31 = arith.sitofp %30 : vector<256x1xi32> to vector<256x1xf32>
    %32 = vector.broadcast %31 : vector<256x1xf32> to vector<256x3xf32>
    %33 = arith.mulf %0, %32 : vector<256x3xf32>
    %34 = tpu.iota {dimensions = array<i32: 0>} : vector<256x1xi32>
    %c15_i32 = arith.constant 15 : i32
    %35 = vector.broadcast %c15_i32 : i32 to vector<256x1xi32>
    %36 = arith.andi %34, %35 : vector<256x1xi32>
    %c0_i32 = arith.constant 0 : i32
    %37 = vector.broadcast %c0_i32 : i32 to vector<256x1xi32>
    %38 = arith.cmpi sgt, %36, %37 : vector<256x1xi32>
    %39 = arith.extui %38 : vector<256x1xi1> to vector<256x1xi32>
    %40 = arith.sitofp %39 : vector<256x1xi32> to vector<256x1xf32>
    %c15_i32_5 = arith.constant 15 : i32
    %41 = vector.broadcast %c15_i32_5 : i32 to vector<256x1xi32>
    %42 = arith.cmpi slt, %36, %41 : vector<256x1xi32>
    %43 = arith.extui %42 : vector<256x1xi1> to vector<256x1xi32>
    %44 = arith.sitofp %43 : vector<256x1xi32> to vector<256x1xf32>
    %cst_6 = arith.constant 0.000000e+00 : f32
    %45 = vector.broadcast %cst_6 : f32 to vector<24x3xf32>
    %c0_7 = arith.constant 0 : index
    %c0_8 = arith.constant 0 : index
    %46 = vector.load %arg5[%c0_7, %c0_8] : memref<304x3xf32, #tpu.memory_space<vmem>>, vector<24x3xf32>
    tpu.vector_store %arg5[%c0_7, %c0_8], %45 {strides = array<i32>} : memref<304x3xf32, #tpu.memory_space<vmem>>, vector<24x3xf32>,
    %c280 = arith.constant 280 : index
    %c0_9 = arith.constant 0 : index
    %47 = vector.load %arg5[%c280, %c0_9] : memref<304x3xf32, #tpu.memory_space<vmem>>, vector<24x3xf32>
    tpu.vector_store %arg5[%c280, %c0_9], %45 {strides = array<i32>} : memref<304x3xf32, #tpu.memory_space<vmem>>, vector<24x3xf32>,
    %c24 = arith.constant 24 : index
    %c0_10 = arith.constant 0 : index
    %48 = vector.load %arg5[%c24, %c0_10] : memref<304x3xf32, #tpu.memory_space<vmem>>, vector<256x3xf32>
    tpu.vector_store %arg5[%c24, %c0_10], %33 {strides = array<i32>} : memref<304x3xf32, #tpu.memory_space<vmem>>, vector<256x3xf32>,
    %c7 = arith.constant 7 : index
    %c0_11 = arith.constant 0 : index
    %49 = vector.load %arg5[%c7, %c0_11] : memref<304x3xf32, #tpu.memory_space<vmem>>, vector<256x3xf32>
    %50 = vector.broadcast %40 : vector<256x1xf32> to vector<256x3xf32>
    %51 = arith.mulf %49, %50 : vector<256x3xf32>
    %c0_12 = arith.constant 0 : index
    %c0_13 = arith.constant 0 : index
    %52 = vector.load %arg6[%c0_12, %c0_13] : memref<256x27xf32, #tpu.memory_space<vmem>>, vector<256x3xf32>
    tpu.vector_store %arg6[%c0_12, %c0_13], %51 {strides = array<i32>} : memref<256x27xf32, #tpu.memory_space<vmem>>, vector<256x3xf32>,
    %c8_14 = arith.constant 8 : index
    %c0_15 = arith.constant 0 : index
    %53 = vector.load %arg5[%c8_14, %c0_15] : memref<304x3xf32, #tpu.memory_space<vmem>>, vector<256x3xf32>
    %c0_16 = arith.constant 0 : index
    %c3 = arith.constant 3 : index
    %54 = vector.load %arg6[%c0_16, %c3] : memref<256x27xf32, #tpu.memory_space<vmem>>, vector<256x3xf32>
    tpu.vector_store %arg6[%c0_16, %c3], %53 {strides = array<i32>} : memref<256x27xf32, #tpu.memory_space<vmem>>, vector<256x3xf32>,
    %c9 = arith.constant 9 : index
    %c0_17 = arith.constant 0 : index
    %55 = vector.load %arg5[%c9, %c0_17] : memref<304x3xf32, #tpu.memory_space<vmem>>, vector<256x3xf32>
    %56 = vector.broadcast %44 : vector<256x1xf32> to vector<256x3xf32>
    %57 = arith.mulf %55, %56 : vector<256x3xf32>
    %c0_18 = arith.constant 0 : index
    %c6 = arith.constant 6 : index
    %58 = vector.load %arg6[%c0_18, %c6] : memref<256x27xf32, #tpu.memory_space<vmem>>, vector<256x3xf32>
    tpu.vector_store %arg6[%c0_18, %c6], %57 {strides = array<i32>} : memref<256x27xf32, #tpu.memory_space<vmem>>, vector<256x3xf32>,
    %c23 = arith.constant 23 : index
    %c0_19 = arith.constant 0 : index
    %59 = vector.load %arg5[%c23, %c0_19] : memref<304x3xf32, #tpu.memory_space<vmem>>, vector<256x3xf32>
    %60 = vector.broadcast %40 : vector<256x1xf32> to vector<256x3xf32>
    %61 = arith.mulf %59, %60 : vector<256x3xf32>
    %c0_20 = arith.constant 0 : index
    %c9_21 = arith.constant 9 : index
    %62 = vector.load %arg6[%c0_20, %c9_21] : memref<256x27xf32, #tpu.memory_space<vmem>>, vector<256x3xf32>
    tpu.vector_store %arg6[%c0_20, %c9_21], %61 {strides = array<i32>} : memref<256x27xf32, #tpu.memory_space<vmem>>, vector<256x3xf32>,
    %c24_22 = arith.constant 24 : index
    %c0_23 = arith.constant 0 : index
    %63 = vector.load %arg5[%c24_22, %c0_23] : memref<304x3xf32, #tpu.memory_space<vmem>>, vector<256x3xf32>
    %c0_24 = arith.constant 0 : index
    %c12 = arith.constant 12 : index
    %64 = vector.load %arg6[%c0_24, %c12] : memref<256x27xf32, #tpu.memory_space<vmem>>, vector<256x3xf32>
    tpu.vector_store %arg6[%c0_24, %c12], %63 {strides = array<i32>} : memref<256x27xf32, #tpu.memory_space<vmem>>, vector<256x3xf32>,
    %c25 = arith.constant 25 : index
    %c0_25 = arith.constant 0 : index
    %65 = vector.load %arg5[%c25, %c0_25] : memref<304x3xf32, #tpu.memory_space<vmem>>, vector<256x3xf32>
    %66 = vector.broadcast %44 : vector<256x1xf32> to vector<256x3xf32>
    %67 = arith.mulf %65, %66 : vector<256x3xf32>
    %c0_26 = arith.constant 0 : index
    %c15 = arith.constant 15 : index
    %68 = vector.load %arg6[%c0_26, %c15] : memref<256x27xf32, #tpu.memory_space<vmem>>, vector<256x3xf32>
    tpu.vector_store %arg6[%c0_26, %c15], %67 {strides = array<i32>} : memref<256x27xf32, #tpu.memory_space<vmem>>, vector<256x3xf32>,
    %c39 = arith.constant 39 : index
    %c0_27 = arith.constant 0 : index
    %69 = vector.load %arg5[%c39, %c0_27] : memref<304x3xf32, #tpu.memory_space<vmem>>, vector<256x3xf32>
    %70 = vector.broadcast %40 : vector<256x1xf32> to vector<256x3xf32>
    %71 = arith.mulf %69, %70 : vector<256x3xf32>
    %c0_28 = arith.constant 0 : index
    %c18 = arith.constant 18 : index
    %72 = vector.load %arg6[%c0_28, %c18] : memref<256x27xf32, #tpu.memory_space<vmem>>, vector<256x3xf32>
    tpu.vector_store %arg6[%c0_28, %c18], %71 {strides = array<i32>} : memref<256x27xf32, #tpu.memory_space<vmem>>, vector<256x3xf32>,
    %c40 = arith.constant 40 : index
    %c0_29 = arith.constant 0 : index
    %73 = vector.load %arg5[%c40, %c0_29] : memref<304x3xf32, #tpu.memory_space<vmem>>, vector<256x3xf32>
    %c0_30 = arith.constant 0 : index
    %c21 = arith.constant 21 : index
    %74 = vector.load %arg6[%c0_30, %c21] : memref<256x27xf32, #tpu.memory_space<vmem>>, vector<256x3xf32>
    tpu.vector_store %arg6[%c0_30, %c21], %73 {strides = array<i32>} : memref<256x27xf32, #tpu.memory_space<vmem>>, vector<256x3xf32>,
    %c41 = arith.constant 41 : index
    %c0_31 = arith.constant 0 : index
    %75 = vector.load %arg5[%c41, %c0_31] : memref<304x3xf32, #tpu.memory_space<vmem>>, vector<256x3xf32>
    %76 = vector.broadcast %44 : vector<256x1xf32> to vector<256x3xf32>
    %77 = arith.mulf %75, %76 : vector<256x3xf32>
    %c0_32 = arith.constant 0 : index
    %c24_33 = arith.constant 24 : index
    %78 = vector.load %arg6[%c0_32, %c24_33] : memref<256x27xf32, #tpu.memory_space<vmem>>, vector<256x3xf32>
    tpu.vector_store %arg6[%c0_32, %c24_33], %77 {strides = array<i32>} : memref<256x27xf32, #tpu.memory_space<vmem>>, vector<256x3xf32>,
    %c0_34 = arith.constant 0 : index
    %c0_35 = arith.constant 0 : index
    %79 = vector.load %arg6[%c0_34, %c0_35] : memref<256x27xf32, #tpu.memory_space<vmem>>, vector<256x27xf32>
    %80 = arith.truncf %79 : vector<256x27xf32> to vector<256x27xbf16>
    %c0_36 = arith.constant 0 : index
    %c0_37 = arith.constant 0 : index
    %81 = vector.load %arg2[%c0_36, %c0_37] : memref<192x128xbf16, #tpu.memory_space<vmem>>, vector<27x32xbf16>
    %cst_38 = arith.constant dense<0.000000e+00> : vector<256x32xf32>
    %82 = tpu.matmul %80, %81, %cst_38 {dimension_numbers = #tpu.dot_dimension_numbers<[1], [0], [0], [1], [0, 0, 1, 1], [], []>} : vector<256x27xbf16>, vector<27x32xbf16>, vector<256x32xf32> -> vector<256x32xf32>
    %c16 = arith.constant 16 : index
    %c0_39 = arith.constant 0 : index
    %83 = vector.load %arg3[%c16, %c0_39] : memref<56x128xf32, #tpu.memory_space<vmem>>, vector<1x32xf32>
    %84 = vector.broadcast %83 : vector<1x32xf32> to vector<256x32xf32>
    %85 = arith.addf %82, %84 : vector<256x32xf32>
    %cst_40 = arith.constant 0.000000e+00 : f32
    %86 = vector.broadcast %cst_40 : f32 to vector<256x32xf32>
    %87 = arith.maximumf %85, %86 : vector<256x32xf32>
    %88 = arith.truncf %87 : vector<256x32xf32> to vector<256x32xbf16>
    %c32 = arith.constant 32 : index
    %c0_41 = arith.constant 0 : index
    %89 = vector.load %arg2[%c32, %c0_41] : memref<192x128xbf16, #tpu.memory_space<vmem>>, vector<32x32xbf16>
    %cst_42 = arith.constant dense<0.000000e+00> : vector<256x32xf32>
    %90 = tpu.matmul %88, %89, %cst_42 {dimension_numbers = #tpu.dot_dimension_numbers<[1], [0], [0], [1], [0, 0, 1, 1], [], []>} : vector<256x32xbf16>, vector<32x32xbf16>, vector<256x32xf32> -> vector<256x32xf32>
    %c24_43 = arith.constant 24 : index
    %c0_44 = arith.constant 0 : index
    %91 = vector.load %arg3[%c24_43, %c0_44] : memref<56x128xf32, #tpu.memory_space<vmem>>, vector<1x32xf32>
    %92 = vector.broadcast %91 : vector<1x32xf32> to vector<256x32xf32>
    %93 = arith.addf %90, %92 : vector<256x32xf32>
    %cst_45 = arith.constant 0.000000e+00 : f32
    %94 = vector.broadcast %cst_45 : f32 to vector<256x32xf32>
    %95 = arith.maximumf %93, %94 : vector<256x32xf32>
    %96 = arith.truncf %95 : vector<256x32xf32> to vector<256x32xbf16>
    %c64 = arith.constant 64 : index
    %c0_46 = arith.constant 0 : index
    %97 = vector.load %arg2[%c64, %c0_46] : memref<192x128xbf16, #tpu.memory_space<vmem>>, vector<32x32xbf16>
    %cst_47 = arith.constant dense<0.000000e+00> : vector<256x32xf32>
    %98 = tpu.matmul %96, %97, %cst_47 {dimension_numbers = #tpu.dot_dimension_numbers<[1], [0], [0], [1], [0, 0, 1, 1], [], []>} : vector<256x32xbf16>, vector<32x32xbf16>, vector<256x32xf32> -> vector<256x32xf32>
    %c32_48 = arith.constant 32 : index
    %c0_49 = arith.constant 0 : index
    %99 = vector.load %arg3[%c32_48, %c0_49] : memref<56x128xf32, #tpu.memory_space<vmem>>, vector<1x32xf32>
    %100 = vector.broadcast %99 : vector<1x32xf32> to vector<256x32xf32>
    %101 = arith.addf %98, %100 : vector<256x32xf32>
    %102 = arith.addf %101, %87 : vector<256x32xf32>
    %cst_50 = arith.constant 0.000000e+00 : f32
    %103 = vector.broadcast %cst_50 : f32 to vector<256x32xf32>
    %104 = arith.maximumf %102, %103 : vector<256x32xf32>
    %105 = arith.truncf %104 : vector<256x32xf32> to vector<256x32xbf16>
    %c96 = arith.constant 96 : index
    %c0_51 = arith.constant 0 : index
    %106 = vector.load %arg2[%c96, %c0_51] : memref<192x128xbf16, #tpu.memory_space<vmem>>, vector<32x64xbf16>
    %cst_52 = arith.constant dense<0.000000e+00> : vector<256x64xf32>
    %107 = tpu.matmul %105, %106, %cst_52 {dimension_numbers = #tpu.dot_dimension_numbers<[1], [0], [0], [1], [0, 0, 1, 1], [], []>} : vector<256x32xbf16>, vector<32x64xbf16>, vector<256x64xf32> -> vector<256x64xf32>
    %c40_53 = arith.constant 40 : index
    %c0_54 = arith.constant 0 : index
    %108 = vector.load %arg3[%c40_53, %c0_54] : memref<56x128xf32, #tpu.memory_space<vmem>>, vector<1x64xf32>
    %109 = vector.broadcast %108 : vector<1x64xf32> to vector<256x64xf32>
    %110 = arith.addf %107, %109 : vector<256x64xf32>
    %cst_55 = arith.constant 0.000000e+00 : f32
    %111 = vector.broadcast %cst_55 : f32 to vector<256x64xf32>
    %112 = arith.maximumf %110, %111 : vector<256x64xf32>
    %cst_56 = arith.constant 3.906250e-03 : f32
    %113 = vector.broadcast %cst_56 : f32 to vector<1x256xf32>
    %114 = arith.truncf %113 : vector<1x256xf32> to vector<1x256xbf16>
    %115 = arith.truncf %112 : vector<256x64xf32> to vector<256x64xbf16>
    %cst_57 = arith.constant dense<0.000000e+00> : vector<1x64xf32>
    %116 = tpu.matmul %114, %115, %cst_57 {dimension_numbers = #tpu.dot_dimension_numbers<[1], [0], [0], [1], [0, 0, 1, 1], [], []>} : vector<1x256xbf16>, vector<256x64xbf16>, vector<1x64xf32> -> vector<1x64xf32>
    %117 = arith.truncf %116 : vector<1x64xf32> to vector<1x64xbf16>
    %c128 = arith.constant 128 : index
    %c0_58 = arith.constant 0 : index
    %118 = vector.load %arg2[%c128, %c0_58] : memref<192x128xbf16, #tpu.memory_space<vmem>>, vector<64x128xbf16>
    %cst_59 = arith.constant dense<0.000000e+00> : vector<1x128xf32>
    %119 = tpu.matmul %117, %118, %cst_59 {dimension_numbers = #tpu.dot_dimension_numbers<[1], [0], [0], [1], [0, 0, 1, 1], [], []>} : vector<1x64xbf16>, vector<64x128xbf16>, vector<1x128xf32> -> vector<1x128xf32>
    %c48 = arith.constant 48 : index
    %c0_60 = arith.constant 0 : index
    %120 = vector.load %arg3[%c48, %c0_60] : memref<56x128xf32, #tpu.memory_space<vmem>>, vector<1x128xf32>
    %121 = arith.addf %119, %120 : vector<1x128xf32>
    %c0_61 = arith.constant 0 : index
    %c0_62 = arith.constant 0 : index
    %c0_63 = arith.constant 0 : index
    %122 = vector.load %arg4[%c0_61, %c0_62, %c0_63] : memref<1x1x128xf32, #tpu.memory_space<vmem>>, vector<1x1x128xf32>
    %123 = vector.shape_cast %122 : vector<1x1x128xf32> to vector<1x128xf32>
    %124 = vector.shape_cast %121 : vector<1x128xf32> to vector<1x1x128xf32>
    tpu.vector_store %arg4[%c0_61, %c0_62, %c0_63], %124 {strides = array<i32>} : memref<1x1x128xf32, #tpu.memory_space<vmem>>, vector<1x1x128xf32>,
    return
  }
  func.func @transform_0(%arg0: i32) -> (i32, i32) {
    %c0_i32 = arith.constant 0 : i32
    %c0_i32_0 = arith.constant 0 : i32
    return %arg0, %c0_i32 : i32, i32
  }
  func.func @transform_1(%arg0: i32) -> (i32, i32) {
    %c0_i32 = arith.constant 0 : i32
    %c0_i32_0 = arith.constant 0 : i32
    %c0_i32_1 = arith.constant 0 : i32
    return %c0_i32, %c0_i32_0 : i32, i32
  }
  func.func @transform_2(%arg0: i32) -> (i32, i32) {
    %c0_i32 = arith.constant 0 : i32
    %c0_i32_0 = arith.constant 0 : i32
    %c0_i32_1 = arith.constant 0 : i32
    return %c0_i32, %c0_i32_0 : i32, i32
  }
  func.func @transform_3(%arg0: i32) -> (i32, i32, i32) {
    %c0_i32 = arith.constant 0 : i32
    %c0_i32_0 = arith.constant 0 : i32
    %c0_i32_1 = arith.constant 0 : i32
    return %arg0, %c0_i32, %c0_i32_0 : i32, i32, i32
  }
}

</mosaic_0001>

<llo_original>
// kernel: forward.1
$region0: #{forward.1}
  #allocation0 [shape = 'u32[]', space=smem, size = 0x4, offset = 0x4, fixed_abs, tag = 'smem constant byte address 0x4 - core index']
  #allocation1 [shape = 'u32[144,128]{1,0:T(1,128)}', space=vmem, size = 0x12000, scoped, tag = 'internal scratch']
  #allocation2 [shape = 'f32[304,3]{1,0:T(8,128)}', space=vmem, size = 0x26000, scoped, tag = 'scratch operand']
  #allocation3 [shape = 'f32[256,27]{1,0:T(8,128)}', space=vmem, size = 0x20000, scoped, tag = 'scratch operand']
  %s0 = inlined_call_operand.vmem [shape: f32[512,3], index: 0, kind: input, shape index: {}]
  %s1 = inlined_call_operand.vmem [shape: bf16[192,128], index: 1, kind: input, shape index: {}]
  %s2 = inlined_call_operand.vmem [shape: f32[56,128], index: 2, kind: input, shape index: {}]
  %s3 = inlined_call_operand.hbm [shape: f32[2,1,128], index: 3, kind: output, shape index: {}]
  %s4 = sld [smem:[#allocation0]]
  $region45: #{forward.1} parent=0
    _
  %s6 = ssub.s32 1, %s4
  %s7 = scalar_select 0, %s6, %s4
  $region1: #{forward.1} parent=0
    #allocation4 [shape = 'u8[1024]{0}', space=vmem, size = 0x400, scoped, tag = 'output window, operand 0']
    #allocation5 [shape = 's32[2]{0}', space=sflag, size = 0x8, scoped, tag = 'scoped memory for forward.1']
    %8 = vsyncpa [#allocation5], 0
    %s9 = scalar_lea.sflag [#allocation5], 1
    %10 = vsyncpa %s9, 0
    loop: start=0, step=1, limit=4
    $region2: #{forward.1} parent=1 // loop_pre_header
      _
    $region3: #{forward.1} parent=1 // loop_header
      %s12 = sphi 0, %s16
      %p13 = scmp.ge.s32.totalorder %s12, 4
      %s22 = sphi 0, %s24
      %s25 = sphi 0, %s22
      %s26 = sphi 0, %s25
      %s42 = sphi 0, %s26
      %s46 = sphi 0, %s46
      %s48 = sphi 0, %s46
      %s49 = sphi 0, %s48
      %s63 = sphi 0, %s49
      %s67 = sphi 0, %s67
      %s69 = sphi 0, %s67
      %s70 = sphi 0, %s69
      %s84 = sphi 0, %s70
      %s90 = sphi 0, %s92
      %s93 = sphi 0, %s90
      %s94 = sphi 0, %s93
      %s110 = sphi 0, %s94
    $region4: #{forward.1} parent=1 // loop_header_branch
      %15 = sbr.rel (%p13) target = $region8
    $region5: #{forward.1} parent=1 // loop_body
      %s17 = ssub.s32 %s12, 1
      %s18 = ssub.s32 %s12, 2
      %s19 = sadd.s32 %s12, 1
      %s20 = ssub.s32 %s12, %s19
      %p21 = scmp.eq.s32.totalorder %s20, 0
      %s23 = sadd.s32 %s22, 1
      %s24 = scalar_select %p21, %s22, %s23
      %p27 = pneg %p21
      %p28 = scmp.eq.s32.totalorder %s12, 1
      %p29 = por %p27, %p28
      %p30 = scmp.ne.s32.totalorder %s22, %s25
      %p31 = scmp.eq.s32.totalorder %s12, 0
      %p32 = por %p30, %p31
      %p33 = scmp.ne.s32.totalorder %s22, %s25
      %p34 = scmp.eq.s32.totalorder %s17, 1
      %p35 = por %p33, %p34
      %p36 = scmp.ne.s32.totalorder %s25, %s26
      %p37 = scmp.eq.s32.totalorder %s17, 0
      %p38 = por %p36, %p37
      %p39 = scmp.ne.s32.totalorder %s25, %s26
      %p40 = scmp.eq.s32.totalorder %s18, 1
      %p41 = por %p39, %p40
      %p43 = scmp.ne.s32.totalorder %s26, %s42
      %p44 = scmp.eq.s32.totalorder %s18, 0
      %p45 = por %p43, %p44
      %s47 = sadd.s32 %s46, 1
      %p50 = scmp.eq.s32.totalorder %s12, 1
      %p51 = scmp.ne.s32.totalorder %s46, %s48
      %p52 = scmp.eq.s32.totalorder %s12, 0
      %p53 = por %p51, %p52
      %p54 = scmp.ne.s32.totalorder %s46, %s48
      %p55 = scmp.eq.s32.totalorder %s17, 1
      %p56 = por %p54, %p55
      %p57 = scmp.ne.s32.totalorder %s48, %s49
      %p58 = scmp.eq.s32.totalorder %s17, 0
      %p59 = por %p57, %p58
      %p60 = scmp.ne.s32.totalorder %s48, %s49
      %p61 = scmp.eq.s32.totalorder %s18, 1
      %p62 = por %p60, %p61
      %p64 = scmp.ne.s32.totalorder %s49, %s63
      %p65 = scmp.eq.s32.totalorder %s18, 0
      %p66 = por %p64, %p65
      %s68 = sadd.s32 %s67, 1
      %p71 = scmp.eq.s32.totalorder %s12, 1
      %p72 = scmp.ne.s32.totalorder %s67, %s69
      %p73 = scmp.eq.s32.totalorder %s12, 0
      %p74 = por %p72, %p73
      %p75 = scmp.ne.s32.totalorder %s67, %s69
      %p76 = scmp.eq.s32.totalorder %s17, 1
      %p77 = por %p75, %p76
      %p78 = scmp.ne.s32.totalorder %s69, %s70
      %p79 = scmp.eq.s32.totalorder %s17, 0
      %p80 = por %p78, %p79
      %p81 = scmp.ne.s32.totalorder %s69, %s70
      %p82 = scmp.eq.s32.totalorder %s18, 1
      %p83 = por %p81, %p82
      %p85 = scmp.ne.s32.totalorder %s70, %s84
      %p86 = scmp.eq.s32.totalorder %s18, 0
      %p87 = por %p85, %p86
      %s88 = ssub.s32 %s12, %s19
      %p89 = scmp.eq.s32.totalorder %s88, 0
      %s91 = sadd.s32 %s90, 1
      %s92 = scalar_select %p89, %s90, %s91
      %p95 = pneg %p89
      %p96 = scmp.eq.s32.totalorder %s12, 1
      %p97 = por %p95, %p96
      %p98 = scmp.ne.s32.totalorder %s90, %s93
      %p99 = scmp.eq.s32.totalorder %s12, 0
      %p100 = por %p98, %p99
      %p101 = scmp.ne.s32.totalorder %s90, %s93
      %p102 = scmp.eq.s32.totalorder %s17, 1
      %p103 = por %p101, %p102
      %p104 = scmp.ne.s32.totalorder %s93, %s94
      %p105 = scmp.eq.s32.totalorder %s17, 0
      %p106 = por %p104, %p105
      %p107 = scmp.ne.s32.totalorder %s93, %s94
      %p108 = scmp.eq.s32.totalorder %s18, 1
      %p109 = por %p107, %p108
      %p111 = scmp.ne.s32.totalorder %s94, %s110
      %p112 = scmp.eq.s32.totalorder %s18, 0
      %p113 = por %p111, %p112
      %p114 = scmp.le.s32.totalorder 1, %s12
      %p115 = scmp.lt.s32.totalorder %s12, 3
      %p116 = pnand %p114, %p115
      %p117 = pneg %p116
      // Predicated region
      $region9: #{forward.1} parent=5 // pred_check
        _
      $region10: #{forward.1} parent=5 // pred_check_branch
        %119 = sbr.rel (%p116) target = $region12
      $region11: #{forward.1} parent=5 // pred_region
        %s120 = ssub.s32 %s12, 1
        // Predicated region
        $region13: #{forward.1} parent=11 // pred_check
          %p121 = pneg %p59
        $region14: #{forward.1} parent=11 // pred_check_branch
          %123 = sbr.rel (%p121) target = $region16
        $region15: #{forward.1} parent=11 // pred_region
          _
        $region16: #{forward.1} parent=11 // pred_fallthru
          _
        // Predicated region
        $region17: #{forward.1} parent=11 // pred_check
          %p124 = pneg %p80
        $region18: #{forward.1} parent=11 // pred_check_branch
          %126 = sbr.rel (%p124) target = $region20
        $region19: #{forward.1} parent=11 // pred_region
          _
        $region20: #{forward.1} parent=11 // pred_fallthru
          _
      $region12: #{forward.1} parent=5 // pred_fallthru
        _
      %p127 = scmp.lt.s32.totalorder %s12, 2
      // Predicated region
      $region21: #{forward.1} parent=5 // pred_check
        %p128 = pneg %p127
      $region22: #{forward.1} parent=5 // pred_check_branch
        %130 = sbr.rel (%p128) target = $region24
      $region23: #{forward.1} parent=5 // pred_region
        // Predicated region
        $region25: #{forward.1} parent=23 // pred_check
          %p131 = pneg %p32
        $region26: #{forward.1} parent=23 // pred_check_branch
          %133 = sbr.rel (%p131) target = $region28
        $region27: #{forward.1} parent=23 // pred_region
          %s134 = smul.u32 32, %s12
          %p135 = scmp.lt.s32.totalorder %s134, 63
          %s136 = scalar_select %p135, %s134, 63
          %s137 = smul.addr %s136, 8
          %s138 = scalar_lea.vmem %s0, %s137
          %s139 = smul.u32 32, %s12
        $region28: #{forward.1} parent=23 // pred_fallthru
          _
      $region24: #{forward.1} parent=5 // pred_fallthru
        _
      %p140 = scmp.le.s32.totalorder 1, %s12
      %p141 = scmp.lt.s32.totalorder %s12, 3
      %p142 = pnand %p140, %p141
      %p143 = pneg %p142
      // Predicated region
      $region29: #{forward.1} parent=5 // pred_check
        _
      $region30: #{forward.1} parent=5 // pred_check_branch
        %145 = sbr.rel (%p142) target = $region32
      $region31: #{forward.1} parent=5 // pred_region
        %s146 = ssub.s32 %s12, 1
        %s147 = smul.u32 32, %s17
        %p148 = scmp.lt.s32.totalorder %s147, 63
        %s149 = scalar_select %p148, %s147, 63
        %s150 = smul.addr %s149, 8
        %s151 = scalar_lea.vmem %s0, %s150
        %p152 = pneg %p38
        %p153 = pneg %p35
        %p154 = pneg %p59
        %p155 = pneg %p56
        %p156 = pneg %p80
        %p157 = pneg %p77
        %p158 = pneg %p106
        %p159 = pneg %p103
        %s160 = sand.u32 %s93, 1
        %s161 = scalar_lea.sflag [#allocation5], %s160
        %s162 = sand.u32 %s93, 1
        %s163 = scalar_lea.vmem [#allocation4], %s162
        %s164 = smul.u32 32, %s17
        %p165 = scmp.lt.s32.totalorder %s164, 63
        %s166 = scalar_select %p165, %s164, 63
        %s167 = smul.addr %s166, 8
        %s168 = scalar_lea.vmem %s0, %s167
        %s169 = smul.u32 32, %s17
        %v172 = vld [vmem:[%s168] sm:$0xff]
        %v173 = vld [vmem:[%s168 + $0x8] sm:$0xff]
        %v174 = vld [vmem:[%s168 + $0x10] sm:$0xff]
        %v175 = vld [vmem:[%s168 + $0x18] sm:$0xff]
        %v176 = vld [vmem:[%s168 + $0x20] sm:$0xff]
        %v177 = vld [vmem:[%s168 + $0x28] sm:$0xff]
        %v178 = vld [vmem:[%s168 + $0x30] sm:$0xff]
        %v179 = vld [vmem:[%s168 + $0x38] sm:$0xff]
        %v180 = vld [vmem:[%s168 + $0x40] sm:$0xff]
        %v181 = vld [vmem:[%s168 + $0x48] sm:$0xff]
        %v182 = vld [vmem:[%s168 + $0x50] sm:$0xff]
        %v183 = vld [vmem:[%s168 + $0x58] sm:$0xff]
        %v184 = vld [vmem:[%s168 + $0x60] sm:$0xff]
        %v185 = vld [vmem:[%s168 + $0x68] sm:$0xff]
        %v186 = vld [vmem:[%s168 + $0x70] sm:$0xff]
        %v187 = vld [vmem:[%s168 + $0x78] sm:$0xff]
        %v188 = vld [vmem:[%s168 + $0x80] sm:$0xff]
        %v189 = vld [vmem:[%s168 + $0x88] sm:$0xff]
        %v190 = vld [vmem:[%s168 + $0x90] sm:$0xff]
        %v191 = vld [vmem:[%s168 + $0x98] sm:$0xff]
        %v192 = vld [vmem:[%s168 + $0xa0] sm:$0xff]
        %v193 = vld [vmem:[%s168 + $0xa8] sm:$0xff]
        %v194 = vld [vmem:[%s168 + $0xb0] sm:$0xff]
        %v195 = vld [vmem:[%s168 + $0xb8] sm:$0xff]
        %v196 = vld [vmem:[%s168 + $0xc0] sm:$0xff]
        %v197 = vld [vmem:[%s168 + $0xc8] sm:$0xff]
        %v198 = vld [vmem:[%s168 + $0xd0] sm:$0xff]
        %v199 = vld [vmem:[%s168 + $0xd8] sm:$0xff]
        %v200 = vld [vmem:[%s168 + $0xe0] sm:$0xff]
        %v201 = vld [vmem:[%s168 + $0xe8] sm:$0xff]
        %v202 = vld [vmem:[%s168 + $0xf0] sm:$0xff]
        %v203 = vld [vmem:[%s168 + $0xf8] sm:$0xff]
        %v204 = vld [vmem:[%s2] sm:$0x7]
        %206 = vset.pattern.permute.xlu0 0
        %207 = vperm.xlu0 %206, %v172
        %v208 = vpop.permute.xlu0 %207
        %211 = vset.pattern.permute.xlu0 0
        %212 = vperm.xlu0 %211, %v173
        %v213 = vpop.permute.xlu0 %212
        %216 = vset.pattern.permute.xlu0 0
        %217 = vperm.xlu0 %216, %v174
        %v218 = vpop.permute.xlu0 %217
        %221 = vset.pattern.permute.xlu0 0
        %222 = vperm.xlu0 %221, %v175
        %v223 = vpop.permute.xlu0 %222
        %226 = vset.pattern.permute.xlu0 0
        %227 = vperm.xlu0 %226, %v176
        %v228 = vpop.permute.xlu0 %227
        %231 = vset.pattern.permute.xlu0 0
        %232 = vperm.xlu0 %231, %v177
        %v233 = vpop.permute.xlu0 %232
        %236 = vset.pattern.permute.xlu0 0
        %237 = vperm.xlu0 %236, %v178
        %v238 = vpop.permute.xlu0 %237
        %241 = vset.pattern.permute.xlu0 0
        %242 = vperm.xlu0 %241, %v179
        %v243 = vpop.permute.xlu0 %242
        %246 = vset.pattern.permute.xlu0 0
        %247 = vperm.xlu0 %246, %v180
        %v248 = vpop.permute.xlu0 %247
        %251 = vset.pattern.permute.xlu0 0
        %252 = vperm.xlu0 %251, %v181
        %v253 = vpop.permute.xlu0 %252
        %256 = vset.pattern.permute.xlu0 0
        %257 = vperm.xlu0 %256, %v182
        %v258 = vpop.permute.xlu0 %257
        %261 = vset.pattern.permute.xlu0 0
        %262 = vperm.xlu0 %261, %v183
        %v263 = vpop.permute.xlu0 %262
        %266 = vset.pattern.permute.xlu0 0
        %267 = vperm.xlu0 %266, %v184
        %v268 = vpop.permute.xlu0 %267
        %271 = vset.pattern.permute.xlu0 0
        %272 = vperm.xlu0 %271, %v185
        %v273 = vpop.permute.xlu0 %272
        %276 = vset.pattern.permute.xlu0 0
        %277 = vperm.xlu0 %276, %v186
        %v278 = vpop.permute.xlu0 %277
        %281 = vset.pattern.permute.xlu0 0
        %282 = vperm.xlu0 %281, %v187
        %v283 = vpop.permute.xlu0 %282
        %286 = vset.pattern.permute.xlu0 0
        %287 = vperm.xlu0 %286, %v188
        %v288 = vpop.permute.xlu0 %287
        %291 = vset.pattern.permute.xlu0 0
        %292 = vperm.xlu0 %291, %v189
        %v293 = vpop.permute.xlu0 %292
        %296 = vset.pattern.permute.xlu0 0
        %297 = vperm.xlu0 %296, %v190
        %v298 = vpop.permute.xlu0 %297
        %301 = vset.pattern.permute.xlu0 0
        %302 = vperm.xlu0 %301, %v191
        %v303 = vpop.permute.xlu0 %302
        %306 = vset.pattern.permute.xlu0 0
        %307 = vperm.xlu0 %306, %v192
        %v308 = vpop.permute.xlu0 %307
        %311 = vset.pattern.permute.xlu0 0
        %312 = vperm.xlu0 %311, %v193
        %v313 = vpop.permute.xlu0 %312
        %316 = vset.pattern.permute.xlu0 0
        %317 = vperm.xlu0 %316, %v194
        %v318 = vpop.permute.xlu0 %317
        %321 = vset.pattern.permute.xlu0 0
        %322 = vperm.xlu0 %321, %v195
        %v323 = vpop.permute.xlu0 %322
        %326 = vset.pattern.permute.xlu0 0
        %327 = vperm.xlu0 %326, %v196
        %v328 = vpop.permute.xlu0 %327
        %331 = vset.pattern.permute.xlu0 0
        %332 = vperm.xlu0 %331, %v197
        %v333 = vpop.permute.xlu0 %332
        %336 = vset.pattern.permute.xlu0 0
        %337 = vperm.xlu0 %336, %v198
        %v338 = vpop.permute.xlu0 %337
        %341 = vset.pattern.permute.xlu0 0
        %342 = vperm.xlu0 %341, %v199
        %v343 = vpop.permute.xlu0 %342
        %346 = vset.pattern.permute.xlu0 0
        %347 = vperm.xlu0 %346, %v200
        %v348 = vpop.permute.xlu0 %347
        %351 = vset.pattern.permute.xlu0 0
        %352 = vperm.xlu0 %351, %v201
        %v353 = vpop.permute.xlu0 %352
        %356 = vset.pattern.permute.xlu0 0
        %357 = vperm.xlu0 %356, %v202
        %v358 = vpop.permute.xlu0 %357
        %361 = vset.pattern.permute.xlu0 0
        %362 = vperm.xlu0 %361, %v203
        %v363 = vpop.permute.xlu0 %362
        %v365 = vlaneseq
        %v366 = vshrl.u32 %v365, 7
        %v367 = vsub.s32 0, %v366
        %v368 = vrot.slane %v204, %v367
        %v369 = vmul.f32 %v208, %v368
        %v370 = vmul.f32 %v213, %v368
        %v371 = vmul.f32 %v218, %v368
        %v372 = vmul.f32 %v223, %v368
        %v373 = vmul.f32 %v228, %v368
        %v374 = vmul.f32 %v233, %v368
        %v375 = vmul.f32 %v238, %v368
        %v376 = vmul.f32 %v243, %v368
        %v377 = vmul.f32 %v248, %v368
        %v378 = vmul.f32 %v253, %v368
        %v379 = vmul.f32 %v258, %v368
        %v380 = vmul.f32 %v263, %v368
        %v381 = vmul.f32 %v268, %v368
        %v382 = vmul.f32 %v273, %v368
        %v383 = vmul.f32 %v278, %v368
        %v384 = vmul.f32 %v283, %v368
        %v385 = vmul.f32 %v288, %v368
        %v386 = vmul.f32 %v293, %v368
        %v387 = vmul.f32 %v298, %v368
        %v388 = vmul.f32 %v303, %v368
        %v389 = vmul.f32 %v308, %v368
        %v390 = vmul.f32 %v313, %v368
        %v391 = vmul.f32 %v318, %v368
        %v392 = vmul.f32 %v323, %v368
        %v393 = vmul.f32 %v328, %v368
        %v394 = vmul.f32 %v333, %v368
        %v395 = vmul.f32 %v338, %v368
        %v396 = vmul.f32 %v343, %v368
        %v397 = vmul.f32 %v348, %v368
        %v398 = vmul.f32 %v353, %v368
        %v399 = vmul.f32 %v358, %v368
        %v400 = vmul.f32 %v363, %v368
        %401 = vset.pattern.permute.xlu0 1
        %402 = vperm.xlu0 %401, %v172
        %v403 = vpop.permute.xlu0 %402
        %405 = vset.pattern.permute.xlu0 1
        %406 = vperm.xlu0 %405, %v173
        %v407 = vpop.permute.xlu0 %406
        %409 = vset.pattern.permute.xlu0 1
        %410 = vperm.xlu0 %409, %v174
        %v411 = vpop.permute.xlu0 %410
        %413 = vset.pattern.permute.xlu0 1
        %414 = vperm.xlu0 %413, %v175
        %v415 = vpop.permute.xlu0 %414
        %417 = vset.pattern.permute.xlu0 1
        %418 = vperm.xlu0 %417, %v176
        %v419 = vpop.permute.xlu0 %418
        %421 = vset.pattern.permute.xlu0 1
        %422 = vperm.xlu0 %421, %v177
        %v423 = vpop.permute.xlu0 %422
        %425 = vset.pattern.permute.xlu0 1
        %426 = vperm.xlu0 %425, %v178
        %v427 = vpop.permute.xlu0 %426
        %429 = vset.pattern.permute.xlu0 1
        %430 = vperm.xlu0 %429, %v179
        %v431 = vpop.permute.xlu0 %430
        %433 = vset.pattern.permute.xlu0 1
        %434 = vperm.xlu0 %433, %v180
        %v435 = vpop.permute.xlu0 %434
        %437 = vset.pattern.permute.xlu0 1
        %438 = vperm.xlu0 %437, %v181
        %v439 = vpop.permute.xlu0 %438
        %441 = vset.pattern.permute.xlu0 1
        %442 = vperm.xlu0 %441, %v182
        %v443 = vpop.permute.xlu0 %442
        %445 = vset.pattern.permute.xlu0 1
        %446 = vperm.xlu0 %445, %v183
        %v447 = vpop.permute.xlu0 %446
        %449 = vset.pattern.permute.xlu0 1
        %450 = vperm.xlu0 %449, %v184
        %v451 = vpop.permute.xlu0 %450
        %453 = vset.pattern.permute.xlu0 1
        %454 = vperm.xlu0 %453, %v185
        %v455 = vpop.permute.xlu0 %454
        %457 = vset.pattern.permute.xlu0 1
        %458 = vperm.xlu0 %457, %v186
        %v459 = vpop.permute.xlu0 %458
        %461 = vset.pattern.permute.xlu0 1
        %462 = vperm.xlu0 %461, %v187
        %v463 = vpop.permute.xlu0 %462
        %465 = vset.pattern.permute.xlu0 1
        %466 = vperm.xlu0 %465, %v188
        %v467 = vpop.permute.xlu0 %466
        %469 = vset.pattern.permute.xlu0 1
        %470 = vperm.xlu0 %469, %v189
        %v471 = vpop.permute.xlu0 %470
        %473 = vset.pattern.permute.xlu0 1
        %474 = vperm.xlu0 %473, %v190
        %v475 = vpop.permute.xlu0 %474
        %477 = vset.pattern.permute.xlu0 1
        %478 = vperm.xlu0 %477, %v191
        %v479 = vpop.permute.xlu0 %478
        %481 = vset.pattern.permute.xlu0 1
        %482 = vperm.xlu0 %481, %v192
        %v483 = vpop.permute.xlu0 %482
        %485 = vset.pattern.permute.xlu0 1
        %486 = vperm.xlu0 %485, %v193
        %v487 = vpop.permute.xlu0 %486
        %489 = vset.pattern.permute.xlu0 1
        %490 = vperm.xlu0 %489, %v194
        %v491 = vpop.permute.xlu0 %490
        %493 = vset.pattern.permute.xlu0 1
        %494 = vperm.xlu0 %493, %v195
        %v495 = vpop.permute.xlu0 %494
        %497 = vset.pattern.permute.xlu0 1
        %498 = vperm.xlu0 %497, %v196
        %v499 = vpop.permute.xlu0 %498
        %501 = vset.pattern.permute.xlu0 1
        %502 = vperm.xlu0 %501, %v197
        %v503 = vpop.permute.xlu0 %502
        %505 = vset.pattern.permute.xlu0 1
        %506 = vperm.xlu0 %505, %v198
        %v507 = vpop.permute.xlu0 %506
        %509 = vset.pattern.permute.xlu0 1
        %510 = vperm.xlu0 %509, %v199
        %v511 = vpop.permute.xlu0 %510
        %513 = vset.pattern.permute.xlu0 1
        %514 = vperm.xlu0 %513, %v200
        %v515 = vpop.permute.xlu0 %514
        %517 = vset.pattern.permute.xlu0 1
        %518 = vperm.xlu0 %517, %v201
        %v519 = vpop.permute.xlu0 %518
        %521 = vset.pattern.permute.xlu0 1
        %522 = vperm.xlu0 %521, %v202
        %v523 = vpop.permute.xlu0 %522
        %525 = vset.pattern.permute.xlu0 1
        %526 = vperm.xlu0 %525, %v203
        %v527 = vpop.permute.xlu0 %526
        %v529 = vlaneseq
        %v530 = vshrl.u32 %v529, 7
        %v531 = vsub.s32 1, %v530
        %v532 = vrot.slane %v204, %v531
        %v533 = vmul.f32 %v403, %v532
        %v534 = vmul.f32 %v407, %v532
        %v535 = vmul.f32 %v411, %v532
        %v536 = vmul.f32 %v415, %v532
        %v537 = vmul.f32 %v419, %v532
        %v538 = vmul.f32 %v423, %v532
        %v539 = vmul.f32 %v427, %v532
        %v540 = vmul.f32 %v431, %v532
        %v541 = vmul.f32 %v435, %v532
        %v542 = vmul.f32 %v439, %v532
        %v543 = vmul.f32 %v443, %v532
        %v544 = vmul.f32 %v447, %v532
        %v545 = vmul.f32 %v451, %v532
        %v546 = vmul.f32 %v455, %v532
        %v547 = vmul.f32 %v459, %v532
        %v548 = vmul.f32 %v463, %v532
        %v549 = vmul.f32 %v467, %v532
        %v550 = vmul.f32 %v471, %v532
        %v551 = vmul.f32 %v475, %v532
        %v552 = vmul.f32 %v479, %v532
        %v553 = vmul.f32 %v483, %v532
        %v554 = vmul.f32 %v487, %v532
        %v555 = vmul.f32 %v491, %v532
        %v556 = vmul.f32 %v495, %v532
        %v557 = vmul.f32 %v499, %v532
        %v558 = vmul.f32 %v503, %v532
        %v559 = vmul.f32 %v507, %v532
        %v560 = vmul.f32 %v511, %v532
        %v561 = vmul.f32 %v515, %v532
        %v562 = vmul.f32 %v519, %v532
        %v563 = vmul.f32 %v523, %v532
        %v564 = vmul.f32 %v527, %v532
        %v565 = vadd.f32 %v369, %v533
        %v566 = vadd.f32 %v370, %v534
        %v567 = vadd.f32 %v371, %v535
        %v568 = vadd.f32 %v372, %v536
        %v569 = vadd.f32 %v373, %v537
        %v570 = vadd.f32 %v374, %v538
        %v571 = vadd.f32 %v375, %v539
        %v572 = vadd.f32 %v376, %v540
        %v573 = vadd.f32 %v377, %v541
        %v574 = vadd.f32 %v378, %v542
        %v575 = vadd.f32 %v379, %v543
        %v576 = vadd.f32 %v380, %v544
        %v577 = vadd.f32 %v381, %v545
        %v578 = vadd.f32 %v382, %v546
        %v579 = vadd.f32 %v383, %v547
        %v580 = vadd.f32 %v384, %v548
        %v581 = vadd.f32 %v385, %v549
        %v582 = vadd.f32 %v386, %v550
        %v583 = vadd.f32 %v387, %v551
        %v584 = vadd.f32 %v388, %v552
        %v585 = vadd.f32 %v389, %v553
        %v586 = vadd.f32 %v390, %v554
        %v587 = vadd.f32 %v391, %v555
        %v588 = vadd.f32 %v392, %v556
        %v589 = vadd.f32 %v393, %v557
        %v590 = vadd.f32 %v394, %v558
        %v591 = vadd.f32 %v395, %v559
        %v592 = vadd.f32 %v396, %v560
        %v593 = vadd.f32 %v397, %v561
        %v594 = vadd.f32 %v398, %v562
        %v595 = vadd.f32 %v399, %v563
        %v596 = vadd.f32 %v400, %v564
        %597 = vset.pattern.permute.xlu0 2
        %598 = vperm.xlu0 %597, %v172
        %v599 = vpop.permute.xlu0 %598
        %601 = vset.pattern.permute.xlu0 2
        %602 = vperm.xlu0 %601, %v173
        %v603 = vpop.permute.xlu0 %602
        %605 = vset.pattern.permute.xlu0 2
        %606 = vperm.xlu0 %605, %v174
        %v607 = vpop.permute.xlu0 %606
        %609 = vset.pattern.permute.xlu0 2
        %610 = vperm.xlu0 %609, %v175
        %v611 = vpop.permute.xlu0 %610
        %613 = vset.pattern.permute.xlu0 2
        %614 = vperm.xlu0 %613, %v176
        %v615 = vpop.permute.xlu0 %614
        %617 = vset.pattern.permute.xlu0 2
        %618 = vperm.xlu0 %617, %v177
        %v619 = vpop.permute.xlu0 %618
        %621 = vset.pattern.permute.xlu0 2
        %622 = vperm.xlu0 %621, %v178
        %v623 = vpop.permute.xlu0 %622
        %625 = vset.pattern.permute.xlu0 2
        %626 = vperm.xlu0 %625, %v179
        %v627 = vpop.permute.xlu0 %626
        %629 = vset.pattern.permute.xlu0 2
        %630 = vperm.xlu0 %629, %v180
        %v631 = vpop.permute.xlu0 %630
        %633 = vset.pattern.permute.xlu0 2
        %634 = vperm.xlu0 %633, %v181
        %v635 = vpop.permute.xlu0 %634
        %637 = vset.pattern.permute.xlu0 2
        %638 = vperm.xlu0 %637, %v182
        %v639 = vpop.permute.xlu0 %638
        %641 = vset.pattern.permute.xlu0 2
        %642 = vperm.xlu0 %641, %v183
        %v643 = vpop.permute.xlu0 %642
        %645 = vset.pattern.permute.xlu0 2
        %646 = vperm.xlu0 %645, %v184
        %v647 = vpop.permute.xlu0 %646
        %649 = vset.pattern.permute.xlu0 2
        %650 = vperm.xlu0 %649, %v185
        %v651 = vpop.permute.xlu0 %650
        %653 = vset.pattern.permute.xlu0 2
        %654 = vperm.xlu0 %653, %v186
        %v655 = vpop.permute.xlu0 %654
        %657 = vset.pattern.permute.xlu0 2
        %658 = vperm.xlu0 %657, %v187
        %v659 = vpop.permute.xlu0 %658
        %661 = vset.pattern.permute.xlu0 2
        %662 = vperm.xlu0 %661, %v188
        %v663 = vpop.permute.xlu0 %662
        %665 = vset.pattern.permute.xlu0 2
        %666 = vperm.xlu0 %665, %v189
        %v667 = vpop.permute.xlu0 %666
        %669 = vset.pattern.permute.xlu0 2
        %670 = vperm.xlu0 %669, %v190
        %v671 = vpop.permute.xlu0 %670
        %673 = vset.pattern.permute.xlu0 2
        %674 = vperm.xlu0 %673, %v191
        %v675 = vpop.permute.xlu0 %674
        %677 = vset.pattern.permute.xlu0 2
        %678 = vperm.xlu0 %677, %v192
        %v679 = vpop.permute.xlu0 %678
        %681 = vset.pattern.permute.xlu0 2
        %682 = vperm.xlu0 %681, %v193
        %v683 = vpop.permute.xlu0 %682
        %685 = vset.pattern.permute.xlu0 2
        %686 = vperm.xlu0 %685, %v194
        %v687 = vpop.permute.xlu0 %686
        %689 = vset.pattern.permute.xlu0 2
        %690 = vperm.xlu0 %689, %v195
        %v691 = vpop.permute.xlu0 %690
        %693 = vset.pattern.permute.xlu0 2
        %694 = vperm.xlu0 %693, %v196
        %v695 = vpop.permute.xlu0 %694
        %697 = vset.pattern.permute.xlu0 2
        %698 = vperm.xlu0 %697, %v197
        %v699 = vpop.permute.xlu0 %698
        %701 = vset.pattern.permute.xlu0 2
        %702 = vperm.xlu0 %701, %v198
        %v703 = vpop.permute.xlu0 %702
        %705 = vset.pattern.permute.xlu0 2
        %706 = vperm.xlu0 %705, %v199
        %v707 = vpop.permute.xlu0 %706
        %709 = vset.pattern.permute.xlu0 2
        %710 = vperm.xlu0 %709, %v200
        %v711 = vpop.permute.xlu0 %710
        %713 = vset.pattern.permute.xlu0 2
        %714 = vperm.xlu0 %713, %v201
        %v715 = vpop.permute.xlu0 %714
        %717 = vset.pattern.permute.xlu0 2
        %718 = vperm.xlu0 %717, %v202
        %v719 = vpop.permute.xlu0 %718
        %721 = vset.pattern.permute.xlu0 2
        %722 = vperm.xlu0 %721, %v203
        %v723 = vpop.permute.xlu0 %722
        %v725 = vlaneseq
        %v726 = vshrl.u32 %v725, 7
        %v727 = vsub.s32 2, %v726
        %v728 = vrot.slane %v204, %v727
        %v729 = vmul.f32 %v599, %v728
        %v730 = vmul.f32 %v603, %v728
        %v731 = vmul.f32 %v607, %v728
        %v732 = vmul.f32 %v611, %v728
        %v733 = vmul.f32 %v615, %v728
        %v734 = vmul.f32 %v619, %v728
        %v735 = vmul.f32 %v623, %v728
        %v736 = vmul.f32 %v627, %v728
        %v737 = vmul.f32 %v631, %v728
        %v738 = vmul.f32 %v635, %v728
        %v739 = vmul.f32 %v639, %v728
        %v740 = vmul.f32 %v643, %v728
        %v741 = vmul.f32 %v647, %v728
        %v742 = vmul.f32 %v651, %v728
        %v743 = vmul.f32 %v655, %v728
        %v744 = vmul.f32 %v659, %v728
        %v745 = vmul.f32 %v663, %v728
        %v746 = vmul.f32 %v667, %v728
        %v747 = vmul.f32 %v671, %v728
        %v748 = vmul.f32 %v675, %v728
        %v749 = vmul.f32 %v679, %v728
        %v750 = vmul.f32 %v683, %v728
        %v751 = vmul.f32 %v687, %v728
        %v752 = vmul.f32 %v691, %v728
        %v753 = vmul.f32 %v695, %v728
        %v754 = vmul.f32 %v699, %v728
        %v755 = vmul.f32 %v703, %v728
        %v756 = vmul.f32 %v707, %v728
        %v757 = vmul.f32 %v711, %v728
        %v758 = vmul.f32 %v715, %v728
        %v759 = vmul.f32 %v719, %v728
        %v760 = vmul.f32 %v723, %v728
        %v761 = vadd.f32 %v565, %v729
        %v762 = vadd.f32 %v566, %v730
        %v763 = vadd.f32 %v567, %v731
        %v764 = vadd.f32 %v568, %v732
        %v765 = vadd.f32 %v569, %v733
        %v766 = vadd.f32 %v570, %v734
        %v767 = vadd.f32 %v571, %v735
        %v768 = vadd.f32 %v572, %v736
        %v769 = vadd.f32 %v573, %v737
        %v770 = vadd.f32 %v574, %v738
        %v771 = vadd.f32 %v575, %v739
        %v772 = vadd.f32 %v576, %v740
        %v773 = vadd.f32 %v577, %v741
        %v774 = vadd.f32 %v578, %v742
        %v775 = vadd.f32 %v579, %v743
        %v776 = vadd.f32 %v580, %v744
        %v777 = vadd.f32 %v581, %v745
        %v778 = vadd.f32 %v582, %v746
        %v779 = vadd.f32 %v583, %v747
        %v780 = vadd.f32 %v584, %v748
        %v781 = vadd.f32 %v585, %v749
        %v782 = vadd.f32 %v586, %v750
        %v783 = vadd.f32 %v587, %v751
        %v784 = vadd.f32 %v588, %v752
        %v785 = vadd.f32 %v589, %v753
        %v786 = vadd.f32 %v590, %v754
        %v787 = vadd.f32 %v591, %v755
        %v788 = vadd.f32 %v592, %v756
        %v789 = vadd.f32 %v593, %v757
        %v790 = vadd.f32 %v594, %v758
        %v791 = vadd.f32 %v595, %v759
        %v792 = vadd.f32 %v596, %v760
        %v793 = vld [vmem:[%s2 + $0x8] sm:$0x1]
        %v794 = vlaneseq
        %v795 = vshrl.u32 %v794, 7
        %v796 = vsub.s32 0, %v795
        %v797 = vrot.slane %v793, %v796
        %v798 = vadd.f32 %v761, %v797
        %v799 = vadd.f32 %v762, %v797
        %v800 = vadd.f32 %v763, %v797
        %v801 = vadd.f32 %v764, %v797
        %v802 = vadd.f32 %v765, %v797
        %v803 = vadd.f32 %v766, %v797
        %v804 = vadd.f32 %v767, %v797
        %v805 = vadd.f32 %v768, %v797
        %v806 = vadd.f32 %v769, %v797
        %v807 = vadd.f32 %v770, %v797
        %v808 = vadd.f32 %v771, %v797
        %v809 = vadd.f32 %v772, %v797
        %v810 = vadd.f32 %v773, %v797
        %v811 = vadd.f32 %v774, %v797
        %v812 = vadd.f32 %v775, %v797
        %v813 = vadd.f32 %v776, %v797
        %v814 = vadd.f32 %v777, %v797
        %v815 = vadd.f32 %v778, %v797
        %v816 = vadd.f32 %v779, %v797
        %v817 = vadd.f32 %v780, %v797
        %v818 = vadd.f32 %v781, %v797
        %v819 = vadd.f32 %v782, %v797
        %v820 = vadd.f32 %v783, %v797
        %v821 = vadd.f32 %v784, %v797
        %v822 = vadd.f32 %v785, %v797
        %v823 = vadd.f32 %v786, %v797
        %v824 = vadd.f32 %v787, %v797
        %v825 = vadd.f32 %v788, %v797
        %v826 = vadd.f32 %v789, %v797
        %v827 = vadd.f32 %v790, %v797
        %v828 = vadd.f32 %v791, %v797
        %v829 = vadd.f32 %v792, %v797
        %vm830 = vcmask 64512
        %v831 = vsel %vm830, %v798, -inf
        %832 = vmax.xlane.f32.xlu0 %v831
        %v833 = vpop.xlane.xlu0 %832
        %v834 = vsel %vm830, %v799, -inf
        %835 = vmax.xlane.f32.xlu0 %v834
        %v836 = vpop.xlane.xlu0 %835
        %v837 = vsel %vm830, %v800, -inf
        %838 = vmax.xlane.f32.xlu0 %v837
        %v839 = vpop.xlane.xlu0 %838
        %v840 = vsel %vm830, %v801, -inf
        %841 = vmax.xlane.f32.xlu0 %v840
        %v842 = vpop.xlane.xlu0 %841
        %v843 = vsel %vm830, %v802, -inf
        %844 = vmax.xlane.f32.xlu0 %v843
        %v845 = vpop.xlane.xlu0 %844
        %v846 = vsel %vm830, %v803, -inf
        %847 = vmax.xlane.f32.xlu0 %v846
        %v848 = vpop.xlane.xlu0 %847
        %v849 = vsel %vm830, %v804, -inf
        %850 = vmax.xlane.f32.xlu0 %v849
        %v851 = vpop.xlane.xlu0 %850
        %v852 = vsel %vm830, %v805, -inf
        %853 = vmax.xlane.f32.xlu0 %v852
        %v854 = vpop.xlane.xlu0 %853
        %v855 = vsel %vm830, %v806, -inf
        %856 = vmax.xlane.f32.xlu0 %v855
        %v857 = vpop.xlane.xlu0 %856
        %v858 = vsel %vm830, %v807, -inf
        %859 = vmax.xlane.f32.xlu0 %v858
        %v860 = vpop.xlane.xlu0 %859
        %v861 = vsel %vm830, %v808, -inf
        %862 = vmax.xlane.f32.xlu0 %v861
        %v863 = vpop.xlane.xlu0 %862
        %v864 = vsel %vm830, %v809, -inf
        %865 = vmax.xlane.f32.xlu0 %v864
        %v866 = vpop.xlane.xlu0 %865
        %v867 = vsel %vm830, %v810, -inf
        %868 = vmax.xlane.f32.xlu0 %v867
        %v869 = vpop.xlane.xlu0 %868
        %v870 = vsel %vm830, %v811, -inf
        %871 = vmax.xlane.f32.xlu0 %v870
        %v872 = vpop.xlane.xlu0 %871
        %v873 = vsel %vm830, %v812, -inf
        %874 = vmax.xlane.f32.xlu0 %v873
        %v875 = vpop.xlane.xlu0 %874
        %v876 = vsel %vm830, %v813, -inf
        %877 = vmax.xlane.f32.xlu0 %v876
        %v878 = vpop.xlane.xlu0 %877
        %v879 = vsel %vm830, %v814, -inf
        %880 = vmax.xlane.f32.xlu0 %v879
        %v881 = vpop.xlane.xlu0 %880
        %v882 = vsel %vm830, %v815, -inf
        %883 = vmax.xlane.f32.xlu0 %v882
        %v884 = vpop.xlane.xlu0 %883
        %v885 = vsel %vm830, %v816, -inf
        %886 = vmax.xlane.f32.xlu0 %v885
        %v887 = vpop.xlane.xlu0 %886
        %v888 = vsel %vm830, %v817, -inf
        %889 = vmax.xlane.f32.xlu0 %v888
        %v890 = vpop.xlane.xlu0 %889
        %v891 = vsel %vm830, %v818, -inf
        %892 = vmax.xlane.f32.xlu0 %v891
        %v893 = vpop.xlane.xlu0 %892
        %v894 = vsel %vm830, %v819, -inf
        %895 = vmax.xlane.f32.xlu0 %v894
        %v896 = vpop.xlane.xlu0 %895
        %v897 = vsel %vm830, %v820, -inf
        %898 = vmax.xlane.f32.xlu0 %v897
        %v899 = vpop.xlane.xlu0 %898
        %v900 = vsel %vm830, %v821, -inf
        %901 = vmax.xlane.f32.xlu0 %v900
        %v902 = vpop.xlane.xlu0 %901
        %v903 = vsel %vm830, %v822, -inf
        %904 = vmax.xlane.f32.xlu0 %v903
        %v905 = vpop.xlane.xlu0 %904
        %v906 = vsel %vm830, %v823, -inf
        %907 = vmax.xlane.f32.xlu0 %v906
        %v908 = vpop.xlane.xlu0 %907
        %v909 = vsel %vm830, %v824, -inf
        %910 = vmax.xlane.f32.xlu0 %v909
        %v911 = vpop.xlane.xlu0 %910
        %v912 = vsel %vm830, %v825, -inf
        %913 = vmax.xlane.f32.xlu0 %v912
        %v914 = vpop.xlane.xlu0 %913
        %v915 = vsel %vm830, %v826, -inf
        %916 = vmax.xlane.f32.xlu0 %v915
        %v917 = vpop.xlane.xlu0 %916
        %v918 = vsel %vm830, %v827, -inf
        %919 = vmax.xlane.f32.xlu0 %v918
        %v920 = vpop.xlane.xlu0 %919
        %v921 = vsel %vm830, %v828, -inf
        %922 = vmax.xlane.f32.xlu0 %v921
        %v923 = vpop.xlane.xlu0 %922
        %v924 = vsel %vm830, %v829, -inf
        %925 = vmax.xlane.f32.xlu0 %v924
        %v926 = vpop.xlane.xlu0 %925
        %v927 = vlaneseq
        %v928 = vand.u32 %v927, 127
        %vm929 = vcmp.eq.f32.partialorder %v798, %v833
        %vm930 = vcmp.eq.f32.partialorder %v799, %v836
        %vm931 = vcmp.eq.f32.partialorder %v800, %v839
        %vm932 = vcmp.eq.f32.partialorder %v801, %v842
        %vm933 = vcmp.eq.f32.partialorder %v802, %v845
        %vm934 = vcmp.eq.f32.partialorder %v803, %v848
        %vm935 = vcmp.eq.f32.partialorder %v804, %v851
        %vm936 = vcmp.eq.f32.partialorder %v805, %v854
        %vm937 = vcmp.eq.f32.partialorder %v806, %v857
        %vm938 = vcmp.eq.f32.partialorder %v807, %v860
        %vm939 = vcmp.eq.f32.partialorder %v808, %v863
        %vm940 = vcmp.eq.f32.partialorder %v809, %v866
        %vm941 = vcmp.eq.f32.partialorder %v810, %v869
        %vm942 = vcmp.eq.f32.partialorder %v811, %v872
        %vm943 = vcmp.eq.f32.partialorder %v812, %v875
        %vm944 = vcmp.eq.f32.partialorder %v813, %v878
        %vm945 = vcmp.eq.f32.partialorder %v814, %v881
        %vm946 = vcmp.eq.f32.partialorder %v815, %v884
        %vm947 = vcmp.eq.f32.partialorder %v816, %v887
        %vm948 = vcmp.eq.f32.partialorder %v817, %v890
        %vm949 = vcmp.eq.f32.partialorder %v818, %v893
        %vm950 = vcmp.eq.f32.partialorder %v819, %v896
        %vm951 = vcmp.eq.f32.partialorder %v820, %v899
        %vm952 = vcmp.eq.f32.partialorder %v821, %v902
        %vm953 = vcmp.eq.f32.partialorder %v822, %v905
        %vm954 = vcmp.eq.f32.partialorder %v823, %v908
        %vm955 = vcmp.eq.f32.partialorder %v824, %v911
        %vm956 = vcmp.eq.f32.partialorder %v825, %v914
        %vm957 = vcmp.eq.f32.partialorder %v826, %v917
        %vm958 = vcmp.eq.f32.partialorder %v827, %v920
        %vm959 = vcmp.eq.f32.partialorder %v828, %v923
        %vm960 = vcmp.eq.f32.partialorder %v829, %v926
        %v961 = vsel %vm929, %v928, 8
        %v962 = vsel %vm930, %v928, 8
        %v963 = vsel %vm931, %v928, 8
        %v964 = vsel %vm932, %v928, 8
        %v965 = vsel %vm933, %v928, 8
        %v966 = vsel %vm934, %v928, 8
        %v967 = vsel %vm935, %v928, 8
        %v968 = vsel %vm936, %v928, 8
        %v969 = vsel %vm937, %v928, 8
        %v970 = vsel %vm938, %v928, 8
        %v971 = vsel %vm939, %v928, 8
        %v972 = vsel %vm940, %v928, 8
        %v973 = vsel %vm941, %v928, 8
        %v974 = vsel %vm942, %v928, 8
        %v975 = vsel %vm943, %v928, 8
        %v976 = vsel %vm944, %v928, 8
        %v977 = vsel %vm945, %v928, 8
        %v978 = vsel %vm946, %v928, 8
        %v979 = vsel %vm947, %v928, 8
        %v980 = vsel %vm948, %v928, 8
        %v981 = vsel %vm949, %v928, 8
        %v982 = vsel %vm950, %v928, 8
        %v983 = vsel %vm951, %v928, 8
        %v984 = vsel %vm952, %v928, 8
        %v985 = vsel %vm953, %v928, 8
        %v986 = vsel %vm954, %v928, 8
        %v987 = vsel %vm955, %v928, 8
        %v988 = vsel %vm956, %v928, 8
        %v989 = vsel %vm957, %v928, 8
        %v990 = vsel %vm958, %v928, 8
        %v991 = vsel %vm959, %v928, 8
        %v992 = vsel %vm960, %v928, 8
        %v993 = vsel %vm830, %v961, 2147483647
        %v994 = vand.u32 %v993, 65535
        %v995 = vshra.s32 %v993, 16
        %v996 = vcvt.s32.f32 %v994
        %v997 = vcvt.s32.f32 %v995
        %998 = vmin.xlane.f32.xlu0 %v997
        %v999 = vpop.xlane.xlu0 %998
        %vm1000 = vcmp.eq.f32.partialorder %v997, %v999
        %v1001 = vsel %vm1000, %v996, inf
        %1002 = vmin.xlane.f32.xlu0 %v1001
        %v1003 = vpop.xlane.xlu0 %1002
        %v1004 = vcvt.f32.s32 %v1003
        %v1005 = vcvt.f32.s32 %v999
        %v1006 = vshll.u32 %v1005, 16
        %v1007 = vadd.s32 %v1006, %v1004
        %v1008 = vsel %vm830, %v962, 2147483647
        %v1009 = vand.u32 %v1008, 65535
        %v1010 = vshra.s32 %v1008, 16
        %v1011 = vcvt.s32.f32 %v1009
        %v1012 = vcvt.s32.f32 %v1010
        %1013 = vmin.xlane.f32.xlu0 %v1012
        %v1014 = vpop.xlane.xlu0 %1013
        %vm1015 = vcmp.eq.f32.partialorder %v1012, %v1014
        %v1016 = vsel %vm1015, %v1011, inf
        %1017 = vmin.xlane.f32.xlu0 %v1016
        %v1018 = vpop.xlane.xlu0 %1017
        %v1019 = vcvt.f32.s32 %v1018
        %v1020 = vcvt.f32.s32 %v1014
        %v1021 = vshll.u32 %v1020, 16
        %v1022 = vadd.s32 %v1021, %v1019
        %v1023 = vsel %vm830, %v963, 2147483647
        %v1024 = vand.u32 %v1023, 65535
        %v1025 = vshra.s32 %v1023, 16
        %v1026 = vcvt.s32.f32 %v1024
        %v1027 = vcvt.s32.f32 %v1025
        %1028 = vmin.xlane.f32.xlu0 %v1027
        %v1029 = vpop.xlane.xlu0 %1028
        %vm1030 = vcmp.eq.f32.partialorder %v1027, %v1029
        %v1031 = vsel %vm1030, %v1026, inf
        %1032 = vmin.xlane.f32.xlu0 %v1031
        %v1033 = vpop.xlane.xlu0 %1032
        %v1034 = vcvt.f32.s32 %v1033
        %v1035 = vcvt.f32.s32 %v1029
        %v1036 = vshll.u32 %v1035, 16
        %v1037 = vadd.s32 %v1036, %v1034
        %v1038 = vsel %vm830, %v964, 2147483647
        %v1039 = vand.u32 %v1038, 65535
        %v1040 = vshra.s32 %v1038, 16
        %v1041 = vcvt.s32.f32 %v1039
        %v1042 = vcvt.s32.f32 %v1040
        %1043 = vmin.xlane.f32.xlu0 %v1042
        %v1044 = vpop.xlane.xlu0 %1043
        %vm1045 = vcmp.eq.f32.partialorder %v1042, %v1044
        %v1046 = vsel %vm1045, %v1041, inf
        %1047 = vmin.xlane.f32.xlu0 %v1046
        %v1048 = vpop.xlane.xlu0 %1047
        %v1049 = vcvt.f32.s32 %v1048
        %v1050 = vcvt.f32.s32 %v1044
        %v1051 = vshll.u32 %v1050, 16
        %v1052 = vadd.s32 %v1051, %v1049
        %v1053 = vsel %vm830, %v965, 2147483647
        %v1054 = vand.u32 %v1053, 65535
        %v1055 = vshra.s32 %v1053, 16
        %v1056 = vcvt.s32.f32 %v1054
        %v1057 = vcvt.s32.f32 %v1055
        %1058 = vmin.xlane.f32.xlu0 %v1057
        %v1059 = vpop.xlane.xlu0 %1058
        %vm1060 = vcmp.eq.f32.partialorder %v1057, %v1059
        %v1061 = vsel %vm1060, %v1056, inf
        %1062 = vmin.xlane.f32.xlu0 %v1061
        %v1063 = vpop.xlane.xlu0 %1062
        %v1064 = vcvt.f32.s32 %v1063
        %v1065 = vcvt.f32.s32 %v1059
        %v1066 = vshll.u32 %v1065, 16
        %v1067 = vadd.s32 %v1066, %v1064
        %v1068 = vsel %vm830, %v966, 2147483647
        %v1069 = vand.u32 %v1068, 65535
        %v1070 = vshra.s32 %v1068, 16
        %v1071 = vcvt.s32.f32 %v1069
        %v1072 = vcvt.s32.f32 %v1070
        %1073 = vmin.xlane.f32.xlu0 %v1072
        %v1074 = vpop.xlane.xlu0 %1073
        %vm1075 = vcmp.eq.f32.partialorder %v1072, %v1074
        %v1076 = vsel %vm1075, %v1071, inf
        %1077 = vmin.xlane.f32.xlu0 %v1076
        %v1078 = vpop.xlane.xlu0 %1077
        %v1079 = vcvt.f32.s32 %v1078
        %v1080 = vcvt.f32.s32 %v1074
        %v1081 = vshll.u32 %v1080, 16
        %v1082 = vadd.s32 %v1081, %v1079
        %v1083 = vsel %vm830, %v967, 2147483647
        %v1084 = vand.u32 %v1083, 65535
        %v1085 = vshra.s32 %v1083, 16
        %v1086 = vcvt.s32.f32 %v1084
        %v1087 = vcvt.s32.f32 %v1085
        %1088 = vmin.xlane.f32.xlu0 %v1087
        %v1089 = vpop.xlane.xlu0 %1088
        %vm1090 = vcmp.eq.f32.partialorder %v1087, %v1089
        %v1091 = vsel %vm1090, %v1086, inf
        %1092 = vmin.xlane.f32.xlu0 %v1091
        %v1093 = vpop.xlane.xlu0 %1092
        %v1094 = vcvt.f32.s32 %v1093
        %v1095 = vcvt.f32.s32 %v1089
        %v1096 = vshll.u32 %v1095, 16
        %v1097 = vadd.s32 %v1096, %v1094
        %v1098 = vsel %vm830, %v968, 2147483647
        %v1099 = vand.u32 %v1098, 65535
        %v1100 = vshra.s32 %v1098, 16
        %v1101 = vcvt.s32.f32 %v1099
        %v1102 = vcvt.s32.f32 %v1100
        %1103 = vmin.xlane.f32.xlu0 %v1102
        %v1104 = vpop.xlane.xlu0 %1103
        %vm1105 = vcmp.eq.f32.partialorder %v1102, %v1104
        %v1106 = vsel %vm1105, %v1101, inf
        %1107 = vmin.xlane.f32.xlu0 %v1106
        %v1108 = vpop.xlane.xlu0 %1107
        %v1109 = vcvt.f32.s32 %v1108
        %v1110 = vcvt.f32.s32 %v1104
        %v1111 = vshll.u32 %v1110, 16
        %v1112 = vadd.s32 %v1111, %v1109
        %v1113 = vsel %vm830, %v969, 2147483647
        %v1114 = vand.u32 %v1113, 65535
        %v1115 = vshra.s32 %v1113, 16
        %v1116 = vcvt.s32.f32 %v1114
        %v1117 = vcvt.s32.f32 %v1115
        %1118 = vmin.xlane.f32.xlu0 %v1117
        %v1119 = vpop.xlane.xlu0 %1118
        %vm1120 = vcmp.eq.f32.partialorder %v1117, %v1119
        %v1121 = vsel %vm1120, %v1116, inf
        %1122 = vmin.xlane.f32.xlu0 %v1121
        %v1123 = vpop.xlane.xlu0 %1122
        %v1124 = vcvt.f32.s32 %v1123
        %v1125 = vcvt.f32.s32 %v1119
        %v1126 = vshll.u32 %v1125, 16
        %v1127 = vadd.s32 %v1126, %v1124
        %v1128 = vsel %vm830, %v970, 2147483647
        %v1129 = vand.u32 %v1128, 65535
        %v1130 = vshra.s32 %v1128, 16
        %v1131 = vcvt.s32.f32 %v1129
        %v1132 = vcvt.s32.f32 %v1130
        %1133 = vmin.xlane.f32.xlu0 %v1132
        %v1134 = vpop.xlane.xlu0 %1133
        %vm1135 = vcmp.eq.f32.partialorder %v1132, %v1134
        %v1136 = vsel %vm1135, %v1131, inf
        %1137 = vmin.xlane.f32.xlu0 %v1136
        %v1138 = vpop.xlane.xlu0 %1137
        %v1139 = vcvt.f32.s32 %v1138
        %v1140 = vcvt.f32.s32 %v1134
        %v1141 = vshll.u32 %v1140, 16
        %v1142 = vadd.s32 %v1141, %v1139
        %v1143 = vsel %vm830, %v971, 2147483647
        %v1144 = vand.u32 %v1143, 65535
        %v1145 = vshra.s32 %v1143, 16
        %v1146 = vcvt.s32.f32 %v1144
        %v1147 = vcvt.s32.f32 %v1145
        %1148 = vmin.xlane.f32.xlu0 %v1147
        %v1149 = vpop.xlane.xlu0 %1148
        %vm1150 = vcmp.eq.f32.partialorder %v1147, %v1149
        %v1151 = vsel %vm1150, %v1146, inf
        %1152 = vmin.xlane.f32.xlu0 %v1151
        %v1153 = vpop.xlane.xlu0 %1152
        %v1154 = vcvt.f32.s32 %v1153
        %v1155 = vcvt.f32.s32 %v1149
        %v1156 = vshll.u32 %v1155, 16
        %v1157 = vadd.s32 %v1156, %v1154
        %v1158 = vsel %vm830, %v972, 2147483647
        %v1159 = vand.u32 %v1158, 65535
        %v1160 = vshra.s32 %v1158, 16
        %v1161 = vcvt.s32.f32 %v1159
        %v1162 = vcvt.s32.f32 %v1160
        %1163 = vmin.xlane.f32.xlu0 %v1162
        %v1164 = vpop.xlane.xlu0 %1163
        %vm1165 = vcmp.eq.f32.partialorder %v1162, %v1164
        %v1166 = vsel %vm1165, %v1161, inf
        %1167 = vmin.xlane.f32.xlu0 %v1166
        %v1168 = vpop.xlane.xlu0 %1167
        %v1169 = vcvt.f32.s32 %v1168
        %v1170 = vcvt.f32.s32 %v1164
        %v1171 = vshll.u32 %v1170, 16
        %v1172 = vadd.s32 %v1171, %v1169
        %v1173 = vsel %vm830, %v973, 2147483647
        %v1174 = vand.u32 %v1173, 65535
        %v1175 = vshra.s32 %v1173, 16
        %v1176 = vcvt.s32.f32 %v1174
        %v1177 = vcvt.s32.f32 %v1175
        %1178 = vmin.xlane.f32.xlu0 %v1177
        %v1179 = vpop.xlane.xlu0 %1178
        %vm1180 = vcmp.eq.f32.partialorder %v1177, %v1179
        %v1181 = vsel %vm1180, %v1176, inf
        %1182 = vmin.xlane.f32.xlu0 %v1181
        %v1183 = vpop.xlane.xlu0 %1182
        %v1184 = vcvt.f32.s32 %v1183
        %v1185 = vcvt.f32.s32 %v1179
        %v1186 = vshll.u32 %v1185, 16
        %v1187 = vadd.s32 %v1186, %v1184
        %v1188 = vsel %vm830, %v974, 2147483647
        %v1189 = vand.u32 %v1188, 65535
        %v1190 = vshra.s32 %v1188, 16
        %v1191 = vcvt.s32.f32 %v1189
        %v1192 = vcvt.s32.f32 %v1190
        %1193 = vmin.xlane.f32.xlu0 %v1192
        %v1194 = vpop.xlane.xlu0 %1193
        %vm1195 = vcmp.eq.f32.partialorder %v1192, %v1194
        %v1196 = vsel %vm1195, %v1191, inf
        %1197 = vmin.xlane.f32.xlu0 %v1196
        %v1198 = vpop.xlane.xlu0 %1197
        %v1199 = vcvt.f32.s32 %v1198
        %v1200 = vcvt.f32.s32 %v1194
        %v1201 = vshll.u32 %v1200, 16
        %v1202 = vadd.s32 %v1201, %v1199
        %v1203 = vsel %vm830, %v975, 2147483647
        %v1204 = vand.u32 %v1203, 65535
        %v1205 = vshra.s32 %v1203, 16
        %v1206 = vcvt.s32.f32 %v1204
        %v1207 = vcvt.s32.f32 %v1205
        %1208 = vmin.xlane.f32.xlu0 %v1207
        %v1209 = vpop.xlane.xlu0 %1208
        %vm1210 = vcmp.eq.f32.partialorder %v1207, %v1209
        %v1211 = vsel %vm1210, %v1206, inf
        %1212 = vmin.xlane.f32.xlu0 %v1211
        %v1213 = vpop.xlane.xlu0 %1212
        %v1214 = vcvt.f32.s32 %v1213
        %v1215 = vcvt.f32.s32 %v1209
        %v1216 = vshll.u32 %v1215, 16
        %v1217 = vadd.s32 %v1216, %v1214
        %v1218 = vsel %vm830, %v976, 2147483647
        %v1219 = vand.u32 %v1218, 65535
        %v1220 = vshra.s32 %v1218, 16
        %v1221 = vcvt.s32.f32 %v1219
        %v1222 = vcvt.s32.f32 %v1220
        %1223 = vmin.xlane.f32.xlu0 %v1222
        %v1224 = vpop.xlane.xlu0 %1223
        %vm1225 = vcmp.eq.f32.partialorder %v1222, %v1224
        %v1226 = vsel %vm1225, %v1221, inf
        %1227 = vmin.xlane.f32.xlu0 %v1226
        %v1228 = vpop.xlane.xlu0 %1227
        %v1229 = vcvt.f32.s32 %v1228
        %v1230 = vcvt.f32.s32 %v1224
        %v1231 = vshll.u32 %v1230, 16
        %v1232 = vadd.s32 %v1231, %v1229
        %v1233 = vsel %vm830, %v977, 2147483647
        %v1234 = vand.u32 %v1233, 65535
        %v1235 = vshra.s32 %v1233, 16
        %v1236 = vcvt.s32.f32 %v1234
        %v1237 = vcvt.s32.f32 %v1235
        %1238 = vmin.xlane.f32.xlu0 %v1237
        %v1239 = vpop.xlane.xlu0 %1238
        %vm1240 = vcmp.eq.f32.partialorder %v1237, %v1239
        %v1241 = vsel %vm1240, %v1236, inf
        %1242 = vmin.xlane.f32.xlu0 %v1241
        %v1243 = vpop.xlane.xlu0 %1242
        %v1244 = vcvt.f32.s32 %v1243
        %v1245 = vcvt.f32.s32 %v1239
        %v1246 = vshll.u32 %v1245, 16
        %v1247 = vadd.s32 %v1246, %v1244
        %v1248 = vsel %vm830, %v978, 2147483647
        %v1249 = vand.u32 %v1248, 65535
        %v1250 = vshra.s32 %v1248, 16
        %v1251 = vcvt.s32.f32 %v1249
        %v1252 = vcvt.s32.f32 %v1250
        %1253 = vmin.xlane.f32.xlu0 %v1252
        %v1254 = vpop.xlane.xlu0 %1253
        %vm1255 = vcmp.eq.f32.partialorder %v1252, %v1254
        %v1256 = vsel %vm1255, %v1251, inf
        %1257 = vmin.xlane.f32.xlu0 %v1256
        %v1258 = vpop.xlane.xlu0 %1257
        %v1259 = vcvt.f32.s32 %v1258
        %v1260 = vcvt.f32.s32 %v1254
        %v1261 = vshll.u32 %v1260, 16
        %v1262 = vadd.s32 %v1261, %v1259
        %v1263 = vsel %vm830, %v979, 2147483647
        %v1264 = vand.u32 %v1263, 65535
        %v1265 = vshra.s32 %v1263, 16
        %v1266 = vcvt.s32.f32 %v1264
        %v1267 = vcvt.s32.f32 %v1265
        %1268 = vmin.xlane.f32.xlu0 %v1267
        %v1269 = vpop.xlane.xlu0 %1268
        %vm1270 = vcmp.eq.f32.partialorder %v1267, %v1269
        %v1271 = vsel %vm1270, %v1266, inf
        %1272 = vmin.xlane.f32.xlu0 %v1271
        %v1273 = vpop.xlane.xlu0 %1272
        %v1274 = vcvt.f32.s32 %v1273
        %v1275 = vcvt.f32.s32 %v1269
        %v1276 = vshll.u32 %v1275, 16
        %v1277 = vadd.s32 %v1276, %v1274
        %v1278 = vsel %vm830, %v980, 2147483647
        %v1279 = vand.u32 %v1278, 65535
        %v1280 = vshra.s32 %v1278, 16
        %v1281 = vcvt.s32.f32 %v1279
        %v1282 = vcvt.s32.f32 %v1280
        %1283 = vmin.xlane.f32.xlu0 %v1282
        %v1284 = vpop.xlane.xlu0 %1283
        %vm1285 = vcmp.eq.f32.partialorder %v1282, %v1284
        %v1286 = vsel %vm1285, %v1281, inf
        %1287 = vmin.xlane.f32.xlu0 %v1286
        %v1288 = vpop.xlane.xlu0 %1287
        %v1289 = vcvt.f32.s32 %v1288
        %v1290 = vcvt.f32.s32 %v1284
        %v1291 = vshll.u32 %v1290, 16
        %v1292 = vadd.s32 %v1291, %v1289
        %v1293 = vsel %vm830, %v981, 2147483647
        %v1294 = vand.u32 %v1293, 65535
        %v1295 = vshra.s32 %v1293, 16
        %v1296 = vcvt.s32.f32 %v1294
        %v1297 = vcvt.s32.f32 %v1295
        %1298 = vmin.xlane.f32.xlu0 %v1297
        %v1299 = vpop.xlane.xlu0 %1298
        %vm1300 = vcmp.eq.f32.partialorder %v1297, %v1299
        %v1301 = vsel %vm1300, %v1296, inf
        %1302 = vmin.xlane.f32.xlu0 %v1301
        %v1303 = vpop.xlane.xlu0 %1302
        %v1304 = vcvt.f32.s32 %v1303
        %v1305 = vcvt.f32.s32 %v1299
        %v1306 = vshll.u32 %v1305, 16
        %v1307 = vadd.s32 %v1306, %v1304
        %v1308 = vsel %vm830, %v982, 2147483647
        %v1309 = vand.u32 %v1308, 65535
        %v1310 = vshra.s32 %v1308, 16
        %v1311 = vcvt.s32.f32 %v1309
        %v1312 = vcvt.s32.f32 %v1310
        %1313 = vmin.xlane.f32.xlu0 %v1312
        %v1314 = vpop.xlane.xlu0 %1313
        %vm1315 = vcmp.eq.f32.partialorder %v1312, %v1314
        %v1316 = vsel %vm1315, %v1311, inf
        %1317 = vmin.xlane.f32.xlu0 %v1316
        %v1318 = vpop.xlane.xlu0 %1317
        %v1319 = vcvt.f32.s32 %v1318
        %v1320 = vcvt.f32.s32 %v1314
        %v1321 = vshll.u32 %v1320, 16
        %v1322 = vadd.s32 %v1321, %v1319
        %v1323 = vsel %vm830, %v983, 2147483647
        %v1324 = vand.u32 %v1323, 65535
        %v1325 = vshra.s32 %v1323, 16
        %v1326 = vcvt.s32.f32 %v1324
        %v1327 = vcvt.s32.f32 %v1325
        %1328 = vmin.xlane.f32.xlu0 %v1327
        %v1329 = vpop.xlane.xlu0 %1328
        %vm1330 = vcmp.eq.f32.partialorder %v1327, %v1329
        %v1331 = vsel %vm1330, %v1326, inf
        %1332 = vmin.xlane.f32.xlu0 %v1331
        %v1333 = vpop.xlane.xlu0 %1332
        %v1334 = vcvt.f32.s32 %v1333
        %v1335 = vcvt.f32.s32 %v1329
        %v1336 = vshll.u32 %v1335, 16
        %v1337 = vadd.s32 %v1336, %v1334
        %v1338 = vsel %vm830, %v984, 2147483647
        %v1339 = vand.u32 %v1338, 65535
        %v1340 = vshra.s32 %v1338, 16
        %v1341 = vcvt.s32.f32 %v1339
        %v1342 = vcvt.s32.f32 %v1340
        %1343 = vmin.xlane.f32.xlu0 %v1342
        %v1344 = vpop.xlane.xlu0 %1343
        %vm1345 = vcmp.eq.f32.partialorder %v1342, %v1344
        %v1346 = vsel %vm1345, %v1341, inf
        %1347 = vmin.xlane.f32.xlu0 %v1346
        %v1348 = vpop.xlane.xlu0 %1347
        %v1349 = vcvt.f32.s32 %v1348
        %v1350 = vcvt.f32.s32 %v1344
        %v1351 = vshll.u32 %v1350, 16
        %v1352 = vadd.s32 %v1351, %v1349
        %v1353 = vsel %vm830, %v985, 2147483647
        %v1354 = vand.u32 %v1353, 65535
        %v1355 = vshra.s32 %v1353, 16
        %v1356 = vcvt.s32.f32 %v1354
        %v1357 = vcvt.s32.f32 %v1355
        %1358 = vmin.xlane.f32.xlu0 %v1357
        %v1359 = vpop.xlane.xlu0 %1358
        %vm1360 = vcmp.eq.f32.partialorder %v1357, %v1359
        %v1361 = vsel %vm1360, %v1356, inf
        %1362 = vmin.xlane.f32.xlu0 %v1361
        %v1363 = vpop.xlane.xlu0 %1362
        %v1364 = vcvt.f32.s32 %v1363
        %v1365 = vcvt.f32.s32 %v1359
        %v1366 = vshll.u32 %v1365, 16
        %v1367 = vadd.s32 %v1366, %v1364
        %v1368 = vsel %vm830, %v986, 2147483647
        %v1369 = vand.u32 %v1368, 65535
        %v1370 = vshra.s32 %v1368, 16
        %v1371 = vcvt.s32.f32 %v1369
        %v1372 = vcvt.s32.f32 %v1370
        %1373 = vmin.xlane.f32.xlu0 %v1372
        %v1374 = vpop.xlane.xlu0 %1373
        %vm1375 = vcmp.eq.f32.partialorder %v1372, %v1374
        %v1376 = vsel %vm1375, %v1371, inf
        %1377 = vmin.xlane.f32.xlu0 %v1376
        %v1378 = vpop.xlane.xlu0 %1377
        %v1379 = vcvt.f32.s32 %v1378
        %v1380 = vcvt.f32.s32 %v1374
        %v1381 = vshll.u32 %v1380, 16
        %v1382 = vadd.s32 %v1381, %v1379
        %v1383 = vsel %vm830, %v987, 2147483647
        %v1384 = vand.u32 %v1383, 65535
        %v1385 = vshra.s32 %v1383, 16
        %v1386 = vcvt.s32.f32 %v1384
        %v1387 = vcvt.s32.f32 %v1385
        %1388 = vmin.xlane.f32.xlu0 %v1387
        %v1389 = vpop.xlane.xlu0 %1388
        %vm1390 = vcmp.eq.f32.partialorder %v1387, %v1389
        %v1391 = vsel %vm1390, %v1386, inf
        %1392 = vmin.xlane.f32.xlu0 %v1391
        %v1393 = vpop.xlane.xlu0 %1392
        %v1394 = vcvt.f32.s32 %v1393
        %v1395 = vcvt.f32.s32 %v1389
        %v1396 = vshll.u32 %v1395, 16
        %v1397 = vadd.s32 %v1396, %v1394
        %v1398 = vsel %vm830, %v988, 2147483647
        %v1399 = vand.u32 %v1398, 65535
        %v1400 = vshra.s32 %v1398, 16
        %v1401 = vcvt.s32.f32 %v1399
        %v1402 = vcvt.s32.f32 %v1400
        %1403 = vmin.xlane.f32.xlu0 %v1402
        %v1404 = vpop.xlane.xlu0 %1403
        %vm1405 = vcmp.eq.f32.partialorder %v1402, %v1404
        %v1406 = vsel %vm1405, %v1401, inf
        %1407 = vmin.xlane.f32.xlu0 %v1406
        %v1408 = vpop.xlane.xlu0 %1407
        %v1409 = vcvt.f32.s32 %v1408
        %v1410 = vcvt.f32.s32 %v1404
        %v1411 = vshll.u32 %v1410, 16
        %v1412 = vadd.s32 %v1411, %v1409
        %v1413 = vsel %vm830, %v989, 2147483647
        %v1414 = vand.u32 %v1413, 65535
        %v1415 = vshra.s32 %v1413, 16
        %v1416 = vcvt.s32.f32 %v1414
        %v1417 = vcvt.s32.f32 %v1415
        %1418 = vmin.xlane.f32.xlu0 %v1417
        %v1419 = vpop.xlane.xlu0 %1418
        %vm1420 = vcmp.eq.f32.partialorder %v1417, %v1419
        %v1421 = vsel %vm1420, %v1416, inf
        %1422 = vmin.xlane.f32.xlu0 %v1421
        %v1423 = vpop.xlane.xlu0 %1422
        %v1424 = vcvt.f32.s32 %v1423
        %v1425 = vcvt.f32.s32 %v1419
        %v1426 = vshll.u32 %v1425, 16
        %v1427 = vadd.s32 %v1426, %v1424
        %v1428 = vsel %vm830, %v990, 2147483647
        %v1429 = vand.u32 %v1428, 65535
        %v1430 = vshra.s32 %v1428, 16
        %v1431 = vcvt.s32.f32 %v1429
        %v1432 = vcvt.s32.f32 %v1430
        %1433 = vmin.xlane.f32.xlu0 %v1432
        %v1434 = vpop.xlane.xlu0 %1433
        %vm1435 = vcmp.eq.f32.partialorder %v1432, %v1434
        %v1436 = vsel %vm1435, %v1431, inf
        %1437 = vmin.xlane.f32.xlu0 %v1436
        %v1438 = vpop.xlane.xlu0 %1437
        %v1439 = vcvt.f32.s32 %v1438
        %v1440 = vcvt.f32.s32 %v1434
        %v1441 = vshll.u32 %v1440, 16
        %v1442 = vadd.s32 %v1441, %v1439
        %v1443 = vsel %vm830, %v991, 2147483647
        %v1444 = vand.u32 %v1443, 65535
        %v1445 = vshra.s32 %v1443, 16
        %v1446 = vcvt.s32.f32 %v1444
        %v1447 = vcvt.s32.f32 %v1445
        %1448 = vmin.xlane.f32.xlu0 %v1447
        %v1449 = vpop.xlane.xlu0 %1448
        %vm1450 = vcmp.eq.f32.partialorder %v1447, %v1449
        %v1451 = vsel %vm1450, %v1446, inf
        %1452 = vmin.xlane.f32.xlu0 %v1451
        %v1453 = vpop.xlane.xlu0 %1452
        %v1454 = vcvt.f32.s32 %v1453
        %v1455 = vcvt.f32.s32 %v1449
        %v1456 = vshll.u32 %v1455, 16
        %v1457 = vadd.s32 %v1456, %v1454
        %v1458 = vsel %vm830, %v992, 2147483647
        %v1459 = vand.u32 %v1458, 65535
        %v1460 = vshra.s32 %v1458, 16
        %v1461 = vcvt.s32.f32 %v1459
        %v1462 = vcvt.s32.f32 %v1460
        %1463 = vmin.xlane.f32.xlu0 %v1462
        %v1464 = vpop.xlane.xlu0 %1463
        %vm1465 = vcmp.eq.f32.partialorder %v1462, %v1464
        %v1466 = vsel %vm1465, %v1461, inf
        %1467 = vmin.xlane.f32.xlu0 %v1466
        %v1468 = vpop.xlane.xlu0 %1467
        %v1469 = vcvt.f32.s32 %v1468
        %v1470 = vcvt.f32.s32 %v1464
        %v1471 = vshll.u32 %v1470, 16
        %v1472 = vadd.s32 %v1471, %v1469
        %v1473 = vcvt.s32.f32 %v1007
        %v1474 = vcvt.s32.f32 %v1022
        %v1475 = vcvt.s32.f32 %v1037
        %v1476 = vcvt.s32.f32 %v1052
        %v1477 = vcvt.s32.f32 %v1067
        %v1478 = vcvt.s32.f32 %v1082
        %v1479 = vcvt.s32.f32 %v1097
        %v1480 = vcvt.s32.f32 %v1112
        %v1481 = vcvt.s32.f32 %v1127
        %v1482 = vcvt.s32.f32 %v1142
        %v1483 = vcvt.s32.f32 %v1157
        %v1484 = vcvt.s32.f32 %v1172
        %v1485 = vcvt.s32.f32 %v1187
        %v1486 = vcvt.s32.f32 %v1202
        %v1487 = vcvt.s32.f32 %v1217
        %v1488 = vcvt.s32.f32 %v1232
        %v1489 = vcvt.s32.f32 %v1247
        %v1490 = vcvt.s32.f32 %v1262
        %v1491 = vcvt.s32.f32 %v1277
        %v1492 = vcvt.s32.f32 %v1292
        %v1493 = vcvt.s32.f32 %v1307
        %v1494 = vcvt.s32.f32 %v1322
        %v1495 = vcvt.s32.f32 %v1337
        %v1496 = vcvt.s32.f32 %v1352
        %v1497 = vcvt.s32.f32 %v1367
        %v1498 = vcvt.s32.f32 %v1382
        %v1499 = vcvt.s32.f32 %v1397
        %v1500 = vcvt.s32.f32 %v1412
        %v1501 = vcvt.s32.f32 %v1427
        %v1502 = vcvt.s32.f32 %v1442
        %v1503 = vcvt.s32.f32 %v1457
        %v1504 = vcvt.s32.f32 %v1472
        %v1505 = vmul.f32 %v172, %v1473
        %v1506 = vmul.f32 %v173, %v1474
        %v1507 = vmul.f32 %v174, %v1475
        %v1508 = vmul.f32 %v175, %v1476
        %v1509 = vmul.f32 %v176, %v1477
        %v1510 = vmul.f32 %v177, %v1478
        %v1511 = vmul.f32 %v178, %v1479
        %v1512 = vmul.f32 %v179, %v1480
        %v1513 = vmul.f32 %v180, %v1481
        %v1514 = vmul.f32 %v181, %v1482
        %v1515 = vmul.f32 %v182, %v1483
        %v1516 = vmul.f32 %v183, %v1484
        %v1517 = vmul.f32 %v184, %v1485
        %v1518 = vmul.f32 %v185, %v1486
        %v1519 = vmul.f32 %v186, %v1487
        %v1520 = vmul.f32 %v187, %v1488
        %v1521 = vmul.f32 %v188, %v1489
        %v1522 = vmul.f32 %v189, %v1490
        %v1523 = vmul.f32 %v190, %v1491
        %v1524 = vmul.f32 %v191, %v1492
        %v1525 = vmul.f32 %v192, %v1493
        %v1526 = vmul.f32 %v193, %v1494
        %v1527 = vmul.f32 %v194, %v1495
        %v1528 = vmul.f32 %v195, %v1496
        %v1529 = vmul.f32 %v196, %v1497
        %v1530 = vmul.f32 %v197, %v1498
        %v1531 = vmul.f32 %v198, %v1499
        %v1532 = vmul.f32 %v199, %v1500
        %v1533 = vmul.f32 %v200, %v1501
        %v1534 = vmul.f32 %v201, %v1502
        %v1535 = vmul.f32 %v202, %v1503
        %v1536 = vmul.f32 %v203, %v1504
        %v1537 = vlaneseq
        %v1538 = vshrl.u32 %v1537, 7
        %v1539 = vadd.s32 %v1538, 8
        %v1540 = vadd.s32 %v1538, 16
        %v1541 = vadd.s32 %v1538, 24
        %v1542 = vadd.s32 %v1538, 32
        %v1543 = vadd.s32 %v1538, 40
        %v1544 = vadd.s32 %v1538, 48
        %v1545 = vadd.s32 %v1538, 56
        %v1546 = vadd.s32 %v1538, 64
        %v1547 = vadd.s32 %v1538, 72
        %v1548 = vadd.s32 %v1538, 80
        %v1549 = vadd.s32 %v1538, 88
        %v1550 = vadd.s32 %v1538, 96
        %v1551 = vadd.s32 %v1538, 104
        %v1552 = vadd.s32 %v1538, 112
        %v1553 = vadd.s32 %v1538, 120
        %v1554 = vadd.s32 %v1538, 128
        %v1555 = vadd.s32 %v1538, 136
        %v1556 = vadd.s32 %v1538, 144
        %v1557 = vadd.s32 %v1538, 152
        %v1558 = vadd.s32 %v1538, 160
        %v1559 = vadd.s32 %v1538, 168
        %v1560 = vadd.s32 %v1538, 176
        %v1561 = vadd.s32 %v1538, 184
        %v1562 = vadd.s32 %v1538, 192
        %v1563 = vadd.s32 %v1538, 200
        %v1564 = vadd.s32 %v1538, 208
        %v1565 = vadd.s32 %v1538, 216
        %v1566 = vadd.s32 %v1538, 224
        %v1567 = vadd.s32 %v1538, 232
        %v1568 = vadd.s32 %v1538, 240
        %v1569 = vadd.s32 %v1538, 248
        %v1570 = vand.u32 %v1538, 15
        %v1571 = vand.u32 %v1539, 15
        %v1572 = vand.u32 %v1540, 15
        %v1573 = vand.u32 %v1541, 15
        %v1574 = vand.u32 %v1542, 15
        %v1575 = vand.u32 %v1543, 15
        %v1576 = vand.u32 %v1544, 15
        %v1577 = vand.u32 %v1545, 15
        %v1578 = vand.u32 %v1546, 15
        %v1579 = vand.u32 %v1547, 15
        %v1580 = vand.u32 %v1548, 15
        %v1581 = vand.u32 %v1549, 15
        %v1582 = vand.u32 %v1550, 15
        %v1583 = vand.u32 %v1551, 15
        %v1584 = vand.u32 %v1552, 15
        %v1585 = vand.u32 %v1553, 15
        %v1586 = vand.u32 %v1554, 15
        %v1587 = vand.u32 %v1555, 15
        %v1588 = vand.u32 %v1556, 15
        %v1589 = vand.u32 %v1557, 15
        %v1590 = vand.u32 %v1558, 15
        %v1591 = vand.u32 %v1559, 15
        %v1592 = vand.u32 %v1560, 15
        %v1593 = vand.u32 %v1561, 15
        %v1594 = vand.u32 %v1562, 15
        %v1595 = vand.u32 %v1563, 15
        %v1596 = vand.u32 %v1564, 15
        %v1597 = vand.u32 %v1565, 15
        %v1598 = vand.u32 %v1566, 15
        %v1599 = vand.u32 %v1567, 15
        %v1600 = vand.u32 %v1568, 15
        %v1601 = vand.u32 %v1569, 15
        %vm1602 = vcmp.gt.s32.totalorder %v1570, 0
        %vm1603 = vcmp.gt.s32.totalorder %v1571, 0
        %vm1604 = vcmp.gt.s32.totalorder %v1572, 0
        %vm1605 = vcmp.gt.s32.totalorder %v1573, 0
        %vm1606 = vcmp.gt.s32.totalorder %v1574, 0
        %vm1607 = vcmp.gt.s32.totalorder %v1575, 0
        %vm1608 = vcmp.gt.s32.totalorder %v1576, 0
        %vm1609 = vcmp.gt.s32.totalorder %v1577, 0
        %vm1610 = vcmp.gt.s32.totalorder %v1578, 0
        %vm1611 = vcmp.gt.s32.totalorder %v1579, 0
        %vm1612 = vcmp.gt.s32.totalorder %v1580, 0
        %vm1613 = vcmp.gt.s32.totalorder %v1581, 0
        %vm1614 = vcmp.gt.s32.totalorder %v1582, 0
        %vm1615 = vcmp.gt.s32.totalorder %v1583, 0
        %vm1616 = vcmp.gt.s32.totalorder %v1584, 0
        %vm1617 = vcmp.gt.s32.totalorder %v1585, 0
        %vm1618 = vcmp.gt.s32.totalorder %v1586, 0
        %vm1619 = vcmp.gt.s32.totalorder %v1587, 0
        %vm1620 = vcmp.gt.s32.totalorder %v1588, 0
        %vm1621 = vcmp.gt.s32.totalorder %v1589, 0
        %vm1622 = vcmp.gt.s32.totalorder %v1590, 0
        %vm1623 = vcmp.gt.s32.totalorder %v1591, 0
        %vm1624 = vcmp.gt.s32.totalorder %v1592, 0
        %vm1625 = vcmp.gt.s32.totalorder %v1593, 0
        %vm1626 = vcmp.gt.s32.totalorder %v1594, 0
        %vm1627 = vcmp.gt.s32.totalorder %v1595, 0
        %vm1628 = vcmp.gt.s32.totalorder %v1596, 0
        %vm1629 = vcmp.gt.s32.totalorder %v1597, 0
        %vm1630 = vcmp.gt.s32.totalorder %v1598, 0
        %vm1631 = vcmp.gt.s32.totalorder %v1599, 0
        %vm1632 = vcmp.gt.s32.totalorder %v1600, 0
        %vm1633 = vcmp.gt.s32.totalorder %v1601, 0
        %v1634 = vsel %vm1602, 1, 0
        %v1635 = vsel %vm1603, 1, 0
        %v1636 = vsel %vm1604, 1, 0
        %v1637 = vsel %vm1605, 1, 0
        %v1638 = vsel %vm1606, 1, 0
        %v1639 = vsel %vm1607, 1, 0
        %v1640 = vsel %vm1608, 1, 0
        %v1641 = vsel %vm1609, 1, 0
        %v1642 = vsel %vm1610, 1, 0
        %v1643 = vsel %vm1611, 1, 0
        %v1644 = vsel %vm1612, 1, 0
        %v1645 = vsel %vm1613, 1, 0
        %v1646 = vsel %vm1614, 1, 0
        %v1647 = vsel %vm1615, 1, 0
        %v1648 = vsel %vm1616, 1, 0
        %v1649 = vsel %vm1617, 1, 0
        %v1650 = vsel %vm1618, 1, 0
        %v1651 = vsel %vm1619, 1, 0
        %v1652 = vsel %vm1620, 1, 0
        %v1653 = vsel %vm1621, 1, 0
        %v1654 = vsel %vm1622, 1, 0
        %v1655 = vsel %vm1623, 1, 0
        %v1656 = vsel %vm1624, 1, 0
        %v1657 = vsel %vm1625, 1, 0
        %v1658 = vsel %vm1626, 1, 0
        %v1659 = vsel %vm1627, 1, 0
        %v1660 = vsel %vm1628, 1, 0
        %v1661 = vsel %vm1629, 1, 0
        %v1662 = vsel %vm1630, 1, 0
        %v1663 = vsel %vm1631, 1, 0
        %v1664 = vsel %vm1632, 1, 0
        %v1665 = vsel %vm1633, 1, 0
        %v1666 = vcvt.s32.f32 %v1634
        %v1667 = vcvt.s32.f32 %v1635
        %v1668 = vcvt.s32.f32 %v1636
        %v1669 = vcvt.s32.f32 %v1637
        %v1670 = vcvt.s32.f32 %v1638
        %v1671 = vcvt.s32.f32 %v1639
        %v1672 = vcvt.s32.f32 %v1640
        %v1673 = vcvt.s32.f32 %v1641
        %v1674 = vcvt.s32.f32 %v1642
        %v1675 = vcvt.s32.f32 %v1643
        %v1676 = vcvt.s32.f32 %v1644
        %v1677 = vcvt.s32.f32 %v1645
        %v1678 = vcvt.s32.f32 %v1646
        %v1679 = vcvt.s32.f32 %v1647
        %v1680 = vcvt.s32.f32 %v1648
        %v1681 = vcvt.s32.f32 %v1649
        %v1682 = vcvt.s32.f32 %v1650
        %v1683 = vcvt.s32.f32 %v1651
        %v1684 = vcvt.s32.f32 %v1652
        %v1685 = vcvt.s32.f32 %v1653
        %v1686 = vcvt.s32.f32 %v1654
        %v1687 = vcvt.s32.f32 %v1655
        %v1688 = vcvt.s32.f32 %v1656
        %v1689 = vcvt.s32.f32 %v1657
        %v1690 = vcvt.s32.f32 %v1658
        %v1691 = vcvt.s32.f32 %v1659
        %v1692 = vcvt.s32.f32 %v1660
        %v1693 = vcvt.s32.f32 %v1661
        %v1694 = vcvt.s32.f32 %v1662
        %v1695 = vcvt.s32.f32 %v1663
        %v1696 = vcvt.s32.f32 %v1664
        %v1697 = vcvt.s32.f32 %v1665
        %vm1698 = vcmp.lt.s32.totalorder %v1570, 15
        %vm1699 = vcmp.lt.s32.totalorder %v1571, 15
        %vm1700 = vcmp.lt.s32.totalorder %v1572, 15
        %vm1701 = vcmp.lt.s32.totalorder %v1573, 15
        %vm1702 = vcmp.lt.s32.totalorder %v1574, 15
        %vm1703 = vcmp.lt.s32.totalorder %v1575, 15
        %vm1704 = vcmp.lt.s32.totalorder %v1576, 15
        %vm1705 = vcmp.lt.s32.totalorder %v1577, 15
        %vm1706 = vcmp.lt.s32.totalorder %v1578, 15
        %vm1707 = vcmp.lt.s32.totalorder %v1579, 15
        %vm1708 = vcmp.lt.s32.totalorder %v1580, 15
        %vm1709 = vcmp.lt.s32.totalorder %v1581, 15
        %vm1710 = vcmp.lt.s32.totalorder %v1582, 15
        %vm1711 = vcmp.lt.s32.totalorder %v1583, 15
        %vm1712 = vcmp.lt.s32.totalorder %v1584, 15
        %vm1713 = vcmp.lt.s32.totalorder %v1585, 15
        %vm1714 = vcmp.lt.s32.totalorder %v1586, 15
        %vm1715 = vcmp.lt.s32.totalorder %v1587, 15
        %vm1716 = vcmp.lt.s32.totalorder %v1588, 15
        %vm1717 = vcmp.lt.s32.totalorder %v1589, 15
        %vm1718 = vcmp.lt.s32.totalorder %v1590, 15
        %vm1719 = vcmp.lt.s32.totalorder %v1591, 15
        %vm1720 = vcmp.lt.s32.totalorder %v1592, 15
        %vm1721 = vcmp.lt.s32.totalorder %v1593, 15
        %vm1722 = vcmp.lt.s32.totalorder %v1594, 15
        %vm1723 = vcmp.lt.s32.totalorder %v1595, 15
        %vm1724 = vcmp.lt.s32.totalorder %v1596, 15
        %vm1725 = vcmp.lt.s32.totalorder %v1597, 15
        %vm1726 = vcmp.lt.s32.totalorder %v1598, 15
        %vm1727 = vcmp.lt.s32.totalorder %v1599, 15
        %vm1728 = vcmp.lt.s32.totalorder %v1600, 15
        %vm1729 = vcmp.lt.s32.totalorder %v1601, 15
        %v1730 = vsel %vm1698, 1, 0
        %v1731 = vsel %vm1699, 1, 0
        %v1732 = vsel %vm1700, 1, 0
        %v1733 = vsel %vm1701, 1, 0
        %v1734 = vsel %vm1702, 1, 0
        %v1735 = vsel %vm1703, 1, 0
        %v1736 = vsel %vm1704, 1, 0
        %v1737 = vsel %vm1705, 1, 0
        %v1738 = vsel %vm1706, 1, 0
        %v1739 = vsel %vm1707, 1, 0
        %v1740 = vsel %vm1708, 1, 0
        %v1741 = vsel %vm1709, 1, 0
        %v1742 = vsel %vm1710, 1, 0
        %v1743 = vsel %vm1711, 1, 0
        %v1744 = vsel %vm1712, 1, 0
        %v1745 = vsel %vm1713, 1, 0
        %v1746 = vsel %vm1714, 1, 0
        %v1747 = vsel %vm1715, 1, 0
        %v1748 = vsel %vm1716, 1, 0
        %v1749 = vsel %vm1717, 1, 0
        %v1750 = vsel %vm1718, 1, 0
        %v1751 = vsel %vm1719, 1, 0
        %v1752 = vsel %vm1720, 1, 0
        %v1753 = vsel %vm1721, 1, 0
        %v1754 = vsel %vm1722, 1, 0
        %v1755 = vsel %vm1723, 1, 0
        %v1756 = vsel %vm1724, 1, 0
        %v1757 = vsel %vm1725, 1, 0
        %v1758 = vsel %vm1726, 1, 0
        %v1759 = vsel %vm1727, 1, 0
        %v1760 = vsel %vm1728, 1, 0
        %v1761 = vsel %vm1729, 1, 0
        %v1762 = vcvt.s32.f32 %v1730
        %v1763 = vcvt.s32.f32 %v1731
        %v1764 = vcvt.s32.f32 %v1732
        %v1765 = vcvt.s32.f32 %v1733
        %v1766 = vcvt.s32.f32 %v1734
        %v1767 = vcvt.s32.f32 %v1735
        %v1768 = vcvt.s32.f32 %v1736
        %v1769 = vcvt.s32.f32 %v1737
        %v1770 = vcvt.s32.f32 %v1738
        %v1771 = vcvt.s32.f32 %v1739
        %v1772 = vcvt.s32.f32 %v1740
        %v1773 = vcvt.s32.f32 %v1741
        %v1774 = vcvt.s32.f32 %v1742
        %v1775 = vcvt.s32.f32 %v1743
        %v1776 = vcvt.s32.f32 %v1744
        %v1777 = vcvt.s32.f32 %v1745
        %v1778 = vcvt.s32.f32 %v1746
        %v1779 = vcvt.s32.f32 %v1747
        %v1780 = vcvt.s32.f32 %v1748
        %v1781 = vcvt.s32.f32 %v1749
        %v1782 = vcvt.s32.f32 %v1750
        %v1783 = vcvt.s32.f32 %v1751
        %v1784 = vcvt.s32.f32 %v1752
        %v1785 = vcvt.s32.f32 %v1753
        %v1786 = vcvt.s32.f32 %v1754
        %v1787 = vcvt.s32.f32 %v1755
        %v1788 = vcvt.s32.f32 %v1756
        %v1789 = vcvt.s32.f32 %v1757
        %v1790 = vcvt.s32.f32 %v1758
        %v1791 = vcvt.s32.f32 %v1759
        %v1792 = vcvt.s32.f32 %v1760
        %v1793 = vcvt.s32.f32 %v1761
        %vm1794 = vcmask 23552
        %1795 = vst.msk [vmem:[#allocation2] sm:$0xff] %vm1794, 0.0
        %1796 = vst.msk [vmem:[#allocation2 + $0x8] sm:$0xff] %vm1794, 0.0
        %1797 = vst.msk [vmem:[#allocation2 + $0x10] sm:$0xff] %vm1794, 0.0
        %1798 = vst.msk [vmem:[#allocation2 + $0x118] sm:$0xff] %vm1794, 0.0
        %1799 = vst.msk [vmem:[#allocation2 + $0x120] sm:$0xff] %vm1794, 0.0
        %1800 = vst.msk [vmem:[#allocation2 + $0x128] sm:$0xff] %vm1794, 0.0
        %1801 = vst.msk [vmem:[#allocation2 + $0x18] sm:$0xff] %vm1794, %v1505
        %1802 = vst.msk [vmem:[#allocation2 + $0x20] sm:$0xff] %vm1794, %v1506
        %1803 = vst.msk [vmem:[#allocation2 + $0x28] sm:$0xff] %vm1794, %v1507
        %1804 = vst.msk [vmem:[#allocation2 + $0x30] sm:$0xff] %vm1794, %v1508
        %1805 = vst.msk [vmem:[#allocation2 + $0x38] sm:$0xff] %vm1794, %v1509
        %1806 = vst.msk [vmem:[#allocation2 + $0x40] sm:$0xff] %vm1794, %v1510
        %1807 = vst.msk [vmem:[#allocation2 + $0x48] sm:$0xff] %vm1794, %v1511
        %1808 = vst.msk [vmem:[#allocation2 + $0x50] sm:$0xff] %vm1794, %v1512
        %1809 = vst.msk [vmem:[#allocation2 + $0x58] sm:$0xff] %vm1794, %v1513
        %1810 = vst.msk [vmem:[#allocation2 + $0x60] sm:$0xff] %vm1794, %v1514
        %1811 = vst.msk [vmem:[#allocation2 + $0x68] sm:$0xff] %vm1794, %v1515
        %1812 = vst.msk [vmem:[#allocation2 + $0x70] sm:$0xff] %vm1794, %v1516
        %1813 = vst.msk [vmem:[#allocation2 + $0x78] sm:$0xff] %vm1794, %v1517
        %1814 = vst.msk [vmem:[#allocation2 + $0x80] sm:$0xff] %vm1794, %v1518
        %1815 = vst.msk [vmem:[#allocation2 + $0x88] sm:$0xff] %vm1794, %v1519
        %1816 = vst.msk [vmem:[#allocation2 + $0x90] sm:$0xff] %vm1794, %v1520
        %1817 = vst.msk [vmem:[#allocation2 + $0x98] sm:$0xff] %vm1794, %v1521
        %1818 = vst.msk [vmem:[#allocation2 + $0xa0] sm:$0xff] %vm1794, %v1522
        %1819 = vst.msk [vmem:[#allocation2 + $0xa8] sm:$0xff] %vm1794, %v1523
        %1820 = vst.msk [vmem:[#allocation2 + $0xb0] sm:$0xff] %vm1794, %v1524
        %1821 = vst.msk [vmem:[#allocation2 + $0xb8] sm:$0xff] %vm1794, %v1525
        %1822 = vst.msk [vmem:[#allocation2 + $0xc0] sm:$0xff] %vm1794, %v1526
        %1823 = vst.msk [vmem:[#allocation2 + $0xc8] sm:$0xff] %vm1794, %v1527
        %1824 = vst.msk [vmem:[#allocation2 + $0xd0] sm:$0xff] %vm1794, %v1528
        %1825 = vst.msk [vmem:[#allocation2 + $0xd8] sm:$0xff] %vm1794, %v1529
        %1826 = vst.msk [vmem:[#allocation2 + $0xe0] sm:$0xff] %vm1794, %v1530
        %1827 = vst.msk [vmem:[#allocation2 + $0xe8] sm:$0xff] %vm1794, %v1531
        %1828 = vst.msk [vmem:[#allocation2 + $0xf0] sm:$0xff] %vm1794, %v1532
        %1829 = vst.msk [vmem:[#allocation2 + $0xf8] sm:$0xff] %vm1794, %v1533
        %1830 = vst.msk [vmem:[#allocation2 + $0x100] sm:$0xff] %vm1794, %v1534
        %1831 = vst.msk [vmem:[#allocation2 + $0x108] sm:$0xff] %vm1794, %v1535
        %1832 = vst.msk [vmem:[#allocation2 + $0x110] sm:$0xff] %vm1794, %v1536
        %v1833 = vld [vmem:[#allocation2 + $0x7] sm:$0xff]
        %v1834 = vld [vmem:[#allocation2 + $0xf] sm:$0xff]
        %v1835 = vld [vmem:[#allocation2 + $0x17] sm:$0xff]
        %v1836 = vld [vmem:[#allocation2 + $0x1f] sm:$0xff]
        %v1837 = vld [vmem:[#allocation2 + $0x27] sm:$0xff]
        %v1838 = vld [vmem:[#allocation2 + $0x2f] sm:$0xff]
        %v1839 = vld [vmem:[#allocation2 + $0x37] sm:$0xff]
        %v1840 = vld [vmem:[#allocation2 + $0x3f] sm:$0xff]
        %v1841 = vld [vmem:[#allocation2 + $0x47] sm:$0xff]
        %v1842 = vld [vmem:[#allocation2 + $0x4f] sm:$0xff]
        %v1843 = vld [vmem:[#allocation2 + $0x57] sm:$0xff]
        %v1844 = vld [vmem:[#allocation2 + $0x5f] sm:$0xff]
        %v1845 = vld [vmem:[#allocation2 + $0x67] sm:$0xff]
        %v1846 = vld [vmem:[#allocation2 + $0x6f] sm:$0xff]
        %v1847 = vld [vmem:[#allocation2 + $0x77] sm:$0xff]
        %v1848 = vld [vmem:[#allocation2 + $0x7f] sm:$0xff]
        %v1849 = vld [vmem:[#allocation2 + $0x87] sm:$0xff]
        %v1850 = vld [vmem:[#allocation2 + $0x8f] sm:$0xff]
        %v1851 = vld [vmem:[#allocation2 + $0x97] sm:$0xff]
        %v1852 = vld [vmem:[#allocation2 + $0x9f] sm:$0xff]
        %v1853 = vld [vmem:[#allocation2 + $0xa7] sm:$0xff]
        %v1854 = vld [vmem:[#allocation2 + $0xaf] sm:$0xff]
        %v1855 = vld [vmem:[#allocation2 + $0xb7] sm:$0xff]
        %v1856 = vld [vmem:[#allocation2 + $0xbf] sm:$0xff]
        %v1857 = vld [vmem:[#allocation2 + $0xc7] sm:$0xff]
        %v1858 = vld [vmem:[#allocation2 + $0xcf] sm:$0xff]
        %v1859 = vld [vmem:[#allocation2 + $0xd7] sm:$0xff]
        %v1860 = vld [vmem:[#allocation2 + $0xdf] sm:$0xff]
        %v1861 = vld [vmem:[#allocation2 + $0xe7] sm:$0xff]
        %v1862 = vld [vmem:[#allocation2 + $0xef] sm:$0xff]
        %v1863 = vld [vmem:[#allocation2 + $0xf7] sm:$0xff]
        %v1864 = vld [vmem:[#allocation2 + $0xff] sm:$0xff]
        %v1865 = vmul.f32 %v1833, %v1666
        %v1866 = vmul.f32 %v1834, %v1667
        %v1867 = vmul.f32 %v1835, %v1668
        %v1868 = vmul.f32 %v1836, %v1669
        %v1869 = vmul.f32 %v1837, %v1670
        %v1870 = vmul.f32 %v1838, %v1671
        %v1871 = vmul.f32 %v1839, %v1672
        %v1872 = vmul.f32 %v1840, %v1673
        %v1873 = vmul.f32 %v1841, %v1674
        %v1874 = vmul.f32 %v1842, %v1675
        %v1875 = vmul.f32 %v1843, %v1676
        %v1876 = vmul.f32 %v1844, %v1677
        %v1877 = vmul.f32 %v1845, %v1678
        %v1878 = vmul.f32 %v1846, %v1679
        %v1879 = vmul.f32 %v1847, %v1680
        %v1880 = vmul.f32 %v1848, %v1681
        %v1881 = vmul.f32 %v1849, %v1682
        %v1882 = vmul.f32 %v1850, %v1683
        %v1883 = vmul.f32 %v1851, %v1684
        %v1884 = vmul.f32 %v1852, %v1685
        %v1885 = vmul.f32 %v1853, %v1686
        %v1886 = vmul.f32 %v1854, %v1687
        %v1887 = vmul.f32 %v1855, %v1688
        %v1888 = vmul.f32 %v1856, %v1689
        %v1889 = vmul.f32 %v1857, %v1690
        %v1890 = vmul.f32 %v1858, %v1691
        %v1891 = vmul.f32 %v1859, %v1692
        %v1892 = vmul.f32 %v1860, %v1693
        %v1893 = vmul.f32 %v1861, %v1694
        %v1894 = vmul.f32 %v1862, %v1695
        %v1895 = vmul.f32 %v1863, %v1696
        %v1896 = vmul.f32 %v1864, %v1697
        %1897 = vst.msk [vmem:[#allocation3] sm:$0xff] %vm1794, %v1865
        %1898 = vst.msk [vmem:[#allocation3 + $0x8] sm:$0xff] %vm1794, %v1866
        %1899 = vst.msk [vmem:[#allocation3 + $0x10] sm:$0xff] %vm1794, %v1867
        %1900 = vst.msk [vmem:[#allocation3 + $0x18] sm:$0xff] %vm1794, %v1868
        %1901 = vst.msk [vmem:[#allocation3 + $0x20] sm:$0xff] %vm1794, %v1869
        %1902 = vst.msk [vmem:[#allocation3 + $0x28] sm:$0xff] %vm1794, %v1870
        %1903 = vst.msk [vmem:[#allocation3 + $0x30] sm:$0xff] %vm1794, %v1871
        %1904 = vst.msk [vmem:[#allocation3 + $0x38] sm:$0xff] %vm1794, %v1872
        %1905 = vst.msk [vmem:[#allocation3 + $0x40] sm:$0xff] %vm1794, %v1873
        %1906 = vst.msk [vmem:[#allocation3 + $0x48] sm:$0xff] %vm1794, %v1874
        %1907 = vst.msk [vmem:[#allocation3 + $0x50] sm:$0xff] %vm1794, %v1875
        %1908 = vst.msk [vmem:[#allocation3 + $0x58] sm:$0xff] %vm1794, %v1876
        %1909 = vst.msk [vmem:[#allocation3 + $0x60] sm:$0xff] %vm1794, %v1877
        %1910 = vst.msk [vmem:[#allocation3 + $0x68] sm:$0xff] %vm1794, %v1878
        %1911 = vst.msk [vmem:[#allocation3 + $0x70] sm:$0xff] %vm1794, %v1879
        %1912 = vst.msk [vmem:[#allocation3 + $0x78] sm:$0xff] %vm1794, %v1880
        %1913 = vst.msk [vmem:[#allocation3 + $0x80] sm:$0xff] %vm1794, %v1881
        %1914 = vst.msk [vmem:[#allocation3 + $0x88] sm:$0xff] %vm1794, %v1882
        %1915 = vst.msk [vmem:[#allocation3 + $0x90] sm:$0xff] %vm1794, %v1883
        %1916 = vst.msk [vmem:[#allocation3 + $0x98] sm:$0xff] %vm1794, %v1884
        %1917 = vst.msk [vmem:[#allocation3 + $0xa0] sm:$0xff] %vm1794, %v1885
        %1918 = vst.msk [vmem:[#allocation3 + $0xa8] sm:$0xff] %vm1794, %v1886
        %1919 = vst.msk [vmem:[#allocation3 + $0xb0] sm:$0xff] %vm1794, %v1887
        %1920 = vst.msk [vmem:[#allocation3 + $0xb8] sm:$0xff] %vm1794, %v1888
        %1921 = vst.msk [vmem:[#allocation3 + $0xc0] sm:$0xff] %vm1794, %v1889
        %1922 = vst.msk [vmem:[#allocation3 + $0xc8] sm:$0xff] %vm1794, %v1890
        %1923 = vst.msk [vmem:[#allocation3 + $0xd0] sm:$0xff] %vm1794, %v1891
        %1924 = vst.msk [vmem:[#allocation3 + $0xd8] sm:$0xff] %vm1794, %v1892
        %1925 = vst.msk [vmem:[#allocation3 + $0xe0] sm:$0xff] %vm1794, %v1893
        %1926 = vst.msk [vmem:[#allocation3 + $0xe8] sm:$0xff] %vm1794, %v1894
        %1927 = vst.msk [vmem:[#allocation3 + $0xf0] sm:$0xff] %vm1794, %v1895
        %1928 = vst.msk [vmem:[#allocation3 + $0xf8] sm:$0xff] %vm1794, %v1896
        %v1929 = vld [vmem:[#allocation2 + $0x8] sm:$0xff]
        %v1930 = vld [vmem:[#allocation2 + $0x10] sm:$0xff]
        %v1931 = vld [vmem:[#allocation2 + $0x18] sm:$0xff]
        %v1932 = vld [vmem:[#allocation2 + $0x20] sm:$0xff]
        %v1933 = vld [vmem:[#allocation2 + $0x28] sm:$0xff]
        %v1934 = vld [vmem:[#allocation2 + $0x30] sm:$0xff]
        %v1935 = vld [vmem:[#allocation2 + $0x38] sm:$0xff]
        %v1936 = vld [vmem:[#allocation2 + $0x40] sm:$0xff]
        %v1937 = vld [vmem:[#allocation2 + $0x48] sm:$0xff]
        %v1938 = vld [vmem:[#allocation2 + $0x50] sm:$0xff]
        %v1939 = vld [vmem:[#allocation2 + $0x58] sm:$0xff]
        %v1940 = vld [vmem:[#allocation2 + $0x60] sm:$0xff]
        %v1941 = vld [vmem:[#allocation2 + $0x68] sm:$0xff]
        %v1942 = vld [vmem:[#allocation2 + $0x70] sm:$0xff]
        %v1943 = vld [vmem:[#allocation2 + $0x78] sm:$0xff]
        %v1944 = vld [vmem:[#allocation2 + $0x80] sm:$0xff]
        %v1945 = vld [vmem:[#allocation2 + $0x88] sm:$0xff]
        %v1946 = vld [vmem:[#allocation2 + $0x90] sm:$0xff]
        %v1947 = vld [vmem:[#allocation2 + $0x98] sm:$0xff]
        %v1948 = vld [vmem:[#allocation2 + $0xa0] sm:$0xff]
        %v1949 = vld [vmem:[#allocation2 + $0xa8] sm:$0xff]
        %v1950 = vld [vmem:[#allocation2 + $0xb0] sm:$0xff]
        %v1951 = vld [vmem:[#allocation2 + $0xb8] sm:$0xff]
        %v1952 = vld [vmem:[#allocation2 + $0xc0] sm:$0xff]
        %v1953 = vld [vmem:[#allocation2 + $0xc8] sm:$0xff]
        %v1954 = vld [vmem:[#allocation2 + $0xd0] sm:$0xff]
        %v1955 = vld [vmem:[#allocation2 + $0xd8] sm:$0xff]
        %v1956 = vld [vmem:[#allocation2 + $0xe0] sm:$0xff]
        %v1957 = vld [vmem:[#allocation2 + $0xe8] sm:$0xff]
        %v1958 = vld [vmem:[#allocation2 + $0xf0] sm:$0xff]
        %v1959 = vld [vmem:[#allocation2 + $0xf8] sm:$0xff]
        %v1960 = vld [vmem:[#allocation2 + $0x100] sm:$0xff]
        %1993 = vrot.lane.b32.xlu0 %v1929, 3
        %v1994 = vpop.permute.xlu0 %1993
        %1995 = vrot.lane.b32.xlu0 %v1930, 3
        %v1996 = vpop.permute.xlu0 %1995
        %1997 = vrot.lane.b32.xlu0 %v1931, 3
        %v1998 = vpop.permute.xlu0 %1997
        %1999 = vrot.lane.b32.xlu0 %v1932, 3
        %v2000 = vpop.permute.xlu0 %1999
        %2001 = vrot.lane.b32.xlu0 %v1933, 3
        %v2002 = vpop.permute.xlu0 %2001
        %2003 = vrot.lane.b32.xlu0 %v1934, 3
        %v2004 = vpop.permute.xlu0 %2003
        %2005 = vrot.lane.b32.xlu0 %v1935, 3
        %v2006 = vpop.permute.xlu0 %2005
        %2007 = vrot.lane.b32.xlu0 %v1936, 3
        %v2008 = vpop.permute.xlu0 %2007
        %2009 = vrot.lane.b32.xlu0 %v1937, 3
        %v2010 = vpop.permute.xlu0 %2009
        %2011 = vrot.lane.b32.xlu0 %v1938, 3
        %v2012 = vpop.permute.xlu0 %2011
        %2013 = vrot.lane.b32.xlu0 %v1939, 3
        %v2014 = vpop.permute.xlu0 %2013
        %2015 = vrot.lane.b32.xlu0 %v1940, 3
        %v2016 = vpop.permute.xlu0 %2015
        %2017 = vrot.lane.b32.xlu0 %v1941, 3
        %v2018 = vpop.permute.xlu0 %2017
        %2019 = vrot.lane.b32.xlu0 %v1942, 3
        %v2020 = vpop.permute.xlu0 %2019
        %2021 = vrot.lane.b32.xlu0 %v1943, 3
        %v2022 = vpop.permute.xlu0 %2021
        %2023 = vrot.lane.b32.xlu0 %v1944, 3
        %v2024 = vpop.permute.xlu0 %2023
        %2025 = vrot.lane.b32.xlu0 %v1945, 3
        %v2026 = vpop.permute.xlu0 %2025
        %2027 = vrot.lane.b32.xlu0 %v1946, 3
        %v2028 = vpop.permute.xlu0 %2027
        %2029 = vrot.lane.b32.xlu0 %v1947, 3
        %v2030 = vpop.permute.xlu0 %2029
        %2031 = vrot.lane.b32.xlu0 %v1948, 3
        %v2032 = vpop.permute.xlu0 %2031
        %2033 = vrot.lane.b32.xlu0 %v1949, 3
        %v2034 = vpop.permute.xlu0 %2033
        %2035 = vrot.lane.b32.xlu0 %v1950, 3
        %v2036 = vpop.permute.xlu0 %2035
        %2037 = vrot.lane.b32.xlu0 %v1951, 3
        %v2038 = vpop.permute.xlu0 %2037
        %2039 = vrot.lane.b32.xlu0 %v1952, 3
        %v2040 = vpop.permute.xlu0 %2039
        %2041 = vrot.lane.b32.xlu0 %v1953, 3
        %v2042 = vpop.permute.xlu0 %2041
        %2043 = vrot.lane.b32.xlu0 %v1954, 3
        %v2044 = vpop.permute.xlu0 %2043
        %2045 = vrot.lane.b32.xlu0 %v1955, 3
        %v2046 = vpop.permute.xlu0 %2045
        %2047 = vrot.lane.b32.xlu0 %v1956, 3
        %v2048 = vpop.permute.xlu0 %2047
        %2049 = vrot.lane.b32.xlu0 %v1957, 3
        %v2050 = vpop.permute.xlu0 %2049
        %2051 = vrot.lane.b32.xlu0 %v1958, 3
        %v2052 = vpop.permute.xlu0 %2051
        %2053 = vrot.lane.b32.xlu0 %v1959, 3
        %v2054 = vpop.permute.xlu0 %2053
        %2055 = vrot.lane.b32.xlu0 %v1960, 3
        %v2056 = vpop.permute.xlu0 %2055
        %vm2089 = vcmask 48152
        %2090 = vst.msk [vmem:[#allocation3] sm:$0xff] %vm2089, %v1994
        %2091 = vst.msk [vmem:[#allocation3 + $0x8] sm:$0xff] %vm2089, %v1996
        %2092 = vst.msk [vmem:[#allocation3 + $0x10] sm:$0xff] %vm2089, %v1998
        %2093 = vst.msk [vmem:[#allocation3 + $0x18] sm:$0xff] %vm2089, %v2000
        %2094 = vst.msk [vmem:[#allocation3 + $0x20] sm:$0xff] %vm2089, %v2002
        %2095 = vst.msk [vmem:[#allocation3 + $0x28] sm:$0xff] %vm2089, %v2004
        %2096 = vst.msk [vmem:[#allocation3 + $0x30] sm:$0xff] %vm2089, %v2006
        %2097 = vst.msk [vmem:[#allocation3 + $0x38] sm:$0xff] %vm2089, %v2008
        %2098 = vst.msk [vmem:[#allocation3 + $0x40] sm:$0xff] %vm2089, %v2010
        %2099 = vst.msk [vmem:[#allocation3 + $0x48] sm:$0xff] %vm2089, %v2012
        %2100 = vst.msk [vmem:[#allocation3 + $0x50] sm:$0xff] %vm2089, %v2014
        %2101 = vst.msk [vmem:[#allocation3 + $0x58] sm:$0xff] %vm2089, %v2016
        %2102 = vst.msk [vmem:[#allocation3 + $0x60] sm:$0xff] %vm2089, %v2018
        %2103 = vst.msk [vmem:[#allocation3 + $0x68] sm:$0xff] %vm2089, %v2020
        %2104 = vst.msk [vmem:[#allocation3 + $0x70] sm:$0xff] %vm2089, %v2022
        %2105 = vst.msk [vmem:[#allocation3 + $0x78] sm:$0xff] %vm2089, %v2024
        %2106 = vst.msk [vmem:[#allocation3 + $0x80] sm:$0xff] %vm2089, %v2026
        %2107 = vst.msk [vmem:[#allocation3 + $0x88] sm:$0xff] %vm2089, %v2028
        %2108 = vst.msk [vmem:[#allocation3 + $0x90] sm:$0xff] %vm2089, %v2030
        %2109 = vst.msk [vmem:[#allocation3 + $0x98] sm:$0xff] %vm2089, %v2032
        %2110 = vst.msk [vmem:[#allocation3 + $0xa0] sm:$0xff] %vm2089, %v2034
        %2111 = vst.msk [vmem:[#allocation3 + $0xa8] sm:$0xff] %vm2089, %v2036
        %2112 = vst.msk [vmem:[#allocation3 + $0xb0] sm:$0xff] %vm2089, %v2038
        %2113 = vst.msk [vmem:[#allocation3 + $0xb8] sm:$0xff] %vm2089, %v2040
        %2114 = vst.msk [vmem:[#allocation3 + $0xc0] sm:$0xff] %vm2089, %v2042
        %2115 = vst.msk [vmem:[#allocation3 + $0xc8] sm:$0xff] %vm2089, %v2044
        %2116 = vst.msk [vmem:[#allocation3 + $0xd0] sm:$0xff] %vm2089, %v2046
        %2117 = vst.msk [vmem:[#allocation3 + $0xd8] sm:$0xff] %vm2089, %v2048
        %2118 = vst.msk [vmem:[#allocation3 + $0xe0] sm:$0xff] %vm2089, %v2050
        %2119 = vst.msk [vmem:[#allocation3 + $0xe8] sm:$0xff] %vm2089, %v2052
        %2120 = vst.msk [vmem:[#allocation3 + $0xf0] sm:$0xff] %vm2089, %v2054
        %2121 = vst.msk [vmem:[#allocation3 + $0xf8] sm:$0xff] %vm2089, %v2056
        %v2122 = vld [vmem:[#allocation2 + $0x9] sm:$0xff]
        %v2123 = vld [vmem:[#allocation2 + $0x11] sm:$0xff]
        %v2124 = vld [vmem:[#allocation2 + $0x19] sm:$0xff]
        %v2125 = vld [vmem:[#allocation2 + $0x21] sm:$0xff]
        %v2126 = vld [vmem:[#allocation2 + $0x29] sm:$0xff]
        %v2127 = vld [vmem:[#allocation2 + $0x31] sm:$0xff]
        %v2128 = vld [vmem:[#allocation2 + $0x39] sm:$0xff]
        %v2129 = vld [vmem:[#allocation2 + $0x41] sm:$0xff]
        %v2130 = vld [vmem:[#allocation2 + $0x49] sm:$0xff]
        %v2131 = vld [vmem:[#allocation2 + $0x51] sm:$0xff]
        %v2132 = vld [vmem:[#allocation2 + $0x59] sm:$0xff]
        %v2133 = vld [vmem:[#allocation2 + $0x61] sm:$0xff]
        %v2134 = vld [vmem:[#allocation2 + $0x69] sm:$0xff]
        %v2135 = vld [vmem:[#allocation2 + $0x71] sm:$0xff]
        %v2136 = vld [vmem:[#allocation2 + $0x79] sm:$0xff]
        %v2137 = vld [vmem:[#allocation2 + $0x81] sm:$0xff]
        %v2138 = vld [vmem:[#allocation2 + $0x89] sm:$0xff]
        %v2139 = vld [vmem:[#allocation2 + $0x91] sm:$0xff]
        %v2140 = vld [vmem:[#allocation2 + $0x99] sm:$0xff]
        %v2141 = vld [vmem:[#allocation2 + $0xa1] sm:$0xff]
        %v2142 = vld [vmem:[#allocation2 + $0xa9] sm:$0xff]
        %v2143 = vld [vmem:[#allocation2 + $0xb1] sm:$0xff]
        %v2144 = vld [vmem:[#allocation2 + $0xb9] sm:$0xff]
        %v2145 = vld [vmem:[#allocation2 + $0xc1] sm:$0xff]
        %v2146 = vld [vmem:[#allocation2 + $0xc9] sm:$0xff]
        %v2147 = vld [vmem:[#allocation2 + $0xd1] sm:$0xff]
        %v2148 = vld [vmem:[#allocation2 + $0xd9] sm:$0xff]
        %v2149 = vld [vmem:[#allocation2 + $0xe1] sm:$0xff]
        %v2150 = vld [vmem:[#allocation2 + $0xe9] sm:$0xff]
        %v2151 = vld [vmem:[#allocation2 + $0xf1] sm:$0xff]
        %v2152 = vld [vmem:[#allocation2 + $0xf9] sm:$0xff]
        %v2153 = vld [vmem:[#allocation2 + $0x101] sm:$0xff]
        %v2154 = vmul.f32 %v2122, %v1762
        %v2155 = vmul.f32 %v2123, %v1763
        %v2156 = vmul.f32 %v2124, %v1764
        %v2157 = vmul.f32 %v2125, %v1765
        %v2158 = vmul.f32 %v2126, %v1766
        %v2159 = vmul.f32 %v2127, %v1767
        %v2160 = vmul.f32 %v2128, %v1768
        %v2161 = vmul.f32 %v2129, %v1769
        %v2162 = vmul.f32 %v2130, %v1770
        %v2163 = vmul.f32 %v2131, %v1771
        %v2164 = vmul.f32 %v2132, %v1772
        %v2165 = vmul.f32 %v2133, %v1773
        %v2166 = vmul.f32 %v2134, %v1774
        %v2167 = vmul.f32 %v2135, %v1775
        %v2168 = vmul.f32 %v2136, %v1776
        %v2169 = vmul.f32 %v2137, %v1777
        %v2170 = vmul.f32 %v2138, %v1778
        %v2171 = vmul.f32 %v2139, %v1779
        %v2172 = vmul.f32 %v2140, %v1780
        %v2173 = vmul.f32 %v2141, %v1781
        %v2174 = vmul.f32 %v2142, %v1782
        %v2175 = vmul.f32 %v2143, %v1783
        %v2176 = vmul.f32 %v2144, %v1784
        %v2177 = vmul.f32 %v2145, %v1785
        %v2178 = vmul.f32 %v2146, %v1786
        %v2179 = vmul.f32 %v2147, %v1787
        %v2180 = vmul.f32 %v2148, %v1788
        %v2181 = vmul.f32 %v2149, %v1789
        %v2182 = vmul.f32 %v2150, %v1790
        %v2183 = vmul.f32 %v2151, %v1791
        %v2184 = vmul.f32 %v2152, %v1792
        %v2185 = vmul.f32 %v2153, %v1793
        %2218 = vrot.lane.b32.xlu0 %v2154, 6
        %v2219 = vpop.permute.xlu0 %2218
        %2220 = vrot.lane.b32.xlu0 %v2155, 6
        %v2221 = vpop.permute.xlu0 %2220
        %2222 = vrot.lane.b32.xlu0 %v2156, 6
        %v2223 = vpop.permute.xlu0 %2222
        %2224 = vrot.lane.b32.xlu0 %v2157, 6
        %v2225 = vpop.permute.xlu0 %2224
        %2226 = vrot.lane.b32.xlu0 %v2158, 6
        %v2227 = vpop.permute.xlu0 %2226
        %2228 = vrot.lane.b32.xlu0 %v2159, 6
        %v2229 = vpop.permute.xlu0 %2228
        %2230 = vrot.lane.b32.xlu0 %v2160, 6
        %v2231 = vpop.permute.xlu0 %2230
        %2232 = vrot.lane.b32.xlu0 %v2161, 6
        %v2233 = vpop.permute.xlu0 %2232
        %2234 = vrot.lane.b32.xlu0 %v2162, 6
        %v2235 = vpop.permute.xlu0 %2234
        %2236 = vrot.lane.b32.xlu0 %v2163, 6
        %v2237 = vpop.permute.xlu0 %2236
        %2238 = vrot.lane.b32.xlu0 %v2164, 6
        %v2239 = vpop.permute.xlu0 %2238
        %2240 = vrot.lane.b32.xlu0 %v2165, 6
        %v2241 = vpop.permute.xlu0 %2240
        %2242 = vrot.lane.b32.xlu0 %v2166, 6
        %v2243 = vpop.permute.xlu0 %2242
        %2244 = vrot.lane.b32.xlu0 %v2167, 6
        %v2245 = vpop.permute.xlu0 %2244
        %2246 = vrot.lane.b32.xlu0 %v2168, 6
        %v2247 = vpop.permute.xlu0 %2246
        %2248 = vrot.lane.b32.xlu0 %v2169, 6
        %v2249 = vpop.permute.xlu0 %2248
        %2250 = vrot.lane.b32.xlu0 %v2170, 6
        %v2251 = vpop.permute.xlu0 %2250
        %2252 = vrot.lane.b32.xlu0 %v2171, 6
        %v2253 = vpop.permute.xlu0 %2252
        %2254 = vrot.lane.b32.xlu0 %v2172, 6
        %v2255 = vpop.permute.xlu0 %2254
        %2256 = vrot.lane.b32.xlu0 %v2173, 6
        %v2257 = vpop.permute.xlu0 %2256
        %2258 = vrot.lane.b32.xlu0 %v2174, 6
        %v2259 = vpop.permute.xlu0 %2258
        %2260 = vrot.lane.b32.xlu0 %v2175, 6
        %v2261 = vpop.permute.xlu0 %2260
        %2262 = vrot.lane.b32.xlu0 %v2176, 6
        %v2263 = vpop.permute.xlu0 %2262
        %2264 = vrot.lane.b32.xlu0 %v2177, 6
        %v2265 = vpop.permute.xlu0 %2264
        %2266 = vrot.lane.b32.xlu0 %v2178, 6
        %v2267 = vpop.permute.xlu0 %2266
        %2268 = vrot.lane.b32.xlu0 %v2179, 6
        %v2269 = vpop.permute.xlu0 %2268
        %2270 = vrot.lane.b32.xlu0 %v2180, 6
        %v2271 = vpop.permute.xlu0 %2270
        %2272 = vrot.lane.b32.xlu0 %v2181, 6
        %v2273 = vpop.permute.xlu0 %2272
        %2274 = vrot.lane.b32.xlu0 %v2182, 6
        %v2275 = vpop.permute.xlu0 %2274
        %2276 = vrot.lane.b32.xlu0 %v2183, 6
        %v2277 = vpop.permute.xlu0 %2276
        %2278 = vrot.lane.b32.xlu0 %v2184, 6
        %v2279 = vpop.permute.xlu0 %2278
        %2280 = vrot.lane.b32.xlu0 %v2185, 6
        %v2281 = vpop.permute.xlu0 %2280
        %vm2314 = vcmask 72752
        %2315 = vst.msk [vmem:[#allocation3] sm:$0xff] %vm2314, %v2219
        %2316 = vst.msk [vmem:[#allocation3 + $0x8] sm:$0xff] %vm2314, %v2221
        %2317 = vst.msk [vmem:[#allocation3 + $0x10] sm:$0xff] %vm2314, %v2223
        %2318 = vst.msk [vmem:[#allocation3 + $0x18] sm:$0xff] %vm2314, %v2225
        %2319 = vst.msk [vmem:[#allocation3 + $0x20] sm:$0xff] %vm2314, %v2227
        %2320 = vst.msk [vmem:[#allocation3 + $0x28] sm:$0xff] %vm2314, %v2229
        %2321 = vst.msk [vmem:[#allocation3 + $0x30] sm:$0xff] %vm2314, %v2231
        %2322 = vst.msk [vmem:[#allocation3 + $0x38] sm:$0xff] %vm2314, %v2233
        %2323 = vst.msk [vmem:[#allocation3 + $0x40] sm:$0xff] %vm2314, %v2235
        %2324 = vst.msk [vmem:[#allocation3 + $0x48] sm:$0xff] %vm2314, %v2237
        %2325 = vst.msk [vmem:[#allocation3 + $0x50] sm:$0xff] %vm2314, %v2239
        %2326 = vst.msk [vmem:[#allocation3 + $0x58] sm:$0xff] %vm2314, %v2241
        %2327 = vst.msk [vmem:[#allocation3 + $0x60] sm:$0xff] %vm2314, %v2243
        %2328 = vst.msk [vmem:[#allocation3 + $0x68] sm:$0xff] %vm2314, %v2245
        %2329 = vst.msk [vmem:[#allocation3 + $0x70] sm:$0xff] %vm2314, %v2247
        %2330 = vst.msk [vmem:[#allocation3 + $0x78] sm:$0xff] %vm2314, %v2249
        %2331 = vst.msk [vmem:[#allocation3 + $0x80] sm:$0xff] %vm2314, %v2251
        %2332 = vst.msk [vmem:[#allocation3 + $0x88] sm:$0xff] %vm2314, %v2253
        %2333 = vst.msk [vmem:[#allocation3 + $0x90] sm:$0xff] %vm2314, %v2255
        %2334 = vst.msk [vmem:[#allocation3 + $0x98] sm:$0xff] %vm2314, %v2257
        %2335 = vst.msk [vmem:[#allocation3 + $0xa0] sm:$0xff] %vm2314, %v2259
        %2336 = vst.msk [vmem:[#allocation3 + $0xa8] sm:$0xff] %vm2314, %v2261
        %2337 = vst.msk [vmem:[#allocation3 + $0xb0] sm:$0xff] %vm2314, %v2263
        %2338 = vst.msk [vmem:[#allocation3 + $0xb8] sm:$0xff] %vm2314, %v2265
        %2339 = vst.msk [vmem:[#allocation3 + $0xc0] sm:$0xff] %vm2314, %v2267
        %2340 = vst.msk [vmem:[#allocation3 + $0xc8] sm:$0xff] %vm2314, %v2269
        %2341 = vst.msk [vmem:[#allocation3 + $0xd0] sm:$0xff] %vm2314, %v2271
        %2342 = vst.msk [vmem:[#allocation3 + $0xd8] sm:$0xff] %vm2314, %v2273
        %2343 = vst.msk [vmem:[#allocation3 + $0xe0] sm:$0xff] %vm2314, %v2275
        %2344 = vst.msk [vmem:[#allocation3 + $0xe8] sm:$0xff] %vm2314, %v2277
        %2345 = vst.msk [vmem:[#allocation3 + $0xf0] sm:$0xff] %vm2314, %v2279
        %2346 = vst.msk [vmem:[#allocation3 + $0xf8] sm:$0xff] %vm2314, %v2281
        %v2347 = vld [vmem:[#allocation2 + $0x17] sm:$0xff]
        %v2348 = vld [vmem:[#allocation2 + $0x1f] sm:$0xff]
        %v2349 = vld [vmem:[#allocation2 + $0x27] sm:$0xff]
        %v2350 = vld [vmem:[#allocation2 + $0x2f] sm:$0xff]
        %v2351 = vld [vmem:[#allocation2 + $0x37] sm:$0xff]
        %v2352 = vld [vmem:[#allocation2 + $0x3f] sm:$0xff]
        %v2353 = vld [vmem:[#allocation2 + $0x47] sm:$0xff]
        %v2354 = vld [vmem:[#allocation2 + $0x4f] sm:$0xff]
        %v2355 = vld [vmem:[#allocation2 + $0x57] sm:$0xff]
        %v2356 = vld [vmem:[#allocation2 + $0x5f] sm:$0xff]
        %v2357 = vld [vmem:[#allocation2 + $0x67] sm:$0xff]
        %v2358 = vld [vmem:[#allocation2 + $0x6f] sm:$0xff]
        %v2359 = vld [vmem:[#allocation2 + $0x77] sm:$0xff]
        %v2360 = vld [vmem:[#allocation2 + $0x7f] sm:$0xff]
        %v2361 = vld [vmem:[#allocation2 + $0x87] sm:$0xff]
        %v2362 = vld [vmem:[#allocation2 + $0x8f] sm:$0xff]
        %v2363 = vld [vmem:[#allocation2 + $0x97] sm:$0xff]
        %v2364 = vld [vmem:[#allocation2 + $0x9f] sm:$0xff]
        %v2365 = vld [vmem:[#allocation2 + $0xa7] sm:$0xff]
        %v2366 = vld [vmem:[#allocation2 + $0xaf] sm:$0xff]
        %v2367 = vld [vmem:[#allocation2 + $0xb7] sm:$0xff]
        %v2368 = vld [vmem:[#allocation2 + $0xbf] sm:$0xff]
        %v2369 = vld [vmem:[#allocation2 + $0xc7] sm:$0xff]
        %v2370 = vld [vmem:[#allocation2 + $0xcf] sm:$0xff]
        %v2371 = vld [vmem:[#allocation2 + $0xd7] sm:$0xff]
        %v2372 = vld [vmem:[#allocation2 + $0xdf] sm:$0xff]
        %v2373 = vld [vmem:[#allocation2 + $0xe7] sm:$0xff]
        %v2374 = vld [vmem:[#allocation2 + $0xef] sm:$0xff]
        %v2375 = vld [vmem:[#allocation2 + $0xf7] sm:$0xff]
        %v2376 = vld [vmem:[#allocation2 + $0xff] sm:$0xff]
        %v2377 = vld [vmem:[#allocation2 + $0x107] sm:$0xff]
        %v2378 = vld [vmem:[#allocation2 + $0x10f] sm:$0xff]
        %v2379 = vmul.f32 %v2347, %v1666
        %v2380 = vmul.f32 %v2348, %v1667
        %v2381 = vmul.f32 %v2349, %v1668
        %v2382 = vmul.f32 %v2350, %v1669
        %v2383 = vmul.f32 %v2351, %v1670
        %v2384 = vmul.f32 %v2352, %v1671
        %v2385 = vmul.f32 %v2353, %v1672
        %v2386 = vmul.f32 %v2354, %v1673
        %v2387 = vmul.f32 %v2355, %v1674
        %v2388 = vmul.f32 %v2356, %v1675
        %v2389 = vmul.f32 %v2357, %v1676
        %v2390 = vmul.f32 %v2358, %v1677
        %v2391 = vmul.f32 %v2359, %v1678
        %v2392 = vmul.f32 %v2360, %v1679
        %v2393 = vmul.f32 %v2361, %v1680
        %v2394 = vmul.f32 %v2362, %v1681
        %v2395 = vmul.f32 %v2363, %v1682
        %v2396 = vmul.f32 %v2364, %v1683
        %v2397 = vmul.f32 %v2365, %v1684
        %v2398 = vmul.f32 %v2366, %v1685
        %v2399 = vmul.f32 %v2367, %v1686
        %v2400 = vmul.f32 %v2368, %v1687
        %v2401 = vmul.f32 %v2369, %v1688
        %v2402 = vmul.f32 %v2370, %v1689
        %v2403 = vmul.f32 %v2371, %v1690
        %v2404 = vmul.f32 %v2372, %v1691
        %v2405 = vmul.f32 %v2373, %v1692
        %v2406 = vmul.f32 %v2374, %v1693
        %v2407 = vmul.f32 %v2375, %v1694
        %v2408 = vmul.f32 %v2376, %v1695
        %v2409 = vmul.f32 %v2377, %v1696
        %v2410 = vmul.f32 %v2378, %v1697
        %2443 = vrot.lane.b32.xlu0 %v2379, 9
        %v2444 = vpop.permute.xlu0 %2443
        %2445 = vrot.lane.b32.xlu0 %v2380, 9
        %v2446 = vpop.permute.xlu0 %2445
        %2447 = vrot.lane.b32.xlu0 %v2381, 9
        %v2448 = vpop.permute.xlu0 %2447
        %2449 = vrot.lane.b32.xlu0 %v2382, 9
        %v2450 = vpop.permute.xlu0 %2449
        %2451 = vrot.lane.b32.xlu0 %v2383, 9
        %v2452 = vpop.permute.xlu0 %2451
        %2453 = vrot.lane.b32.xlu0 %v2384, 9
        %v2454 = vpop.permute.xlu0 %2453
        %2455 = vrot.lane.b32.xlu0 %v2385, 9
        %v2456 = vpop.permute.xlu0 %2455
        %2457 = vrot.lane.b32.xlu0 %v2386, 9
        %v2458 = vpop.permute.xlu0 %2457
        %2459 = vrot.lane.b32.xlu0 %v2387, 9
        %v2460 = vpop.permute.xlu0 %2459
        %2461 = vrot.lane.b32.xlu0 %v2388, 9
        %v2462 = vpop.permute.xlu0 %2461
        %2463 = vrot.lane.b32.xlu0 %v2389, 9
        %v2464 = vpop.permute.xlu0 %2463
        %2465 = vrot.lane.b32.xlu0 %v2390, 9
        %v2466 = vpop.permute.xlu0 %2465
        %2467 = vrot.lane.b32.xlu0 %v2391, 9
        %v2468 = vpop.permute.xlu0 %2467
        %2469 = vrot.lane.b32.xlu0 %v2392, 9
        %v2470 = vpop.permute.xlu0 %2469
        %2471 = vrot.lane.b32.xlu0 %v2393, 9
        %v2472 = vpop.permute.xlu0 %2471
        %2473 = vrot.lane.b32.xlu0 %v2394, 9
        %v2474 = vpop.permute.xlu0 %2473
        %2475 = vrot.lane.b32.xlu0 %v2395, 9
        %v2476 = vpop.permute.xlu0 %2475
        %2477 = vrot.lane.b32.xlu0 %v2396, 9
        %v2478 = vpop.permute.xlu0 %2477
        %2479 = vrot.lane.b32.xlu0 %v2397, 9
        %v2480 = vpop.permute.xlu0 %2479
        %2481 = vrot.lane.b32.xlu0 %v2398, 9
        %v2482 = vpop.permute.xlu0 %2481
        %2483 = vrot.lane.b32.xlu0 %v2399, 9
        %v2484 = vpop.permute.xlu0 %2483
        %2485 = vrot.lane.b32.xlu0 %v2400, 9
        %v2486 = vpop.permute.xlu0 %2485
        %2487 = vrot.lane.b32.xlu0 %v2401, 9
        %v2488 = vpop.permute.xlu0 %2487
        %2489 = vrot.lane.b32.xlu0 %v2402, 9
        %v2490 = vpop.permute.xlu0 %2489
        %2491 = vrot.lane.b32.xlu0 %v2403, 9
        %v2492 = vpop.permute.xlu0 %2491
        %2493 = vrot.lane.b32.xlu0 %v2404, 9
        %v2494 = vpop.permute.xlu0 %2493
        %2495 = vrot.lane.b32.xlu0 %v2405, 9
        %v2496 = vpop.permute.xlu0 %2495
        %2497 = vrot.lane.b32.xlu0 %v2406, 9
        %v2498 = vpop.permute.xlu0 %2497
        %2499 = vrot.lane.b32.xlu0 %v2407, 9
        %v2500 = vpop.permute.xlu0 %2499
        %2501 = vrot.lane.b32.xlu0 %v2408, 9
        %v2502 = vpop.permute.xlu0 %2501
        %2503 = vrot.lane.b32.xlu0 %v2409, 9
        %v2504 = vpop.permute.xlu0 %2503
        %2505 = vrot.lane.b32.xlu0 %v2410, 9
        %v2506 = vpop.permute.xlu0 %2505
        %vm2539 = vcmask 97352
        %2540 = vst.msk [vmem:[#allocation3] sm:$0xff] %vm2539, %v2444
        %2541 = vst.msk [vmem:[#allocation3 + $0x8] sm:$0xff] %vm2539, %v2446
        %2542 = vst.msk [vmem:[#allocation3 + $0x10] sm:$0xff] %vm2539, %v2448
        %2543 = vst.msk [vmem:[#allocation3 + $0x18] sm:$0xff] %vm2539, %v2450
        %2544 = vst.msk [vmem:[#allocation3 + $0x20] sm:$0xff] %vm2539, %v2452
        %2545 = vst.msk [vmem:[#allocation3 + $0x28] sm:$0xff] %vm2539, %v2454
        %2546 = vst.msk [vmem:[#allocation3 + $0x30] sm:$0xff] %vm2539, %v2456
        %2547 = vst.msk [vmem:[#allocation3 + $0x38] sm:$0xff] %vm2539, %v2458
        %2548 = vst.msk [vmem:[#allocation3 + $0x40] sm:$0xff] %vm2539, %v2460
        %2549 = vst.msk [vmem:[#allocation3 + $0x48] sm:$0xff] %vm2539, %v2462
        %2550 = vst.msk [vmem:[#allocation3 + $0x50] sm:$0xff] %vm2539, %v2464
        %2551 = vst.msk [vmem:[#allocation3 + $0x58] sm:$0xff] %vm2539, %v2466
        %2552 = vst.msk [vmem:[#allocation3 + $0x60] sm:$0xff] %vm2539, %v2468
        %2553 = vst.msk [vmem:[#allocation3 + $0x68] sm:$0xff] %vm2539, %v2470
        %2554 = vst.msk [vmem:[#allocation3 + $0x70] sm:$0xff] %vm2539, %v2472
        %2555 = vst.msk [vmem:[#allocation3 + $0x78] sm:$0xff] %vm2539, %v2474
        %2556 = vst.msk [vmem:[#allocation3 + $0x80] sm:$0xff] %vm2539, %v2476
        %2557 = vst.msk [vmem:[#allocation3 + $0x88] sm:$0xff] %vm2539, %v2478
        %2558 = vst.msk [vmem:[#allocation3 + $0x90] sm:$0xff] %vm2539, %v2480
        %2559 = vst.msk [vmem:[#allocation3 + $0x98] sm:$0xff] %vm2539, %v2482
        %2560 = vst.msk [vmem:[#allocation3 + $0xa0] sm:$0xff] %vm2539, %v2484
        %2561 = vst.msk [vmem:[#allocation3 + $0xa8] sm:$0xff] %vm2539, %v2486
        %2562 = vst.msk [vmem:[#allocation3 + $0xb0] sm:$0xff] %vm2539, %v2488
        %2563 = vst.msk [vmem:[#allocation3 + $0xb8] sm:$0xff] %vm2539, %v2490
        %2564 = vst.msk [vmem:[#allocation3 + $0xc0] sm:$0xff] %vm2539, %v2492
        %2565 = vst.msk [vmem:[#allocation3 + $0xc8] sm:$0xff] %vm2539, %v2494
        %2566 = vst.msk [vmem:[#allocation3 + $0xd0] sm:$0xff] %vm2539, %v2496
        %2567 = vst.msk [vmem:[#allocation3 + $0xd8] sm:$0xff] %vm2539, %v2498
        %2568 = vst.msk [vmem:[#allocation3 + $0xe0] sm:$0xff] %vm2539, %v2500
        %2569 = vst.msk [vmem:[#allocation3 + $0xe8] sm:$0xff] %vm2539, %v2502
        %2570 = vst.msk [vmem:[#allocation3 + $0xf0] sm:$0xff] %vm2539, %v2504
        %2571 = vst.msk [vmem:[#allocation3 + $0xf8] sm:$0xff] %vm2539, %v2506
        %v2572 = vld [vmem:[#allocation2 + $0x18] sm:$0xff]
        %v2573 = vld [vmem:[#allocation2 + $0x20] sm:$0xff]
        %v2574 = vld [vmem:[#allocation2 + $0x28] sm:$0xff]
        %v2575 = vld [vmem:[#allocation2 + $0x30] sm:$0xff]
        %v2576 = vld [vmem:[#allocation2 + $0x38] sm:$0xff]
        %v2577 = vld [vmem:[#allocation2 + $0x40] sm:$0xff]
        %v2578 = vld [vmem:[#allocation2 + $0x48] sm:$0xff]
        %v2579 = vld [vmem:[#allocation2 + $0x50] sm:$0xff]
        %v2580 = vld [vmem:[#allocation2 + $0x58] sm:$0xff]
        %v2581 = vld [vmem:[#allocation2 + $0x60] sm:$0xff]
        %v2582 = vld [vmem:[#allocation2 + $0x68] sm:$0xff]
        %v2583 = vld [vmem:[#allocation2 + $0x70] sm:$0xff]
        %v2584 = vld [vmem:[#allocation2 + $0x78] sm:$0xff]
        %v2585 = vld [vmem:[#allocation2 + $0x80] sm:$0xff]
        %v2586 = vld [vmem:[#allocation2 + $0x88] sm:$0xff]
        %v2587 = vld [vmem:[#allocation2 + $0x90] sm:$0xff]
        %v2588 = vld [vmem:[#allocation2 + $0x98] sm:$0xff]
        %v2589 = vld [vmem:[#allocation2 + $0xa0] sm:$0xff]
        %v2590 = vld [vmem:[#allocation2 + $0xa8] sm:$0xff]
        %v2591 = vld [vmem:[#allocation2 + $0xb0] sm:$0xff]
        %v2592 = vld [vmem:[#allocation2 + $0xb8] sm:$0xff]
        %v2593 = vld [vmem:[#allocation2 + $0xc0] sm:$0xff]
        %v2594 = vld [vmem:[#allocation2 + $0xc8] sm:$0xff]
        %v2595 = vld [vmem:[#allocation2 + $0xd0] sm:$0xff]
        %v2596 = vld [vmem:[#allocation2 + $0xd8] sm:$0xff]
        %v2597 = vld [vmem:[#allocation2 + $0xe0] sm:$0xff]
        %v2598 = vld [vmem:[#allocation2 + $0xe8] sm:$0xff]
        %v2599 = vld [vmem:[#allocation2 + $0xf0] sm:$0xff]
        %v2600 = vld [vmem:[#allocation2 + $0xf8] sm:$0xff]
        %v2601 = vld [vmem:[#allocation2 + $0x100] sm:$0xff]
        %v2602 = vld [vmem:[#allocation2 + $0x108] sm:$0xff]
        %v2603 = vld [vmem:[#allocation2 + $0x110] sm:$0xff]
        %2636 = vrot.lane.b32.xlu0 %v2572, 12
        %v2637 = vpop.permute.xlu0 %2636
        %2638 = vrot.lane.b32.xlu0 %v2573, 12
        %v2639 = vpop.permute.xlu0 %2638
        %2640 = vrot.lane.b32.xlu0 %v2574, 12
        %v2641 = vpop.permute.xlu0 %2640
        %2642 = vrot.lane.b32.xlu0 %v2575, 12
        %v2643 = vpop.permute.xlu0 %2642
        %2644 = vrot.lane.b32.xlu0 %v2576, 12
        %v2645 = vpop.permute.xlu0 %2644
        %2646 = vrot.lane.b32.xlu0 %v2577, 12
        %v2647 = vpop.permute.xlu0 %2646
        %2648 = vrot.lane.b32.xlu0 %v2578, 12
        %v2649 = vpop.permute.xlu0 %2648
        %2650 = vrot.lane.b32.xlu0 %v2579, 12
        %v2651 = vpop.permute.xlu0 %2650
        %2652 = vrot.lane.b32.xlu0 %v2580, 12
        %v2653 = vpop.permute.xlu0 %2652
        %2654 = vrot.lane.b32.xlu0 %v2581, 12
        %v2655 = vpop.permute.xlu0 %2654
        %2656 = vrot.lane.b32.xlu0 %v2582, 12
        %v2657 = vpop.permute.xlu0 %2656
        %2658 = vrot.lane.b32.xlu0 %v2583, 12
        %v2659 = vpop.permute.xlu0 %2658
        %2660 = vrot.lane.b32.xlu0 %v2584, 12
        %v2661 = vpop.permute.xlu0 %2660
        %2662 = vrot.lane.b32.xlu0 %v2585, 12
        %v2663 = vpop.permute.xlu0 %2662
        %2664 = vrot.lane.b32.xlu0 %v2586, 12
        %v2665 = vpop.permute.xlu0 %2664
        %2666 = vrot.lane.b32.xlu0 %v2587, 12
        %v2667 = vpop.permute.xlu0 %2666
        %2668 = vrot.lane.b32.xlu0 %v2588, 12
        %v2669 = vpop.permute.xlu0 %2668
        %2670 = vrot.lane.b32.xlu0 %v2589, 12
        %v2671 = vpop.permute.xlu0 %2670
        %2672 = vrot.lane.b32.xlu0 %v2590, 12
        %v2673 = vpop.permute.xlu0 %2672
        %2674 = vrot.lane.b32.xlu0 %v2591, 12
        %v2675 = vpop.permute.xlu0 %2674
        %2676 = vrot.lane.b32.xlu0 %v2592, 12
        %v2677 = vpop.permute.xlu0 %2676
        %2678 = vrot.lane.b32.xlu0 %v2593, 12
        %v2679 = vpop.permute.xlu0 %2678
        %2680 = vrot.lane.b32.xlu0 %v2594, 12
        %v2681 = vpop.permute.xlu0 %2680
        %2682 = vrot.lane.b32.xlu0 %v2595, 12
        %v2683 = vpop.permute.xlu0 %2682
        %2684 = vrot.lane.b32.xlu0 %v2596, 12
        %v2685 = vpop.permute.xlu0 %2684
        %2686 = vrot.lane.b32.xlu0 %v2597, 12
        %v2687 = vpop.permute.xlu0 %2686
        %2688 = vrot.lane.b32.xlu0 %v2598, 12
        %v2689 = vpop.permute.xlu0 %2688
        %2690 = vrot.lane.b32.xlu0 %v2599, 12
        %v2691 = vpop.permute.xlu0 %2690
        %2692 = vrot.lane.b32.xlu0 %v2600, 12
        %v2693 = vpop.permute.xlu0 %2692
        %2694 = vrot.lane.b32.xlu0 %v2601, 12
        %v2695 = vpop.permute.xlu0 %2694
        %2696 = vrot.lane.b32.xlu0 %v2602, 12
        %v2697 = vpop.permute.xlu0 %2696
        %2698 = vrot.lane.b32.xlu0 %v2603, 12
        %v2699 = vpop.permute.xlu0 %2698
        %vm2732 = vcmask 121952
        %2733 = vst.msk [vmem:[#allocation3] sm:$0xff] %vm2732, %v2637
        %2734 = vst.msk [vmem:[#allocation3 + $0x8] sm:$0xff] %vm2732, %v2639
        %2735 = vst.msk [vmem:[#allocation3 + $0x10] sm:$0xff] %vm2732, %v2641
        %2736 = vst.msk [vmem:[#allocation3 + $0x18] sm:$0xff] %vm2732, %v2643
        %2737 = vst.msk [vmem:[#allocation3 + $0x20] sm:$0xff] %vm2732, %v2645
        %2738 = vst.msk [vmem:[#allocation3 + $0x28] sm:$0xff] %vm2732, %v2647
        %2739 = vst.msk [vmem:[#allocation3 + $0x30] sm:$0xff] %vm2732, %v2649
        %2740 = vst.msk [vmem:[#allocation3 + $0x38] sm:$0xff] %vm2732, %v2651
        %2741 = vst.msk [vmem:[#allocation3 + $0x40] sm:$0xff] %vm2732, %v2653
        %2742 = vst.msk [vmem:[#allocation3 + $0x48] sm:$0xff] %vm2732, %v2655
        %2743 = vst.msk [vmem:[#allocation3 + $0x50] sm:$0xff] %vm2732, %v2657
        %2744 = vst.msk [vmem:[#allocation3 + $0x58] sm:$0xff] %vm2732, %v2659
        %2745 = vst.msk [vmem:[#allocation3 + $0x60] sm:$0xff] %vm2732, %v2661
        %2746 = vst.msk [vmem:[#allocation3 + $0x68] sm:$0xff] %vm2732, %v2663
        %2747 = vst.msk [vmem:[#allocation3 + $0x70] sm:$0xff] %vm2732, %v2665
        %2748 = vst.msk [vmem:[#allocation3 + $0x78] sm:$0xff] %vm2732, %v2667
        %2749 = vst.msk [vmem:[#allocation3 + $0x80] sm:$0xff] %vm2732, %v2669
        %2750 = vst.msk [vmem:[#allocation3 + $0x88] sm:$0xff] %vm2732, %v2671
        %2751 = vst.msk [vmem:[#allocation3 + $0x90] sm:$0xff] %vm2732, %v2673
        %2752 = vst.msk [vmem:[#allocation3 + $0x98] sm:$0xff] %vm2732, %v2675
        %2753 = vst.msk [vmem:[#allocation3 + $0xa0] sm:$0xff] %vm2732, %v2677
        %2754 = vst.msk [vmem:[#allocation3 + $0xa8] sm:$0xff] %vm2732, %v2679
        %2755 = vst.msk [vmem:[#allocation3 + $0xb0] sm:$0xff] %vm2732, %v2681
        %2756 = vst.msk [vmem:[#allocation3 + $0xb8] sm:$0xff] %vm2732, %v2683
        %2757 = vst.msk [vmem:[#allocation3 + $0xc0] sm:$0xff] %vm2732, %v2685
        %2758 = vst.msk [vmem:[#allocation3 + $0xc8] sm:$0xff] %vm2732, %v2687
        %2759 = vst.msk [vmem:[#allocation3 + $0xd0] sm:$0xff] %vm2732, %v2689
        %2760 = vst.msk [vmem:[#allocation3 + $0xd8] sm:$0xff] %vm2732, %v2691
        %2761 = vst.msk [vmem:[#allocation3 + $0xe0] sm:$0xff] %vm2732, %v2693
        %2762 = vst.msk [vmem:[#allocation3 + $0xe8] sm:$0xff] %vm2732, %v2695
        %2763 = vst.msk [vmem:[#allocation3 + $0xf0] sm:$0xff] %vm2732, %v2697
        %2764 = vst.msk [vmem:[#allocation3 + $0xf8] sm:$0xff] %vm2732, %v2699
        %v2765 = vld [vmem:[#allocation2 + $0x19] sm:$0xff]
        %v2766 = vld [vmem:[#allocation2 + $0x21] sm:$0xff]
        %v2767 = vld [vmem:[#allocation2 + $0x29] sm:$0xff]
        %v2768 = vld [vmem:[#allocation2 + $0x31] sm:$0xff]
        %v2769 = vld [vmem:[#allocation2 + $0x39] sm:$0xff]
        %v2770 = vld [vmem:[#allocation2 + $0x41] sm:$0xff]
        %v2771 = vld [vmem:[#allocation2 + $0x49] sm:$0xff]
        %v2772 = vld [vmem:[#allocation2 + $0x51] sm:$0xff]
        %v2773 = vld [vmem:[#allocation2 + $0x59] sm:$0xff]
        %v2774 = vld [vmem:[#allocation2 + $0x61] sm:$0xff]
        %v2775 = vld [vmem:[#allocation2 + $0x69] sm:$0xff]
        %v2776 = vld [vmem:[#allocation2 + $0x71] sm:$0xff]
        %v2777 = vld [vmem:[#allocation2 + $0x79] sm:$0xff]
        %v2778 = vld [vmem:[#allocation2 + $0x81] sm:$0xff]
        %v2779 = vld [vmem:[#allocation2 + $0x89] sm:$0xff]
        %v2780 = vld [vmem:[#allocation2 + $0x91] sm:$0xff]
        %v2781 = vld [vmem:[#allocation2 + $0x99] sm:$0xff]
        %v2782 = vld [vmem:[#allocation2 + $0xa1] sm:$0xff]
        %v2783 = vld [vmem:[#allocation2 + $0xa9] sm:$0xff]
        %v2784 = vld [vmem:[#allocation2 + $0xb1] sm:$0xff]
        %v2785 = vld [vmem:[#allocation2 + $0xb9] sm:$0xff]
        %v2786 = vld [vmem:[#allocation2 + $0xc1] sm:$0xff]
        %v2787 = vld [vmem:[#allocation2 + $0xc9] sm:$0xff]
        %v2788 = vld [vmem:[#allocation2 + $0xd1] sm:$0xff]
        %v2789 = vld [vmem:[#allocation2 + $0xd9] sm:$0xff]
        %v2790 = vld [vmem:[#allocation2 + $0xe1] sm:$0xff]
        %v2791 = vld [vmem:[#allocation2 + $0xe9] sm:$0xff]
        %v2792 = vld [vmem:[#allocation2 + $0xf1] sm:$0xff]
        %v2793 = vld [vmem:[#allocation2 + $0xf9] sm:$0xff]
        %v2794 = vld [vmem:[#allocation2 + $0x101] sm:$0xff]
        %v2795 = vld [vmem:[#allocation2 + $0x109] sm:$0xff]
        %v2796 = vld [vmem:[#allocation2 + $0x111] sm:$0xff]
        %v2797 = vmul.f32 %v2765, %v1762
        %v2798 = vmul.f32 %v2766, %v1763
        %v2799 = vmul.f32 %v2767, %v1764
        %v2800 = vmul.f32 %v2768, %v1765
        %v2801 = vmul.f32 %v2769, %v1766
        %v2802 = vmul.f32 %v2770, %v1767
        %v2803 = vmul.f32 %v2771, %v1768
        %v2804 = vmul.f32 %v2772, %v1769
        %v2805 = vmul.f32 %v2773, %v1770
        %v2806 = vmul.f32 %v2774, %v1771
        %v2807 = vmul.f32 %v2775, %v1772
        %v2808 = vmul.f32 %v2776, %v1773
        %v2809 = vmul.f32 %v2777, %v1774
        %v2810 = vmul.f32 %v2778, %v1775
        %v2811 = vmul.f32 %v2779, %v1776
        %v2812 = vmul.f32 %v2780, %v1777
        %v2813 = vmul.f32 %v2781, %v1778
        %v2814 = vmul.f32 %v2782, %v1779
        %v2815 = vmul.f32 %v2783, %v1780
        %v2816 = vmul.f32 %v2784, %v1781
        %v2817 = vmul.f32 %v2785, %v1782
        %v2818 = vmul.f32 %v2786, %v1783
        %v2819 = vmul.f32 %v2787, %v1784
        %v2820 = vmul.f32 %v2788, %v1785
        %v2821 = vmul.f32 %v2789, %v1786
        %v2822 = vmul.f32 %v2790, %v1787
        %v2823 = vmul.f32 %v2791, %v1788
        %v2824 = vmul.f32 %v2792, %v1789
        %v2825 = vmul.f32 %v2793, %v1790
        %v2826 = vmul.f32 %v2794, %v1791
        %v2827 = vmul.f32 %v2795, %v1792
        %v2828 = vmul.f32 %v2796, %v1793
        %2861 = vrot.lane.b32.xlu0 %v2797, 15
        %v2862 = vpop.permute.xlu0 %2861
        %2863 = vrot.lane.b32.xlu0 %v2798, 15
        %v2864 = vpop.permute.xlu0 %2863
        %2865 = vrot.lane.b32.xlu0 %v2799, 15
        %v2866 = vpop.permute.xlu0 %2865
        %2867 = vrot.lane.b32.xlu0 %v2800, 15
        %v2868 = vpop.permute.xlu0 %2867
        %2869 = vrot.lane.b32.xlu0 %v2801, 15
        %v2870 = vpop.permute.xlu0 %2869
        %2871 = vrot.lane.b32.xlu0 %v2802, 15
        %v2872 = vpop.permute.xlu0 %2871
        %2873 = vrot.lane.b32.xlu0 %v2803, 15
        %v2874 = vpop.permute.xlu0 %2873
        %2875 = vrot.lane.b32.xlu0 %v2804, 15
        %v2876 = vpop.permute.xlu0 %2875
        %2877 = vrot.lane.b32.xlu0 %v2805, 15
        %v2878 = vpop.permute.xlu0 %2877
        %2879 = vrot.lane.b32.xlu0 %v2806, 15
        %v2880 = vpop.permute.xlu0 %2879
        %2881 = vrot.lane.b32.xlu0 %v2807, 15
        %v2882 = vpop.permute.xlu0 %2881
        %2883 = vrot.lane.b32.xlu0 %v2808, 15
        %v2884 = vpop.permute.xlu0 %2883
        %2885 = vrot.lane.b32.xlu0 %v2809, 15
        %v2886 = vpop.permute.xlu0 %2885
        %2887 = vrot.lane.b32.xlu0 %v2810, 15
        %v2888 = vpop.permute.xlu0 %2887
        %2889 = vrot.lane.b32.xlu0 %v2811, 15
        %v2890 = vpop.permute.xlu0 %2889
        %2891 = vrot.lane.b32.xlu0 %v2812, 15
        %v2892 = vpop.permute.xlu0 %2891
        %2893 = vrot.lane.b32.xlu0 %v2813, 15
        %v2894 = vpop.permute.xlu0 %2893
        %2895 = vrot.lane.b32.xlu0 %v2814, 15
        %v2896 = vpop.permute.xlu0 %2895
        %2897 = vrot.lane.b32.xlu0 %v2815, 15
        %v2898 = vpop.permute.xlu0 %2897
        %2899 = vrot.lane.b32.xlu0 %v2816, 15
        %v2900 = vpop.permute.xlu0 %2899
        %2901 = vrot.lane.b32.xlu0 %v2817, 15
        %v2902 = vpop.permute.xlu0 %2901
        %2903 = vrot.lane.b32.xlu0 %v2818, 15
        %v2904 = vpop.permute.xlu0 %2903
        %2905 = vrot.lane.b32.xlu0 %v2819, 15
        %v2906 = vpop.permute.xlu0 %2905
        %2907 = vrot.lane.b32.xlu0 %v2820, 15
        %v2908 = vpop.permute.xlu0 %2907
        %2909 = vrot.lane.b32.xlu0 %v2821, 15
        %v2910 = vpop.permute.xlu0 %2909
        %2911 = vrot.lane.b32.xlu0 %v2822, 15
        %v2912 = vpop.permute.xlu0 %2911
        %2913 = vrot.lane.b32.xlu0 %v2823, 15
        %v2914 = vpop.permute.xlu0 %2913
        %2915 = vrot.lane.b32.xlu0 %v2824, 15
        %v2916 = vpop.permute.xlu0 %2915
        %2917 = vrot.lane.b32.xlu0 %v2825, 15
        %v2918 = vpop.permute.xlu0 %2917
        %2919 = vrot.lane.b32.xlu0 %v2826, 15
        %v2920 = vpop.permute.xlu0 %2919
        %2921 = vrot.lane.b32.xlu0 %v2827, 15
        %v2922 = vpop.permute.xlu0 %2921
        %2923 = vrot.lane.b32.xlu0 %v2828, 15
        %v2924 = vpop.permute.xlu0 %2923
        %vm2957 = vcmask 146552
        %2958 = vst.msk [vmem:[#allocation3] sm:$0xff] %vm2957, %v2862
        %2959 = vst.msk [vmem:[#allocation3 + $0x8] sm:$0xff] %vm2957, %v2864
        %2960 = vst.msk [vmem:[#allocation3 + $0x10] sm:$0xff] %vm2957, %v2866
        %2961 = vst.msk [vmem:[#allocation3 + $0x18] sm:$0xff] %vm2957, %v2868
        %2962 = vst.msk [vmem:[#allocation3 + $0x20] sm:$0xff] %vm2957, %v2870
        %2963 = vst.msk [vmem:[#allocation3 + $0x28] sm:$0xff] %vm2957, %v2872
        %2964 = vst.msk [vmem:[#allocation3 + $0x30] sm:$0xff] %vm2957, %v2874
        %2965 = vst.msk [vmem:[#allocation3 + $0x38] sm:$0xff] %vm2957, %v2876
        %2966 = vst.msk [vmem:[#allocation3 + $0x40] sm:$0xff] %vm2957, %v2878
        %2967 = vst.msk [vmem:[#allocation3 + $0x48] sm:$0xff] %vm2957, %v2880
        %2968 = vst.msk [vmem:[#allocation3 + $0x50] sm:$0xff] %vm2957, %v2882
        %2969 = vst.msk [vmem:[#allocation3 + $0x58] sm:$0xff] %vm2957, %v2884
        %2970 = vst.msk [vmem:[#allocation3 + $0x60] sm:$0xff] %vm2957, %v2886
        %2971 = vst.msk [vmem:[#allocation3 + $0x68] sm:$0xff] %vm2957, %v2888
        %2972 = vst.msk [vmem:[#allocation3 + $0x70] sm:$0xff] %vm2957, %v2890
        %2973 = vst.msk [vmem:[#allocation3 + $0x78] sm:$0xff] %vm2957, %v2892
        %2974 = vst.msk [vmem:[#allocation3 + $0x80] sm:$0xff] %vm2957, %v2894
        %2975 = vst.msk [vmem:[#allocation3 + $0x88] sm:$0xff] %vm2957, %v2896
        %2976 = vst.msk [vmem:[#allocation3 + $0x90] sm:$0xff] %vm2957, %v2898
        %2977 = vst.msk [vmem:[#allocation3 + $0x98] sm:$0xff] %vm2957, %v2900
        %2978 = vst.msk [vmem:[#allocation3 + $0xa0] sm:$0xff] %vm2957, %v2902
        %2979 = vst.msk [vmem:[#allocation3 + $0xa8] sm:$0xff] %vm2957, %v2904
        %2980 = vst.msk [vmem:[#allocation3 + $0xb0] sm:$0xff] %vm2957, %v2906
        %2981 = vst.msk [vmem:[#allocation3 + $0xb8] sm:$0xff] %vm2957, %v2908
        %2982 = vst.msk [vmem:[#allocation3 + $0xc0] sm:$0xff] %vm2957, %v2910
        %2983 = vst.msk [vmem:[#allocation3 + $0xc8] sm:$0xff] %vm2957, %v2912
        %2984 = vst.msk [vmem:[#allocation3 + $0xd0] sm:$0xff] %vm2957, %v2914
        %2985 = vst.msk [vmem:[#allocation3 + $0xd8] sm:$0xff] %vm2957, %v2916
        %2986 = vst.msk [vmem:[#allocation3 + $0xe0] sm:$0xff] %vm2957, %v2918
        %2987 = vst.msk [vmem:[#allocation3 + $0xe8] sm:$0xff] %vm2957, %v2920
        %2988 = vst.msk [vmem:[#allocation3 + $0xf0] sm:$0xff] %vm2957, %v2922
        %2989 = vst.msk [vmem:[#allocation3 + $0xf8] sm:$0xff] %vm2957, %v2924
        %v2990 = vld [vmem:[#allocation2 + $0x27] sm:$0xff]
        %v2991 = vld [vmem:[#allocation2 + $0x2f] sm:$0xff]
        %v2992 = vld [vmem:[#allocation2 + $0x37] sm:$0xff]
        %v2993 = vld [vmem:[#allocation2 + $0x3f] sm:$0xff]
        %v2994 = vld [vmem:[#allocation2 + $0x47] sm:$0xff]
        %v2995 = vld [vmem:[#allocation2 + $0x4f] sm:$0xff]
        %v2996 = vld [vmem:[#allocation2 + $0x57] sm:$0xff]
        %v2997 = vld [vmem:[#allocation2 + $0x5f] sm:$0xff]
        %v2998 = vld [vmem:[#allocation2 + $0x67] sm:$0xff]
        %v2999 = vld [vmem:[#allocation2 + $0x6f] sm:$0xff]
        %v3000 = vld [vmem:[#allocation2 + $0x77] sm:$0xff]
        %v3001 = vld [vmem:[#allocation2 + $0x7f] sm:$0xff]
        %v3002 = vld [vmem:[#allocation2 + $0x87] sm:$0xff]
        %v3003 = vld [vmem:[#allocation2 + $0x8f] sm:$0xff]
        %v3004 = vld [vmem:[#allocation2 + $0x97] sm:$0xff]
        %v3005 = vld [vmem:[#allocation2 + $0x9f] sm:$0xff]
        %v3006 = vld [vmem:[#allocation2 + $0xa7] sm:$0xff]
        %v3007 = vld [vmem:[#allocation2 + $0xaf] sm:$0xff]
        %v3008 = vld [vmem:[#allocation2 + $0xb7] sm:$0xff]
        %v3009 = vld [vmem:[#allocation2 + $0xbf] sm:$0xff]
        %v3010 = vld [vmem:[#allocation2 + $0xc7] sm:$0xff]
        %v3011 = vld [vmem:[#allocation2 + $0xcf] sm:$0xff]
        %v3012 = vld [vmem:[#allocation2 + $0xd7] sm:$0xff]
        %v3013 = vld [vmem:[#allocation2 + $0xdf] sm:$0xff]
        %v3014 = vld [vmem:[#allocation2 + $0xe7] sm:$0xff]
        %v3015 = vld [vmem:[#allocation2 + $0xef] sm:$0xff]
        %v3016 = vld [vmem:[#allocation2 + $0xf7] sm:$0xff]
        %v3017 = vld [vmem:[#allocation2 + $0xff] sm:$0xff]
        %v3018 = vld [vmem:[#allocation2 + $0x107] sm:$0xff]
        %v3019 = vld [vmem:[#allocation2 + $0x10f] sm:$0xff]
        %v3020 = vld [vmem:[#allocation2 + $0x117] sm:$0xff]
        %v3021 = vld [vmem:[#allocation2 + $0x11f] sm:$0xff]
        %v3022 = vmul.f32 %v2990, %v1666
        %v3023 = vmul.f32 %v2991, %v1667
        %v3024 = vmul.f32 %v2992, %v1668
        %v3025 = vmul.f32 %v2993, %v1669
        %v3026 = vmul.f32 %v2994, %v1670
        %v3027 = vmul.f32 %v2995, %v1671
        %v3028 = vmul.f32 %v2996, %v1672
        %v3029 = vmul.f32 %v2997, %v1673
        %v3030 = vmul.f32 %v2998, %v1674
        %v3031 = vmul.f32 %v2999, %v1675
        %v3032 = vmul.f32 %v3000, %v1676
        %v3033 = vmul.f32 %v3001, %v1677
        %v3034 = vmul.f32 %v3002, %v1678
        %v3035 = vmul.f32 %v3003, %v1679
        %v3036 = vmul.f32 %v3004, %v1680
        %v3037 = vmul.f32 %v3005, %v1681
        %v3038 = vmul.f32 %v3006, %v1682
        %v3039 = vmul.f32 %v3007, %v1683
        %v3040 = vmul.f32 %v3008, %v1684
        %v3041 = vmul.f32 %v3009, %v1685
        %v3042 = vmul.f32 %v3010, %v1686
        %v3043 = vmul.f32 %v3011, %v1687
        %v3044 = vmul.f32 %v3012, %v1688
        %v3045 = vmul.f32 %v3013, %v1689
        %v3046 = vmul.f32 %v3014, %v1690
        %v3047 = vmul.f32 %v3015, %v1691
        %v3048 = vmul.f32 %v3016, %v1692
        %v3049 = vmul.f32 %v3017, %v1693
        %v3050 = vmul.f32 %v3018, %v1694
        %v3051 = vmul.f32 %v3019, %v1695
        %v3052 = vmul.f32 %v3020, %v1696
        %v3053 = vmul.f32 %v3021, %v1697
        %3086 = vrot.lane.b32.xlu0 %v3022, 18
        %v3087 = vpop.permute.xlu0 %3086
        %3088 = vrot.lane.b32.xlu0 %v3023, 18
        %v3089 = vpop.permute.xlu0 %3088
        %3090 = vrot.lane.b32.xlu0 %v3024, 18
        %v3091 = vpop.permute.xlu0 %3090
        %3092 = vrot.lane.b32.xlu0 %v3025, 18
        %v3093 = vpop.permute.xlu0 %3092
        %3094 = vrot.lane.b32.xlu0 %v3026, 18
        %v3095 = vpop.permute.xlu0 %3094
        %3096 = vrot.lane.b32.xlu0 %v3027, 18
        %v3097 = vpop.permute.xlu0 %3096
        %3098 = vrot.lane.b32.xlu0 %v3028, 18
        %v3099 = vpop.permute.xlu0 %3098
        %3100 = vrot.lane.b32.xlu0 %v3029, 18
        %v3101 = vpop.permute.xlu0 %3100
        %3102 = vrot.lane.b32.xlu0 %v3030, 18
        %v3103 = vpop.permute.xlu0 %3102
        %3104 = vrot.lane.b32.xlu0 %v3031, 18
        %v3105 = vpop.permute.xlu0 %3104
        %3106 = vrot.lane.b32.xlu0 %v3032, 18
        %v3107 = vpop.permute.xlu0 %3106
        %3108 = vrot.lane.b32.xlu0 %v3033, 18
        %v3109 = vpop.permute.xlu0 %3108
        %3110 = vrot.lane.b32.xlu0 %v3034, 18
        %v3111 = vpop.permute.xlu0 %3110
        %3112 = vrot.lane.b32.xlu0 %v3035, 18
        %v3113 = vpop.permute.xlu0 %3112
        %3114 = vrot.lane.b32.xlu0 %v3036, 18
        %v3115 = vpop.permute.xlu0 %3114
        %3116 = vrot.lane.b32.xlu0 %v3037, 18
        %v3117 = vpop.permute.xlu0 %3116
        %3118 = vrot.lane.b32.xlu0 %v3038, 18
        %v3119 = vpop.permute.xlu0 %3118
        %3120 = vrot.lane.b32.xlu0 %v3039, 18
        %v3121 = vpop.permute.xlu0 %3120
        %3122 = vrot.lane.b32.xlu0 %v3040, 18
        %v3123 = vpop.permute.xlu0 %3122
        %3124 = vrot.lane.b32.xlu0 %v3041, 18
        %v3125 = vpop.permute.xlu0 %3124
        %3126 = vrot.lane.b32.xlu0 %v3042, 18
        %v3127 = vpop.permute.xlu0 %3126
        %3128 = vrot.lane.b32.xlu0 %v3043, 18
        %v3129 = vpop.permute.xlu0 %3128
        %3130 = vrot.lane.b32.xlu0 %v3044, 18
        %v3131 = vpop.permute.xlu0 %3130
        %3132 = vrot.lane.b32.xlu0 %v3045, 18
        %v3133 = vpop.permute.xlu0 %3132
        %3134 = vrot.lane.b32.xlu0 %v3046, 18
        %v3135 = vpop.permute.xlu0 %3134
        %3136 = vrot.lane.b32.xlu0 %v3047, 18
        %v3137 = vpop.permute.xlu0 %3136
        %3138 = vrot.lane.b32.xlu0 %v3048, 18
        %v3139 = vpop.permute.xlu0 %3138
        %3140 = vrot.lane.b32.xlu0 %v3049, 18
        %v3141 = vpop.permute.xlu0 %3140
        %3142 = vrot.lane.b32.xlu0 %v3050, 18
        %v3143 = vpop.permute.xlu0 %3142
        %3144 = vrot.lane.b32.xlu0 %v3051, 18
        %v3145 = vpop.permute.xlu0 %3144
        %3146 = vrot.lane.b32.xlu0 %v3052, 18
        %v3147 = vpop.permute.xlu0 %3146
        %3148 = vrot.lane.b32.xlu0 %v3053, 18
        %v3149 = vpop.permute.xlu0 %3148
        %vm3182 = vcmask 171152
        %3183 = vst.msk [vmem:[#allocation3] sm:$0xff] %vm3182, %v3087
        %3184 = vst.msk [vmem:[#allocation3 + $0x8] sm:$0xff] %vm3182, %v3089
        %3185 = vst.msk [vmem:[#allocation3 + $0x10] sm:$0xff] %vm3182, %v3091
        %3186 = vst.msk [vmem:[#allocation3 + $0x18] sm:$0xff] %vm3182, %v3093
        %3187 = vst.msk [vmem:[#allocation3 + $0x20] sm:$0xff] %vm3182, %v3095
        %3188 = vst.msk [vmem:[#allocation3 + $0x28] sm:$0xff] %vm3182, %v3097
        %3189 = vst.msk [vmem:[#allocation3 + $0x30] sm:$0xff] %vm3182, %v3099
        %3190 = vst.msk [vmem:[#allocation3 + $0x38] sm:$0xff] %vm3182, %v3101
        %3191 = vst.msk [vmem:[#allocation3 + $0x40] sm:$0xff] %vm3182, %v3103
        %3192 = vst.msk [vmem:[#allocation3 + $0x48] sm:$0xff] %vm3182, %v3105
        %3193 = vst.msk [vmem:[#allocation3 + $0x50] sm:$0xff] %vm3182, %v3107
        %3194 = vst.msk [vmem:[#allocation3 + $0x58] sm:$0xff] %vm3182, %v3109
        %3195 = vst.msk [vmem:[#allocation3 + $0x60] sm:$0xff] %vm3182, %v3111
        %3196 = vst.msk [vmem:[#allocation3 + $0x68] sm:$0xff] %vm3182, %v3113
        %3197 = vst.msk [vmem:[#allocation3 + $0x70] sm:$0xff] %vm3182, %v3115
        %3198 = vst.msk [vmem:[#allocation3 + $0x78] sm:$0xff] %vm3182, %v3117
        %3199 = vst.msk [vmem:[#allocation3 + $0x80] sm:$0xff] %vm3182, %v3119
        %3200 = vst.msk [vmem:[#allocation3 + $0x88] sm:$0xff] %vm3182, %v3121
        %3201 = vst.msk [vmem:[#allocation3 + $0x90] sm:$0xff] %vm3182, %v3123
        %3202 = vst.msk [vmem:[#allocation3 + $0x98] sm:$0xff] %vm3182, %v3125
        %3203 = vst.msk [vmem:[#allocation3 + $0xa0] sm:$0xff] %vm3182, %v3127
        %3204 = vst.msk [vmem:[#allocation3 + $0xa8] sm:$0xff] %vm3182, %v3129
        %3205 = vst.msk [vmem:[#allocation3 + $0xb0] sm:$0xff] %vm3182, %v3131
        %3206 = vst.msk [vmem:[#allocation3 + $0xb8] sm:$0xff] %vm3182, %v3133
        %3207 = vst.msk [vmem:[#allocation3 + $0xc0] sm:$0xff] %vm3182, %v3135
        %3208 = vst.msk [vmem:[#allocation3 + $0xc8] sm:$0xff] %vm3182, %v3137
        %3209 = vst.msk [vmem:[#allocation3 + $0xd0] sm:$0xff] %vm3182, %v3139
        %3210 = vst.msk [vmem:[#allocation3 + $0xd8] sm:$0xff] %vm3182, %v3141
        %3211 = vst.msk [vmem:[#allocation3 + $0xe0] sm:$0xff] %vm3182, %v3143
        %3212 = vst.msk [vmem:[#allocation3 + $0xe8] sm:$0xff] %vm3182, %v3145
        %3213 = vst.msk [vmem:[#allocation3 + $0xf0] sm:$0xff] %vm3182, %v3147
        %3214 = vst.msk [vmem:[#allocation3 + $0xf8] sm:$0xff] %vm3182, %v3149
        %v3215 = vld [vmem:[#allocation2 + $0x28] sm:$0xff]
        %v3216 = vld [vmem:[#allocation2 + $0x30] sm:$0xff]
        %v3217 = vld [vmem:[#allocation2 + $0x38] sm:$0xff]
        %v3218 = vld [vmem:[#allocation2 + $0x40] sm:$0xff]
        %v3219 = vld [vmem:[#allocation2 + $0x48] sm:$0xff]
        %v3220 = vld [vmem:[#allocation2 + $0x50] sm:$0xff]
        %v3221 = vld [vmem:[#allocation2 + $0x58] sm:$0xff]
        %v3222 = vld [vmem:[#allocation2 + $0x60] sm:$0xff]
        %v3223 = vld [vmem:[#allocation2 + $0x68] sm:$0xff]
        %v3224 = vld [vmem:[#allocation2 + $0x70] sm:$0xff]
        %v3225 = vld [vmem:[#allocation2 + $0x78] sm:$0xff]
        %v3226 = vld [vmem:[#allocation2 + $0x80] sm:$0xff]
        %v3227 = vld [vmem:[#allocation2 + $0x88] sm:$0xff]
        %v3228 = vld [vmem:[#allocation2 + $0x90] sm:$0xff]
        %v3229 = vld [vmem:[#allocation2 + $0x98] sm:$0xff]
        %v3230 = vld [vmem:[#allocation2 + $0xa0] sm:$0xff]
        %v3231 = vld [vmem:[#allocation2 + $0xa8] sm:$0xff]
        %v3232 = vld [vmem:[#allocation2 + $0xb0] sm:$0xff]
        %v3233 = vld [vmem:[#allocation2 + $0xb8] sm:$0xff]
        %v3234 = vld [vmem:[#allocation2 + $0xc0] sm:$0xff]
        %v3235 = vld [vmem:[#allocation2 + $0xc8] sm:$0xff]
        %v3236 = vld [vmem:[#allocation2 + $0xd0] sm:$0xff]
        %v3237 = vld [vmem:[#allocation2 + $0xd8] sm:$0xff]
        %v3238 = vld [vmem:[#allocation2 + $0xe0] sm:$0xff]
        %v3239 = vld [vmem:[#allocation2 + $0xe8] sm:$0xff]
        %v3240 = vld [vmem:[#allocation2 + $0xf0] sm:$0xff]
        %v3241 = vld [vmem:[#allocation2 + $0xf8] sm:$0xff]
        %v3242 = vld [vmem:[#allocation2 + $0x100] sm:$0xff]
        %v3243 = vld [vmem:[#allocation2 + $0x108] sm:$0xff]
        %v3244 = vld [vmem:[#allocation2 + $0x110] sm:$0xff]
        %v3245 = vld [vmem:[#allocation2 + $0x118] sm:$0xff]
        %v3246 = vld [vmem:[#allocation2 + $0x120] sm:$0xff]
        %3279 = vrot.lane.b32.xlu0 %v3215, 21
        %v3280 = vpop.permute.xlu0 %3279
        %3281 = vrot.lane.b32.xlu0 %v3216, 21
        %v3282 = vpop.permute.xlu0 %3281
        %3283 = vrot.lane.b32.xlu0 %v3217, 21
        %v3284 = vpop.permute.xlu0 %3283
        %3285 = vrot.lane.b32.xlu0 %v3218, 21
        %v3286 = vpop.permute.xlu0 %3285
        %3287 = vrot.lane.b32.xlu0 %v3219, 21
        %v3288 = vpop.permute.xlu0 %3287
        %3289 = vrot.lane.b32.xlu0 %v3220, 21
        %v3290 = vpop.permute.xlu0 %3289
        %3291 = vrot.lane.b32.xlu0 %v3221, 21
        %v3292 = vpop.permute.xlu0 %3291
        %3293 = vrot.lane.b32.xlu0 %v3222, 21
        %v3294 = vpop.permute.xlu0 %3293
        %3295 = vrot.lane.b32.xlu0 %v3223, 21
        %v3296 = vpop.permute.xlu0 %3295
        %3297 = vrot.lane.b32.xlu0 %v3224, 21
        %v3298 = vpop.permute.xlu0 %3297
        %3299 = vrot.lane.b32.xlu0 %v3225, 21
        %v3300 = vpop.permute.xlu0 %3299
        %3301 = vrot.lane.b32.xlu0 %v3226, 21
        %v3302 = vpop.permute.xlu0 %3301
        %3303 = vrot.lane.b32.xlu0 %v3227, 21
        %v3304 = vpop.permute.xlu0 %3303
        %3305 = vrot.lane.b32.xlu0 %v3228, 21
        %v3306 = vpop.permute.xlu0 %3305
        %3307 = vrot.lane.b32.xlu0 %v3229, 21
        %v3308 = vpop.permute.xlu0 %3307
        %3309 = vrot.lane.b32.xlu0 %v3230, 21
        %v3310 = vpop.permute.xlu0 %3309
        %3311 = vrot.lane.b32.xlu0 %v3231, 21
        %v3312 = vpop.permute.xlu0 %3311
        %3313 = vrot.lane.b32.xlu0 %v3232, 21
        %v3314 = vpop.permute.xlu0 %3313
        %3315 = vrot.lane.b32.xlu0 %v3233, 21
        %v3316 = vpop.permute.xlu0 %3315
        %3317 = vrot.lane.b32.xlu0 %v3234, 21
        %v3318 = vpop.permute.xlu0 %3317
        %3319 = vrot.lane.b32.xlu0 %v3235, 21
        %v3320 = vpop.permute.xlu0 %3319
        %3321 = vrot.lane.b32.xlu0 %v3236, 21
        %v3322 = vpop.permute.xlu0 %3321
        %3323 = vrot.lane.b32.xlu0 %v3237, 21
        %v3324 = vpop.permute.xlu0 %3323
        %3325 = vrot.lane.b32.xlu0 %v3238, 21
        %v3326 = vpop.permute.xlu0 %3325
        %3327 = vrot.lane.b32.xlu0 %v3239, 21
        %v3328 = vpop.permute.xlu0 %3327
        %3329 = vrot.lane.b32.xlu0 %v3240, 21
        %v3330 = vpop.permute.xlu0 %3329
        %3331 = vrot.lane.b32.xlu0 %v3241, 21
        %v3332 = vpop.permute.xlu0 %3331
        %3333 = vrot.lane.b32.xlu0 %v3242, 21
        %v3334 = vpop.permute.xlu0 %3333
        %3335 = vrot.lane.b32.xlu0 %v3243, 21
        %v3336 = vpop.permute.xlu0 %3335
        %3337 = vrot.lane.b32.xlu0 %v3244, 21
        %v3338 = vpop.permute.xlu0 %3337
        %3339 = vrot.lane.b32.xlu0 %v3245, 21
        %v3340 = vpop.permute.xlu0 %3339
        %3341 = vrot.lane.b32.xlu0 %v3246, 21
        %v3342 = vpop.permute.xlu0 %3341
        %vm3375 = vcmask 195752
        %3376 = vst.msk [vmem:[#allocation3] sm:$0xff] %vm3375, %v3280
        %3377 = vst.msk [vmem:[#allocation3 + $0x8] sm:$0xff] %vm3375, %v3282
        %3378 = vst.msk [vmem:[#allocation3 + $0x10] sm:$0xff] %vm3375, %v3284
        %3379 = vst.msk [vmem:[#allocation3 + $0x18] sm:$0xff] %vm3375, %v3286
        %3380 = vst.msk [vmem:[#allocation3 + $0x20] sm:$0xff] %vm3375, %v3288
        %3381 = vst.msk [vmem:[#allocation3 + $0x28] sm:$0xff] %vm3375, %v3290
        %3382 = vst.msk [vmem:[#allocation3 + $0x30] sm:$0xff] %vm3375, %v3292
        %3383 = vst.msk [vmem:[#allocation3 + $0x38] sm:$0xff] %vm3375, %v3294
        %3384 = vst.msk [vmem:[#allocation3 + $0x40] sm:$0xff] %vm3375, %v3296
        %3385 = vst.msk [vmem:[#allocation3 + $0x48] sm:$0xff] %vm3375, %v3298
        %3386 = vst.msk [vmem:[#allocation3 + $0x50] sm:$0xff] %vm3375, %v3300
        %3387 = vst.msk [vmem:[#allocation3 + $0x58] sm:$0xff] %vm3375, %v3302
        %3388 = vst.msk [vmem:[#allocation3 + $0x60] sm:$0xff] %vm3375, %v3304
        %3389 = vst.msk [vmem:[#allocation3 + $0x68] sm:$0xff] %vm3375, %v3306
        %3390 = vst.msk [vmem:[#allocation3 + $0x70] sm:$0xff] %vm3375, %v3308
        %3391 = vst.msk [vmem:[#allocation3 + $0x78] sm:$0xff] %vm3375, %v3310
        %3392 = vst.msk [vmem:[#allocation3 + $0x80] sm:$0xff] %vm3375, %v3312
        %3393 = vst.msk [vmem:[#allocation3 + $0x88] sm:$0xff] %vm3375, %v3314
        %3394 = vst.msk [vmem:[#allocation3 + $0x90] sm:$0xff] %vm3375, %v3316
        %3395 = vst.msk [vmem:[#allocation3 + $0x98] sm:$0xff] %vm3375, %v3318
        %3396 = vst.msk [vmem:[#allocation3 + $0xa0] sm:$0xff] %vm3375, %v3320
        %3397 = vst.msk [vmem:[#allocation3 + $0xa8] sm:$0xff] %vm3375, %v3322
        %3398 = vst.msk [vmem:[#allocation3 + $0xb0] sm:$0xff] %vm3375, %v3324
        %3399 = vst.msk [vmem:[#allocation3 + $0xb8] sm:$0xff] %vm3375, %v3326
        %3400 = vst.msk [vmem:[#allocation3 + $0xc0] sm:$0xff] %vm3375, %v3328
        %3401 = vst.msk [vmem:[#allocation3 + $0xc8] sm:$0xff] %vm3375, %v3330
        %3402 = vst.msk [vmem:[#allocation3 + $0xd0] sm:$0xff] %vm3375, %v3332
        %3403 = vst.msk [vmem:[#allocation3 + $0xd8] sm:$0xff] %vm3375, %v3334
        %3404 = vst.msk [vmem:[#allocation3 + $0xe0] sm:$0xff] %vm3375, %v3336
        %3405 = vst.msk [vmem:[#allocation3 + $0xe8] sm:$0xff] %vm3375, %v3338
        %3406 = vst.msk [vmem:[#allocation3 + $0xf0] sm:$0xff] %vm3375, %v3340
        %3407 = vst.msk [vmem:[#allocation3 + $0xf8] sm:$0xff] %vm3375, %v3342
        %v3408 = vld [vmem:[#allocation2 + $0x29] sm:$0xff]
        %v3409 = vld [vmem:[#allocation2 + $0x31] sm:$0xff]
        %v3410 = vld [vmem:[#allocation2 + $0x39] sm:$0xff]
        %v3411 = vld [vmem:[#allocation2 + $0x41] sm:$0xff]
        %v3412 = vld [vmem:[#allocation2 + $0x49] sm:$0xff]
        %v3413 = vld [vmem:[#allocation2 + $0x51] sm:$0xff]
        %v3414 = vld [vmem:[#allocation2 + $0x59] sm:$0xff]
        %v3415 = vld [vmem:[#allocation2 + $0x61] sm:$0xff]
        %v3416 = vld [vmem:[#allocation2 + $0x69] sm:$0xff]
        %v3417 = vld [vmem:[#allocation2 + $0x71] sm:$0xff]
        %v3418 = vld [vmem:[#allocation2 + $0x79] sm:$0xff]
        %v3419 = vld [vmem:[#allocation2 + $0x81] sm:$0xff]
        %v3420 = vld [vmem:[#allocation2 + $0x89] sm:$0xff]
        %v3421 = vld [vmem:[#allocation2 + $0x91] sm:$0xff]
        %v3422 = vld [vmem:[#allocation2 + $0x99] sm:$0xff]
        %v3423 = vld [vmem:[#allocation2 + $0xa1] sm:$0xff]
        %v3424 = vld [vmem:[#allocation2 + $0xa9] sm:$0xff]
        %v3425 = vld [vmem:[#allocation2 + $0xb1] sm:$0xff]
        %v3426 = vld [vmem:[#allocation2 + $0xb9] sm:$0xff]
        %v3427 = vld [vmem:[#allocation2 + $0xc1] sm:$0xff]
        %v3428 = vld [vmem:[#allocation2 + $0xc9] sm:$0xff]
        %v3429 = vld [vmem:[#allocation2 + $0xd1] sm:$0xff]
        %v3430 = vld [vmem:[#allocation2 + $0xd9] sm:$0xff]
        %v3431 = vld [vmem:[#allocation2 + $0xe1] sm:$0xff]
        %v3432 = vld [vmem:[#allocation2 + $0xe9] sm:$0xff]
        %v3433 = vld [vmem:[#allocation2 + $0xf1] sm:$0xff]
        %v3434 = vld [vmem:[#allocation2 + $0xf9] sm:$0xff]
        %v3435 = vld [vmem:[#allocation2 + $0x101] sm:$0xff]
        %v3436 = vld [vmem:[#allocation2 + $0x109] sm:$0xff]
        %v3437 = vld [vmem:[#allocation2 + $0x111] sm:$0xff]
        %v3438 = vld [vmem:[#allocation2 + $0x119] sm:$0xff]
        %v3439 = vld [vmem:[#allocation2 + $0x121] sm:$0xff]
        %v3440 = vmul.f32 %v3408, %v1762
        %v3441 = vmul.f32 %v3409, %v1763
        %v3442 = vmul.f32 %v3410, %v1764
        %v3443 = vmul.f32 %v3411, %v1765
        %v3444 = vmul.f32 %v3412, %v1766
        %v3445 = vmul.f32 %v3413, %v1767
        %v3446 = vmul.f32 %v3414, %v1768
        %v3447 = vmul.f32 %v3415, %v1769
        %v3448 = vmul.f32 %v3416, %v1770
        %v3449 = vmul.f32 %v3417, %v1771
        %v3450 = vmul.f32 %v3418, %v1772
        %v3451 = vmul.f32 %v3419, %v1773
        %v3452 = vmul.f32 %v3420, %v1774
        %v3453 = vmul.f32 %v3421, %v1775
        %v3454 = vmul.f32 %v3422, %v1776
        %v3455 = vmul.f32 %v3423, %v1777
        %v3456 = vmul.f32 %v3424, %v1778
        %v3457 = vmul.f32 %v3425, %v1779
        %v3458 = vmul.f32 %v3426, %v1780
        %v3459 = vmul.f32 %v3427, %v1781
        %v3460 = vmul.f32 %v3428, %v1782
        %v3461 = vmul.f32 %v3429, %v1783
        %v3462 = vmul.f32 %v3430, %v1784
        %v3463 = vmul.f32 %v3431, %v1785
        %v3464 = vmul.f32 %v3432, %v1786
        %v3465 = vmul.f32 %v3433, %v1787
        %v3466 = vmul.f32 %v3434, %v1788
        %v3467 = vmul.f32 %v3435, %v1789
        %v3468 = vmul.f32 %v3436, %v1790
        %v3469 = vmul.f32 %v3437, %v1791
        %v3470 = vmul.f32 %v3438, %v1792
        %v3471 = vmul.f32 %v3439, %v1793
        %3504 = vrot.lane.b32.xlu0 %v3440, 24
        %v3505 = vpop.permute.xlu0 %3504
        %3506 = vrot.lane.b32.xlu0 %v3441, 24
        %v3507 = vpop.permute.xlu0 %3506
        %3508 = vrot.lane.b32.xlu0 %v3442, 24
        %v3509 = vpop.permute.xlu0 %3508
        %3510 = vrot.lane.b32.xlu0 %v3443, 24
        %v3511 = vpop.permute.xlu0 %3510
        %3512 = vrot.lane.b32.xlu0 %v3444, 24
        %v3513 = vpop.permute.xlu0 %3512
        %3514 = vrot.lane.b32.xlu0 %v3445, 24
        %v3515 = vpop.permute.xlu0 %3514
        %3516 = vrot.lane.b32.xlu0 %v3446, 24
        %v3517 = vpop.permute.xlu0 %3516
        %3518 = vrot.lane.b32.xlu0 %v3447, 24
        %v3519 = vpop.permute.xlu0 %3518
        %3520 = vrot.lane.b32.xlu0 %v3448, 24
        %v3521 = vpop.permute.xlu0 %3520
        %3522 = vrot.lane.b32.xlu0 %v3449, 24
        %v3523 = vpop.permute.xlu0 %3522
        %3524 = vrot.lane.b32.xlu0 %v3450, 24
        %v3525 = vpop.permute.xlu0 %3524
        %3526 = vrot.lane.b32.xlu0 %v3451, 24
        %v3527 = vpop.permute.xlu0 %3526
        %3528 = vrot.lane.b32.xlu0 %v3452, 24
        %v3529 = vpop.permute.xlu0 %3528
        %3530 = vrot.lane.b32.xlu0 %v3453, 24
        %v3531 = vpop.permute.xlu0 %3530
        %3532 = vrot.lane.b32.xlu0 %v3454, 24
        %v3533 = vpop.permute.xlu0 %3532
        %3534 = vrot.lane.b32.xlu0 %v3455, 24
        %v3535 = vpop.permute.xlu0 %3534
        %3536 = vrot.lane.b32.xlu0 %v3456, 24
        %v3537 = vpop.permute.xlu0 %3536
        %3538 = vrot.lane.b32.xlu0 %v3457, 24
        %v3539 = vpop.permute.xlu0 %3538
        %3540 = vrot.lane.b32.xlu0 %v3458, 24
        %v3541 = vpop.permute.xlu0 %3540
        %3542 = vrot.lane.b32.xlu0 %v3459, 24
        %v3543 = vpop.permute.xlu0 %3542
        %3544 = vrot.lane.b32.xlu0 %v3460, 24
        %v3545 = vpop.permute.xlu0 %3544
        %3546 = vrot.lane.b32.xlu0 %v3461, 24
        %v3547 = vpop.permute.xlu0 %3546
        %3548 = vrot.lane.b32.xlu0 %v3462, 24
        %v3549 = vpop.permute.xlu0 %3548
        %3550 = vrot.lane.b32.xlu0 %v3463, 24
        %v3551 = vpop.permute.xlu0 %3550
        %3552 = vrot.lane.b32.xlu0 %v3464, 24
        %v3553 = vpop.permute.xlu0 %3552
        %3554 = vrot.lane.b32.xlu0 %v3465, 24
        %v3555 = vpop.permute.xlu0 %3554
        %3556 = vrot.lane.b32.xlu0 %v3466, 24
        %v3557 = vpop.permute.xlu0 %3556
        %3558 = vrot.lane.b32.xlu0 %v3467, 24
        %v3559 = vpop.permute.xlu0 %3558
        %3560 = vrot.lane.b32.xlu0 %v3468, 24
        %v3561 = vpop.permute.xlu0 %3560
        %3562 = vrot.lane.b32.xlu0 %v3469, 24
        %v3563 = vpop.permute.xlu0 %3562
        %3564 = vrot.lane.b32.xlu0 %v3470, 24
        %v3565 = vpop.permute.xlu0 %3564
        %3566 = vrot.lane.b32.xlu0 %v3471, 24
        %v3567 = vpop.permute.xlu0 %3566
        %vm3600 = vcmask 220352
        %3601 = vst.msk [vmem:[#allocation3] sm:$0xff] %vm3600, %v3505
        %3602 = vst.msk [vmem:[#allocation3 + $0x8] sm:$0xff] %vm3600, %v3507
        %3603 = vst.msk [vmem:[#allocation3 + $0x10] sm:$0xff] %vm3600, %v3509
        %3604 = vst.msk [vmem:[#allocation3 + $0x18] sm:$0xff] %vm3600, %v3511
        %3605 = vst.msk [vmem:[#allocation3 + $0x20] sm:$0xff] %vm3600, %v3513
        %3606 = vst.msk [vmem:[#allocation3 + $0x28] sm:$0xff] %vm3600, %v3515
        %3607 = vst.msk [vmem:[#allocation3 + $0x30] sm:$0xff] %vm3600, %v3517
        %3608 = vst.msk [vmem:[#allocation3 + $0x38] sm:$0xff] %vm3600, %v3519
        %3609 = vst.msk [vmem:[#allocation3 + $0x40] sm:$0xff] %vm3600, %v3521
        %3610 = vst.msk [vmem:[#allocation3 + $0x48] sm:$0xff] %vm3600, %v3523
        %3611 = vst.msk [vmem:[#allocation3 + $0x50] sm:$0xff] %vm3600, %v3525
        %3612 = vst.msk [vmem:[#allocation3 + $0x58] sm:$0xff] %vm3600, %v3527
        %3613 = vst.msk [vmem:[#allocation3 + $0x60] sm:$0xff] %vm3600, %v3529
        %3614 = vst.msk [vmem:[#allocation3 + $0x68] sm:$0xff] %vm3600, %v3531
        %3615 = vst.msk [vmem:[#allocation3 + $0x70] sm:$0xff] %vm3600, %v3533
        %3616 = vst.msk [vmem:[#allocation3 + $0x78] sm:$0xff] %vm3600, %v3535
        %3617 = vst.msk [vmem:[#allocation3 + $0x80] sm:$0xff] %vm3600, %v3537
        %3618 = vst.msk [vmem:[#allocation3 + $0x88] sm:$0xff] %vm3600, %v3539
        %3619 = vst.msk [vmem:[#allocation3 + $0x90] sm:$0xff] %vm3600, %v3541
        %3620 = vst.msk [vmem:[#allocation3 + $0x98] sm:$0xff] %vm3600, %v3543
        %3621 = vst.msk [vmem:[#allocation3 + $0xa0] sm:$0xff] %vm3600, %v3545
        %3622 = vst.msk [vmem:[#allocation3 + $0xa8] sm:$0xff] %vm3600, %v3547
        %3623 = vst.msk [vmem:[#allocation3 + $0xb0] sm:$0xff] %vm3600, %v3549
        %3624 = vst.msk [vmem:[#allocation3 + $0xb8] sm:$0xff] %vm3600, %v3551
        %3625 = vst.msk [vmem:[#allocation3 + $0xc0] sm:$0xff] %vm3600, %v3553
        %3626 = vst.msk [vmem:[#allocation3 + $0xc8] sm:$0xff] %vm3600, %v3555
        %3627 = vst.msk [vmem:[#allocation3 + $0xd0] sm:$0xff] %vm3600, %v3557
        %3628 = vst.msk [vmem:[#allocation3 + $0xd8] sm:$0xff] %vm3600, %v3559
        %3629 = vst.msk [vmem:[#allocation3 + $0xe0] sm:$0xff] %vm3600, %v3561
        %3630 = vst.msk [vmem:[#allocation3 + $0xe8] sm:$0xff] %vm3600, %v3563
        %3631 = vst.msk [vmem:[#allocation3 + $0xf0] sm:$0xff] %vm3600, %v3565
        %3632 = vst.msk [vmem:[#allocation3 + $0xf8] sm:$0xff] %vm3600, %v3567
        %v3633 = vld [vmem:[#allocation3] sm:$0xff]
        %v3634 = vld [vmem:[#allocation3 + $0x8] sm:$0xff]
        %v3635 = vld [vmem:[#allocation3 + $0x10] sm:$0xff]
        %v3636 = vld [vmem:[#allocation3 + $0x18] sm:$0xff]
        %v3637 = vld [vmem:[#allocation3 + $0x20] sm:$0xff]
        %v3638 = vld [vmem:[#allocation3 + $0x28] sm:$0xff]
        %v3639 = vld [vmem:[#allocation3 + $0x30] sm:$0xff]
        %v3640 = vld [vmem:[#allocation3 + $0x38] sm:$0xff]
        %v3641 = vld [vmem:[#allocation3 + $0x40] sm:$0xff]
        %v3642 = vld [vmem:[#allocation3 + $0x48] sm:$0xff]
        %v3643 = vld [vmem:[#allocation3 + $0x50] sm:$0xff]
        %v3644 = vld [vmem:[#allocation3 + $0x58] sm:$0xff]
        %v3645 = vld [vmem:[#allocation3 + $0x60] sm:$0xff]
        %v3646 = vld [vmem:[#allocation3 + $0x68] sm:$0xff]
        %v3647 = vld [vmem:[#allocation3 + $0x70] sm:$0xff]
        %v3648 = vld [vmem:[#allocation3 + $0x78] sm:$0xff]
        %v3649 = vld [vmem:[#allocation3 + $0x80] sm:$0xff]
        %v3650 = vld [vmem:[#allocation3 + $0x88] sm:$0xff]
        %v3651 = vld [vmem:[#allocation3 + $0x90] sm:$0xff]
        %v3652 = vld [vmem:[#allocation3 + $0x98] sm:$0xff]
        %v3653 = vld [vmem:[#allocation3 + $0xa0] sm:$0xff]
        %v3654 = vld [vmem:[#allocation3 + $0xa8] sm:$0xff]
        %v3655 = vld [vmem:[#allocation3 + $0xb0] sm:$0xff]
        %v3656 = vld [vmem:[#allocation3 + $0xb8] sm:$0xff]
        %v3657 = vld [vmem:[#allocation3 + $0xc0] sm:$0xff]
        %v3658 = vld [vmem:[#allocation3 + $0xc8] sm:$0xff]
        %v3659 = vld [vmem:[#allocation3 + $0xd0] sm:$0xff]
        %v3660 = vld [vmem:[#allocation3 + $0xd8] sm:$0xff]
        %v3661 = vld [vmem:[#allocation3 + $0xe0] sm:$0xff]
        %v3662 = vld [vmem:[#allocation3 + $0xe8] sm:$0xff]
        %v3663 = vld [vmem:[#allocation3 + $0xf0] sm:$0xff]
        %v3664 = vld [vmem:[#allocation3 + $0xf8] sm:$0xff]
        %v3665 = vpack.c.bf16 %v3634, %v3633
        %v3666 = vpack.c.bf16 %v3636, %v3635
        %v3667 = vpack.c.bf16 %v3638, %v3637
        %v3668 = vpack.c.bf16 %v3640, %v3639
        %v3669 = vpack.c.bf16 %v3642, %v3641
        %v3670 = vpack.c.bf16 %v3644, %v3643
        %v3671 = vpack.c.bf16 %v3646, %v3645
        %v3672 = vpack.c.bf16 %v3648, %v3647
        %v3673 = vpack.c.bf16 %v3650, %v3649
        %v3674 = vpack.c.bf16 %v3652, %v3651
        %v3675 = vpack.c.bf16 %v3654, %v3653
        %v3676 = vpack.c.bf16 %v3656, %v3655
        %v3677 = vpack.c.bf16 %v3658, %v3657
        %v3678 = vpack.c.bf16 %v3660, %v3659
        %v3679 = vpack.c.bf16 %v3662, %v3661
        %v3680 = vpack.c.bf16 %v3664, %v3663
        %v3681 = vld [vmem:[%s1] sm:$0xf]
        %v3682 = vld [vmem:[%s1 + $0x4] sm:$0xf]
        %v3683 = vld [vmem:[%s1 + $0x8] sm:$0xf]
        %v3684 = vld [vmem:[%s1 + $0xc] sm:$0x3]
        %v3685 = vld [vmem:[%s2 + $0x10] sm:$0x1]
        %v3686 = vlaneseq
        %v3687 = vshrl.u32 %v3686, 7
        %v3688 = vsub.s32 0, %v3687
        %v3689 = vrot.slane %v3685, %v3688
        %v3694 = vunpack.c.l.b16 %v3681
        %v3695 = vunpack.c.l.b16 %v3682
        %v3696 = vunpack.c.l.b16 %v3683
        %v3697 = vunpack.c.l.b16 %v3684
        %v3698 = vpack.c.b16 %v3695, %v3694
        %v3699 = vpack.c.b16 %v3697, %v3696
        %vm3701 = vcmask 220160
        %v3703 = vsel %vm3701, %v3665, 0
        %v3706 = vsel %vm3701, %v3666, 0
        %v3709 = vsel %vm3701, %v3667, 0
        %v3712 = vsel %vm3701, %v3668, 0
        %v3715 = vsel %vm3701, %v3669, 0
        %v3718 = vsel %vm3701, %v3670, 0
        %v3721 = vsel %vm3701, %v3671, 0
        %v3724 = vsel %vm3701, %v3672, 0
        %v3727 = vsel %vm3701, %v3673, 0
        %v3730 = vsel %vm3701, %v3674, 0
        %v3733 = vsel %vm3701, %v3675, 0
        %v3736 = vsel %vm3701, %v3676, 0
        %v3739 = vsel %vm3701, %v3677, 0
        %v3742 = vsel %vm3701, %v3678, 0
        %v3745 = vsel %vm3701, %v3679, 0
        %v3748 = vsel %vm3701, %v3680, 0
        %vm3750 = vcmask 1044480
        %vm3751 = vcmask 1045504
        %v3752 = vsel %vm3750, 4294967295, 65535
        %v3753 = vsel %vm3751, %v3752, 0
        %v3755 = vand.u32 %v3699, %v3753
        %3757 = vmatprep.subr.bf16.mxu0 0
        %3758 = vmatpush1.bf16.msra.mxu0 %v3698
        %3759 = vmatprep.subr.bf16.mxu0 0
        %3760 = vmatpush1.bf16.msra.mxu0 %v3755
        %3761 = vmatprep.subr.bf16.mxu0 0
        %3762 = vmatpush1.bf16.msra.mxu0 0
        %3763 = vmatprep.subr.bf16.mxu0 0
        %3764 = vmatpush1.bf16.msra.mxu0 0
        %3765 = vmatprep.subr.bf16.mxu0 0
        %3766 = vmatpush1.bf16.msra.mxu0 0
        %3767 = vmatprep.subr.bf16.mxu0 0
        %3768 = vmatpush1.bf16.msra.mxu0 0
        %3769 = vmatprep.subr.bf16.mxu0 0
        %3770 = vmatpush1.bf16.msra.mxu0 0
        %3771 = vmatprep.subr.bf16.mxu0 0
        %3772 = vmatpush1.bf16.msra.mxu0 0
        %3773 = vmatprep.subr.bf16.mxu0 0
        %3774 = vmatpush1.bf16.msra.mxu0 0
        %3775 = vmatprep.subr.bf16.mxu0 0
        %3776 = vmatpush1.bf16.msra.mxu0 0
        %3777 = vmatprep.subr.bf16.mxu0 0
        %3778 = vmatpush1.bf16.msra.mxu0 0
        %3779 = vmatprep.subr.bf16.mxu0 0
        %3780 = vmatpush1.bf16.msra.mxu0 0
        %3781 = vmatprep.subr.bf16.mxu0 0
        %3782 = vmatpush1.bf16.msra.mxu0 0
        %3783 = vmatprep.subr.bf16.mxu0 0
        %3784 = vmatpush1.bf16.msra.mxu0 0
        %3785 = vmatprep.subr.bf16.mxu0 0
        %3786 = vmatpush1.bf16.msra.mxu0 0
        %3787 = vmatprep.subr.bf16.mxu0 0
        %3788 = vmatpush1.bf16.msra.mxu0 0
        %3789 = vmatprep.mubr.bf16.mxu0 0
        %3790 = vmatmul.mubr.bf16.gmra.mrb[0].mxu0 %v3703
        %v3791 = vpop.f32.mrb[0].mxu0
        %v3792 = vadd.f32 %v3689, %v3791
        %v3793 = vpop.f32.mrb[0].mxu0
        %v3794 = vpop.f32.mrb[0].mxu0
        %v3795 = vadd.f32 %v3689, %v3794
        %v3796 = vpop.f32.mrb[0].mxu0
        %3797 = vmatprep.mubr.bf16.mxu0 0
        %3798 = vmatmul.mubr.bf16.gmra.mrb[0].mxu0 %v3706
        %v3799 = vpop.f32.mrb[0].mxu0
        %v3800 = vadd.f32 %v3689, %v3799
        %v3801 = vpop.f32.mrb[0].mxu0
        %v3802 = vpop.f32.mrb[0].mxu0
        %v3803 = vadd.f32 %v3689, %v3802
        %v3804 = vpop.f32.mrb[0].mxu0
        %3805 = vmatprep.mubr.bf16.mxu0 0
        %3806 = vmatmul.mubr.bf16.gmra.mrb[0].mxu0 %v3709
        %v3807 = vpop.f32.mrb[0].mxu0
        %v3808 = vadd.f32 %v3689, %v3807
        %v3809 = vpop.f32.mrb[0].mxu0
        %v3810 = vpop.f32.mrb[0].mxu0
        %v3811 = vadd.f32 %v3689, %v3810
        %v3812 = vpop.f32.mrb[0].mxu0
        %3813 = vmatprep.mubr.bf16.mxu0 0
        %3814 = vmatmul.mubr.bf16.gmra.mrb[0].mxu0 %v3712
        %v3815 = vpop.f32.mrb[0].mxu0
        %v3816 = vadd.f32 %v3689, %v3815
        %v3817 = vpop.f32.mrb[0].mxu0
        %v3818 = vpop.f32.mrb[0].mxu0
        %v3819 = vadd.f32 %v3689, %v3818
        %v3820 = vpop.f32.mrb[0].mxu0
        %3821 = vmatprep.mubr.bf16.mxu0 0
        %3822 = vmatmul.mubr.bf16.gmra.mrb[0].mxu0 %v3715
        %v3823 = vpop.f32.mrb[0].mxu0
        %v3824 = vadd.f32 %v3689, %v3823
        %v3825 = vpop.f32.mrb[0].mxu0
        %v3826 = vpop.f32.mrb[0].mxu0
        %v3827 = vadd.f32 %v3689, %v3826
        %v3828 = vpop.f32.mrb[0].mxu0
        %3829 = vmatprep.mubr.bf16.mxu0 0
        %3830 = vmatmul.mubr.bf16.gmra.mrb[0].mxu0 %v3718
        %v3831 = vpop.f32.mrb[0].mxu0
        %v3832 = vadd.f32 %v3689, %v3831
        %v3833 = vpop.f32.mrb[0].mxu0
        %v3834 = vpop.f32.mrb[0].mxu0
        %v3835 = vadd.f32 %v3689, %v3834
        %v3836 = vpop.f32.mrb[0].mxu0
        %3837 = vmatprep.mubr.bf16.mxu0 0
        %3838 = vmatmul.mubr.bf16.gmra.mrb[0].mxu0 %v3721
        %v3839 = vpop.f32.mrb[0].mxu0
        %v3840 = vadd.f32 %v3689, %v3839
        %v3841 = vpop.f32.mrb[0].mxu0
        %v3842 = vpop.f32.mrb[0].mxu0
        %v3843 = vadd.f32 %v3689, %v3842
        %v3844 = vpop.f32.mrb[0].mxu0
        %3845 = vmatprep.mubr.bf16.mxu0 0
        %3846 = vmatmul.mubr.bf16.gmra.mrb[0].mxu0 %v3724
        %v3847 = vpop.f32.mrb[0].mxu0
        %v3848 = vadd.f32 %v3689, %v3847
        %v3849 = vpop.f32.mrb[0].mxu0
        %v3850 = vpop.f32.mrb[0].mxu0
        %v3851 = vadd.f32 %v3689, %v3850
        %v3852 = vpop.f32.mrb[0].mxu0
        %3853 = vmatprep.mubr.bf16.mxu0 0
        %3854 = vmatmul.mubr.bf16.gmra.mrb[0].mxu0 %v3727
        %v3855 = vpop.f32.mrb[0].mxu0
        %v3856 = vadd.f32 %v3689, %v3855
        %v3857 = vpop.f32.mrb[0].mxu0
        %v3858 = vpop.f32.mrb[0].mxu0
        %v3859 = vadd.f32 %v3689, %v3858
        %v3860 = vpop.f32.mrb[0].mxu0
        %3861 = vmatprep.mubr.bf16.mxu0 0
        %3862 = vmatmul.mubr.bf16.gmra.mrb[0].mxu0 %v3730
        %v3863 = vpop.f32.mrb[0].mxu0
        %v3864 = vadd.f32 %v3689, %v3863
        %v3865 = vpop.f32.mrb[0].mxu0
        %v3866 = vpop.f32.mrb[0].mxu0
        %v3867 = vadd.f32 %v3689, %v3866
        %v3868 = vpop.f32.mrb[0].mxu0
        %3869 = vmatprep.mubr.bf16.mxu0 0
        %3870 = vmatmul.mubr.bf16.gmra.mrb[0].mxu0 %v3733
        %v3871 = vpop.f32.mrb[0].mxu0
        %v3872 = vadd.f32 %v3689, %v3871
        %v3873 = vpop.f32.mrb[0].mxu0
        %v3874 = vpop.f32.mrb[0].mxu0
        %v3875 = vadd.f32 %v3689, %v3874
        %v3876 = vpop.f32.mrb[0].mxu0
        %3877 = vmatprep.mubr.bf16.mxu0 0
        %3878 = vmatmul.mubr.bf16.gmra.mrb[0].mxu0 %v3736
        %v3879 = vpop.f32.mrb[0].mxu0
        %v3880 = vadd.f32 %v3689, %v3879
        %v3881 = vpop.f32.mrb[0].mxu0
        %v3882 = vpop.f32.mrb[0].mxu0
        %v3883 = vadd.f32 %v3689, %v3882
        %v3884 = vpop.f32.mrb[0].mxu0
        %3885 = vmatprep.mubr.bf16.mxu0 0
        %3886 = vmatmul.mubr.bf16.gmra.mrb[0].mxu0 %v3739
        %v3887 = vpop.f32.mrb[0].mxu0
        %v3888 = vadd.f32 %v3689, %v3887
        %v3889 = vpop.f32.mrb[0].mxu0
        %v3890 = vpop.f32.mrb[0].mxu0
        %v3891 = vadd.f32 %v3689, %v3890
        %v3892 = vpop.f32.mrb[0].mxu0
        %3893 = vmatprep.mubr.bf16.mxu0 0
        %3894 = vmatmul.mubr.bf16.gmra.mrb[0].mxu0 %v3742
        %v3895 = vpop.f32.mrb[0].mxu0
        %v3896 = vadd.f32 %v3689, %v3895
        %v3897 = vpop.f32.mrb[0].mxu0
        %v3898 = vpop.f32.mrb[0].mxu0
        %v3899 = vadd.f32 %v3689, %v3898
        %v3900 = vpop.f32.mrb[0].mxu0
        %3901 = vmatprep.mubr.bf16.mxu0 0
        %3902 = vmatmul.mubr.bf16.gmra.mrb[0].mxu0 %v3745
        %v3903 = vpop.f32.mrb[0].mxu0
        %v3904 = vadd.f32 %v3689, %v3903
        %v3905 = vpop.f32.mrb[0].mxu0
        %v3906 = vpop.f32.mrb[0].mxu0
        %v3907 = vadd.f32 %v3689, %v3906
        %v3908 = vpop.f32.mrb[0].mxu0
        %3909 = vmatprep.mubr.bf16.mxu0 0
        %3910 = vmatmul.mubr.bf16.gmra.mrb[0].mxu0 %v3748
        %v3911 = vpop.f32.mrb[0].mxu0
        %v3912 = vadd.f32 %v3689, %v3911
        %v3913 = vpop.f32.mrb[0].mxu0
        %v3914 = vpop.f32.mrb[0].mxu0
        %v3915 = vadd.f32 %v3689, %v3914
        %v3916 = vpop.f32.mrb[0].mxu0
        %3917 = vdwg.mxu0
        %v3918 = vmax.f32 %v3792, 0.0
        %v3919 = vmax.f32 %v3795, 0.0
        %v3920 = vmax.f32 %v3800, 0.0
        %v3921 = vmax.f32 %v3803, 0.0
        %v3922 = vmax.f32 %v3808, 0.0
        %v3923 = vmax.f32 %v3811, 0.0
        %v3924 = vmax.f32 %v3816, 0.0
        %v3925 = vmax.f32 %v3819, 0.0
        %v3926 = vmax.f32 %v3824, 0.0
        %v3927 = vmax.f32 %v3827, 0.0
        %v3928 = vmax.f32 %v3832, 0.0
        %v3929 = vmax.f32 %v3835, 0.0
        %v3930 = vmax.f32 %v3840, 0.0
        %v3931 = vmax.f32 %v3843, 0.0
        %v3932 = vmax.f32 %v3848, 0.0
        %v3933 = vmax.f32 %v3851, 0.0
        %v3934 = vmax.f32 %v3856, 0.0
        %v3935 = vmax.f32 %v3859, 0.0
        %v3936 = vmax.f32 %v3864, 0.0
        %v3937 = vmax.f32 %v3867, 0.0
        %v3938 = vmax.f32 %v3872, 0.0
        %v3939 = vmax.f32 %v3875, 0.0
        %v3940 = vmax.f32 %v3880, 0.0
        %v3941 = vmax.f32 %v3883, 0.0
        %v3942 = vmax.f32 %v3888, 0.0
        %v3943 = vmax.f32 %v3891, 0.0
        %v3944 = vmax.f32 %v3896, 0.0
        %v3945 = vmax.f32 %v3899, 0.0
        %v3946 = vmax.f32 %v3904, 0.0
        %v3947 = vmax.f32 %v3907, 0.0
        %v3948 = vmax.f32 %v3912, 0.0
        %v3949 = vmax.f32 %v3915, 0.0
        %v3950 = vpack.c.bf16 %v3919, %v3918
        %v3951 = vpack.c.bf16 %v3921, %v3920
        %v3952 = vpack.c.bf16 %v3923, %v3922
        %v3953 = vpack.c.bf16 %v3925, %v3924
        %v3954 = vpack.c.bf16 %v3927, %v3926
        %v3955 = vpack.c.bf16 %v3929, %v3928
        %v3956 = vpack.c.bf16 %v3931, %v3930
        %v3957 = vpack.c.bf16 %v3933, %v3932
        %v3958 = vpack.c.bf16 %v3935, %v3934
        %v3959 = vpack.c.bf16 %v3937, %v3936
        %v3960 = vpack.c.bf16 %v3939, %v3938
        %v3961 = vpack.c.bf16 %v3941, %v3940
        %v3962 = vpack.c.bf16 %v3943, %v3942
        %v3963 = vpack.c.bf16 %v3945, %v3944
        %v3964 = vpack.c.bf16 %v3947, %v3946
        %v3965 = vpack.c.bf16 %v3949, %v3948
        %v3966 = vld [vmem:[%s1 + $0x10] sm:$0xf]
        %v3967 = vld [vmem:[%s1 + $0x14] sm:$0xf]
        %v3968 = vld [vmem:[%s1 + $0x18] sm:$0xf]
        %v3969 = vld [vmem:[%s1 + $0x1c] sm:$0xf]
        %v3970 = vld [vmem:[%s2 + $0x18] sm:$0x1]
        %v3971 = vlaneseq
        %v3972 = vshrl.u32 %v3971, 7
        %v3973 = vsub.s32 0, %v3972
        %v3974 = vrot.slane %v3970, %v3973
        %v3979 = vunpack.c.l.b16 %v3966
        %v3980 = vunpack.c.l.b16 %v3967
        %v3981 = vunpack.c.l.b16 %v3968
        %v3982 = vunpack.c.l.b16 %v3969
        %v3983 = vpack.c.b16 %v3980, %v3979
        %v3984 = vpack.c.b16 %v3982, %v3981
        %vm3987 = vcmask 261120
        %v3989 = vsel %vm3987, %v3950, 0
        %v3992 = vsel %vm3987, %v3951, 0
        %v3995 = vsel %vm3987, %v3952, 0
        %v3998 = vsel %vm3987, %v3953, 0
        %v4001 = vsel %vm3987, %v3954, 0
        %v4004 = vsel %vm3987, %v3955, 0
        %v4007 = vsel %vm3987, %v3956, 0
        %v4010 = vsel %vm3987, %v3957, 0
        %v4013 = vsel %vm3987, %v3958, 0
        %v4016 = vsel %vm3987, %v3959, 0
        %v4019 = vsel %vm3987, %v3960, 0
        %v4022 = vsel %vm3987, %v3961, 0
        %v4025 = vsel %vm3987, %v3962, 0
        %v4028 = vsel %vm3987, %v3963, 0
        %v4031 = vsel %vm3987, %v3964, 0
        %v4034 = vsel %vm3987, %v3965, 0
        %4036 = vmatprep.subr.bf16.mxu0 0
        %4037 = vmatpush1.bf16.msra.mxu0 %v3983
        %4038 = vmatprep.subr.bf16.mxu0 0
        %4039 = vmatpush1.bf16.msra.mxu0 %v3984
        %4040 = vmatprep.subr.bf16.mxu0 0
        %4041 = vmatpush1.bf16.msra.mxu0 0
        %4042 = vmatprep.subr.bf16.mxu0 0
        %4043 = vmatpush1.bf16.msra.mxu0 0
        %4044 = vmatprep.subr.bf16.mxu0 0
        %4045 = vmatpush1.bf16.msra.mxu0 0
        %4046 = vmatprep.subr.bf16.mxu0 0
        %4047 = vmatpush1.bf16.msra.mxu0 0
        %4048 = vmatprep.subr.bf16.mxu0 0
        %4049 = vmatpush1.bf16.msra.mxu0 0
        %4050 = vmatprep.subr.bf16.mxu0 0
        %4051 = vmatpush1.bf16.msra.mxu0 0
        %4052 = vmatprep.subr.bf16.mxu0 0
        %4053 = vmatpush1.bf16.msra.mxu0 0
        %4054 = vmatprep.subr.bf16.mxu0 0
        %4055 = vmatpush1.bf16.msra.mxu0 0
        %4056 = vmatprep.subr.bf16.mxu0 0
        %4057 = vmatpush1.bf16.msra.mxu0 0
        %4058 = vmatprep.subr.bf16.mxu0 0
        %4059 = vmatpush1.bf16.msra.mxu0 0
        %4060 = vmatprep.subr.bf16.mxu0 0
        %4061 = vmatpush1.bf16.msra.mxu0 0
        %4062 = vmatprep.subr.bf16.mxu0 0
        %4063 = vmatpush1.bf16.msra.mxu0 0
        %4064 = vmatprep.subr.bf16.mxu0 0
        %4065 = vmatpush1.bf16.msra.mxu0 0
        %4066 = vmatprep.subr.bf16.mxu0 0
        %4067 = vmatpush1.bf16.msra.mxu0 0
        %4068 = vmatprep.mubr.bf16.mxu0 0
        %4069 = vmatmul.mubr.bf16.gmra.mrb[0].mxu0 %v3989
        %v4070 = vpop.f32.mrb[0].mxu0
        %v4071 = vadd.f32 %v3974, %v4070
        %v4072 = vpop.f32.mrb[0].mxu0
        %v4073 = vpop.f32.mrb[0].mxu0
        %v4074 = vadd.f32 %v3974, %v4073
        %v4075 = vpop.f32.mrb[0].mxu0
        %4076 = vmatprep.mubr.bf16.mxu0 0
        %4077 = vmatmul.mubr.bf16.gmra.mrb[0].mxu0 %v3992
        %v4078 = vpop.f32.mrb[0].mxu0
        %v4079 = vadd.f32 %v3974, %v4078
        %v4080 = vpop.f32.mrb[0].mxu0
        %v4081 = vpop.f32.mrb[0].mxu0
        %v4082 = vadd.f32 %v3974, %v4081
        %v4083 = vpop.f32.mrb[0].mxu0
        %4084 = vmatprep.mubr.bf16.mxu0 0
        %4085 = vmatmul.mubr.bf16.gmra.mrb[0].mxu0 %v3995
        %v4086 = vpop.f32.mrb[0].mxu0
        %v4087 = vadd.f32 %v3974, %v4086
        %v4088 = vpop.f32.mrb[0].mxu0
        %v4089 = vpop.f32.mrb[0].mxu0
        %v4090 = vadd.f32 %v3974, %v4089
        %v4091 = vpop.f32.mrb[0].mxu0
        %4092 = vmatprep.mubr.bf16.mxu0 0
        %4093 = vmatmul.mubr.bf16.gmra.mrb[0].mxu0 %v3998
        %v4094 = vpop.f32.mrb[0].mxu0
        %v4095 = vadd.f32 %v3974, %v4094
        %v4096 = vpop.f32.mrb[0].mxu0
        %v4097 = vpop.f32.mrb[0].mxu0
        %v4098 = vadd.f32 %v3974, %v4097
        %v4099 = vpop.f32.mrb[0].mxu0
        %4100 = vmatprep.mubr.bf16.mxu0 0
        %4101 = vmatmul.mubr.bf16.gmra.mrb[0].mxu0 %v4001
        %v4102 = vpop.f32.mrb[0].mxu0
        %v4103 = vadd.f32 %v3974, %v4102
        %v4104 = vpop.f32.mrb[0].mxu0
        %v4105 = vpop.f32.mrb[0].mxu0
        %v4106 = vadd.f32 %v3974, %v4105
        %v4107 = vpop.f32.mrb[0].mxu0
        %4108 = vmatprep.mubr.bf16.mxu0 0
        %4109 = vmatmul.mubr.bf16.gmra.mrb[0].mxu0 %v4004
        %v4110 = vpop.f32.mrb[0].mxu0
        %v4111 = vadd.f32 %v3974, %v4110
        %v4112 = vpop.f32.mrb[0].mxu0
        %v4113 = vpop.f32.mrb[0].mxu0
        %v4114 = vadd.f32 %v3974, %v4113
        %v4115 = vpop.f32.mrb[0].mxu0
        %4116 = vmatprep.mubr.bf16.mxu0 0
        %4117 = vmatmul.mubr.bf16.gmra.mrb[0].mxu0 %v4007
        %v4118 = vpop.f32.mrb[0].mxu0
        %v4119 = vadd.f32 %v3974, %v4118
        %v4120 = vpop.f32.mrb[0].mxu0
        %v4121 = vpop.f32.mrb[0].mxu0
        %v4122 = vadd.f32 %v3974, %v4121
        %v4123 = vpop.f32.mrb[0].mxu0
        %4124 = vmatprep.mubr.bf16.mxu0 0
        %4125 = vmatmul.mubr.bf16.gmra.mrb[0].mxu0 %v4010
        %v4126 = vpop.f32.mrb[0].mxu0
        %v4127 = vadd.f32 %v3974, %v4126
        %v4128 = vpop.f32.mrb[0].mxu0
        %v4129 = vpop.f32.mrb[0].mxu0
        %v4130 = vadd.f32 %v3974, %v4129
        %v4131 = vpop.f32.mrb[0].mxu0
        %4132 = vmatprep.mubr.bf16.mxu0 0
        %4133 = vmatmul.mubr.bf16.gmra.mrb[0].mxu0 %v4013
        %v4134 = vpop.f32.mrb[0].mxu0
        %v4135 = vadd.f32 %v3974, %v4134
        %v4136 = vpop.f32.mrb[0].mxu0
        %v4137 = vpop.f32.mrb[0].mxu0
        %v4138 = vadd.f32 %v3974, %v4137
        %v4139 = vpop.f32.mrb[0].mxu0
        %4140 = vmatprep.mubr.bf16.mxu0 0
        %4141 = vmatmul.mubr.bf16.gmra.mrb[0].mxu0 %v4016
        %v4142 = vpop.f32.mrb[0].mxu0
        %v4143 = vadd.f32 %v3974, %v4142
        %v4144 = vpop.f32.mrb[0].mxu0
        %v4145 = vpop.f32.mrb[0].mxu0
        %v4146 = vadd.f32 %v3974, %v4145
        %v4147 = vpop.f32.mrb[0].mxu0
        %4148 = vmatprep.mubr.bf16.mxu0 0
        %4149 = vmatmul.mubr.bf16.gmra.mrb[0].mxu0 %v4019
        %v4150 = vpop.f32.mrb[0].mxu0
        %v4151 = vadd.f32 %v3974, %v4150
        %v4152 = vpop.f32.mrb[0].mxu0
        %v4153 = vpop.f32.mrb[0].mxu0
        %v4154 = vadd.f32 %v3974, %v4153
        %v4155 = vpop.f32.mrb[0].mxu0
        %4156 = vmatprep.mubr.bf16.mxu0 0
        %4157 = vmatmul.mubr.bf16.gmra.mrb[0].mxu0 %v4022
        %v4158 = vpop.f32.mrb[0].mxu0
        %v4159 = vadd.f32 %v3974, %v4158
        %v4160 = vpop.f32.mrb[0].mxu0
        %v4161 = vpop.f32.mrb[0].mxu0
        %v4162 = vadd.f32 %v3974, %v4161
        %v4163 = vpop.f32.mrb[0].mxu0
        %4164 = vmatprep.mubr.bf16.mxu0 0
        %4165 = vmatmul.mubr.bf16.gmra.mrb[0].mxu0 %v4025
        %v4166 = vpop.f32.mrb[0].mxu0
        %v4167 = vadd.f32 %v3974, %v4166
        %v4168 = vpop.f32.mrb[0].mxu0
        %v4169 = vpop.f32.mrb[0].mxu0
        %v4170 = vadd.f32 %v3974, %v4169
        %v4171 = vpop.f32.mrb[0].mxu0
        %4172 = vmatprep.mubr.bf16.mxu0 0
        %4173 = vmatmul.mubr.bf16.gmra.mrb[0].mxu0 %v4028
        %v4174 = vpop.f32.mrb[0].mxu0
        %v4175 = vadd.f32 %v3974, %v4174
        %v4176 = vpop.f32.mrb[0].mxu0
        %v4177 = vpop.f32.mrb[0].mxu0
        %v4178 = vadd.f32 %v3974, %v4177
        %v4179 = vpop.f32.mrb[0].mxu0
        %4180 = vmatprep.mubr.bf16.mxu0 0
        %4181 = vmatmul.mubr.bf16.gmra.mrb[0].mxu0 %v4031
        %v4182 = vpop.f32.mrb[0].mxu0
        %v4183 = vadd.f32 %v3974, %v4182
        %v4184 = vpop.f32.mrb[0].mxu0
        %v4185 = vpop.f32.mrb[0].mxu0
        %v4186 = vadd.f32 %v3974, %v4185
        %v4187 = vpop.f32.mrb[0].mxu0
        %4188 = vmatprep.mubr.bf16.mxu0 0
        %4189 = vmatmul.mubr.bf16.gmra.mrb[0].mxu0 %v4034
        %v4190 = vpop.f32.mrb[0].mxu0
        %v4191 = vadd.f32 %v3974, %v4190
        %v4192 = vpop.f32.mrb[0].mxu0
        %v4193 = vpop.f32.mrb[0].mxu0
        %v4194 = vadd.f32 %v3974, %v4193
        %v4195 = vpop.f32.mrb[0].mxu0
        %4196 = vdwg.mxu0
        %v4197 = vmax.f32 %v4071, 0.0
        %v4198 = vmax.f32 %v4074, 0.0
        %v4199 = vmax.f32 %v4079, 0.0
        %v4200 = vmax.f32 %v4082, 0.0
        %v4201 = vmax.f32 %v4087, 0.0
        %v4202 = vmax.f32 %v4090, 0.0
        %v4203 = vmax.f32 %v4095, 0.0
        %v4204 = vmax.f32 %v4098, 0.0
        %v4205 = vmax.f32 %v4103, 0.0
        %v4206 = vmax.f32 %v4106, 0.0
        %v4207 = vmax.f32 %v4111, 0.0
        %v4208 = vmax.f32 %v4114, 0.0
        %v4209 = vmax.f32 %v4119, 0.0
        %v4210 = vmax.f32 %v4122, 0.0
        %v4211 = vmax.f32 %v4127, 0.0
        %v4212 = vmax.f32 %v4130, 0.0
        %v4213 = vmax.f32 %v4135, 0.0
        %v4214 = vmax.f32 %v4138, 0.0
        %v4215 = vmax.f32 %v4143, 0.0
        %v4216 = vmax.f32 %v4146, 0.0
        %v4217 = vmax.f32 %v4151, 0.0
        %v4218 = vmax.f32 %v4154, 0.0
        %v4219 = vmax.f32 %v4159, 0.0
        %v4220 = vmax.f32 %v4162, 0.0
        %v4221 = vmax.f32 %v4167, 0.0
        %v4222 = vmax.f32 %v4170, 0.0
        %v4223 = vmax.f32 %v4175, 0.0
        %v4224 = vmax.f32 %v4178, 0.0
        %v4225 = vmax.f32 %v4183, 0.0
        %v4226 = vmax.f32 %v4186, 0.0
        %v4227 = vmax.f32 %v4191, 0.0
        %v4228 = vmax.f32 %v4194, 0.0
        %v4229 = vpack.c.bf16 %v4198, %v4197
        %v4230 = vpack.c.bf16 %v4200, %v4199
        %v4231 = vpack.c.bf16 %v4202, %v4201
        %v4232 = vpack.c.bf16 %v4204, %v4203
        %v4233 = vpack.c.bf16 %v4206, %v4205
        %v4234 = vpack.c.bf16 %v4208, %v4207
        %v4235 = vpack.c.bf16 %v4210, %v4209
        %v4236 = vpack.c.bf16 %v4212, %v4211
        %v4237 = vpack.c.bf16 %v4214, %v4213
        %v4238 = vpack.c.bf16 %v4216, %v4215
        %v4239 = vpack.c.bf16 %v4218, %v4217
        %v4240 = vpack.c.bf16 %v4220, %v4219
        %v4241 = vpack.c.bf16 %v4222, %v4221
        %v4242 = vpack.c.bf16 %v4224, %v4223
        %v4243 = vpack.c.bf16 %v4226, %v4225
        %v4244 = vpack.c.bf16 %v4228, %v4227
        %v4245 = vld [vmem:[%s1 + $0x20] sm:$0xf]
        %v4246 = vld [vmem:[%s1 + $0x24] sm:$0xf]
        %v4247 = vld [vmem:[%s1 + $0x28] sm:$0xf]
        %v4248 = vld [vmem:[%s1 + $0x2c] sm:$0xf]
        %v4249 = vld [vmem:[%s2 + $0x20] sm:$0x1]
        %v4250 = vlaneseq
        %v4251 = vshrl.u32 %v4250, 7
        %v4252 = vsub.s32 0, %v4251
        %v4253 = vrot.slane %v4249, %v4252
        %v4258 = vunpack.c.l.b16 %v4245
        %v4259 = vunpack.c.l.b16 %v4246
        %v4260 = vunpack.c.l.b16 %v4247
        %v4261 = vunpack.c.l.b16 %v4248
        %v4262 = vpack.c.b16 %v4259, %v4258
        %v4263 = vpack.c.b16 %v4261, %v4260
        %v4267 = vsel %vm3987, %v4229, 0
        %v4270 = vsel %vm3987, %v4230, 0
        %v4273 = vsel %vm3987, %v4231, 0
        %v4276 = vsel %vm3987, %v4232, 0
        %v4279 = vsel %vm3987, %v4233, 0
        %v4282 = vsel %vm3987, %v4234, 0
        %v4285 = vsel %vm3987, %v4235, 0
        %v4288 = vsel %vm3987, %v4236, 0
        %v4291 = vsel %vm3987, %v4237, 0
        %v4294 = vsel %vm3987, %v4238, 0
        %v4297 = vsel %vm3987, %v4239, 0
        %v4300 = vsel %vm3987, %v4240, 0
        %v4303 = vsel %vm3987, %v4241, 0
        %v4306 = vsel %vm3987, %v4242, 0
        %v4309 = vsel %vm3987, %v4243, 0
        %v4312 = vsel %vm3987, %v4244, 0
        %4314 = vmatprep.subr.bf16.mxu0 0
        %4315 = vmatpush1.bf16.msra.mxu0 %v4262
        %4316 = vmatprep.subr.bf16.mxu0 0
        %4317 = vmatpush1.bf16.msra.mxu0 %v4263
        %4318 = vmatprep.subr.bf16.mxu0 0
        %4319 = vmatpush1.bf16.msra.mxu0 0
        %4320 = vmatprep.subr.bf16.mxu0 0
        %4321 = vmatpush1.bf16.msra.mxu0 0
        %4322 = vmatprep.subr.bf16.mxu0 0
        %4323 = vmatpush1.bf16.msra.mxu0 0
        %4324 = vmatprep.subr.bf16.mxu0 0
        %4325 = vmatpush1.bf16.msra.mxu0 0
        %4326 = vmatprep.subr.bf16.mxu0 0
        %4327 = vmatpush1.bf16.msra.mxu0 0
        %4328 = vmatprep.subr.bf16.mxu0 0
        %4329 = vmatpush1.bf16.msra.mxu0 0
        %4330 = vmatprep.subr.bf16.mxu0 0
        %4331 = vmatpush1.bf16.msra.mxu0 0
        %4332 = vmatprep.subr.bf16.mxu0 0
        %4333 = vmatpush1.bf16.msra.mxu0 0
        %4334 = vmatprep.subr.bf16.mxu0 0
        %4335 = vmatpush1.bf16.msra.mxu0 0
        %4336 = vmatprep.subr.bf16.mxu0 0
        %4337 = vmatpush1.bf16.msra.mxu0 0
        %4338 = vmatprep.subr.bf16.mxu0 0
        %4339 = vmatpush1.bf16.msra.mxu0 0
        %4340 = vmatprep.subr.bf16.mxu0 0
        %4341 = vmatpush1.bf16.msra.mxu0 0
        %4342 = vmatprep.subr.bf16.mxu0 0
        %4343 = vmatpush1.bf16.msra.mxu0 0
        %4344 = vmatprep.subr.bf16.mxu0 0
        %4345 = vmatpush1.bf16.msra.mxu0 0
        %4346 = vmatprep.mubr.bf16.mxu0 0
        %4347 = vmatmul.mubr.bf16.gmra.mrb[0].mxu0 %v4267
        %v4348 = vpop.f32.mrb[0].mxu0
        %v4349 = vadd.f32 %v4253, %v4348
        %v4350 = vpop.f32.mrb[0].mxu0
        %v4351 = vpop.f32.mrb[0].mxu0
        %v4352 = vadd.f32 %v4253, %v4351
        %v4353 = vpop.f32.mrb[0].mxu0
        %4354 = vmatprep.mubr.bf16.mxu0 0
        %4355 = vmatmul.mubr.bf16.gmra.mrb[0].mxu0 %v4270
        %v4356 = vpop.f32.mrb[0].mxu0
        %v4357 = vadd.f32 %v4253, %v4356
        %v4358 = vpop.f32.mrb[0].mxu0
        %v4359 = vpop.f32.mrb[0].mxu0
        %v4360 = vadd.f32 %v4253, %v4359
        %v4361 = vpop.f32.mrb[0].mxu0
        %4362 = vmatprep.mubr.bf16.mxu0 0
        %4363 = vmatmul.mubr.bf16.gmra.mrb[0].mxu0 %v4273
        %v4364 = vpop.f32.mrb[0].mxu0
        %v4365 = vadd.f32 %v4253, %v4364
        %v4366 = vpop.f32.mrb[0].mxu0
        %v4367 = vpop.f32.mrb[0].mxu0
        %v4368 = vadd.f32 %v4253, %v4367
        %v4369 = vpop.f32.mrb[0].mxu0
        %4370 = vmatprep.mubr.bf16.mxu0 0
        %4371 = vmatmul.mubr.bf16.gmra.mrb[0].mxu0 %v4276
        %v4372 = vpop.f32.mrb[0].mxu0
        %v4373 = vadd.f32 %v4253, %v4372
        %v4374 = vpop.f32.mrb[0].mxu0
        %v4375 = vpop.f32.mrb[0].mxu0
        %v4376 = vadd.f32 %v4253, %v4375
        %v4377 = vpop.f32.mrb[0].mxu0
        %4378 = vmatprep.mubr.bf16.mxu0 0
        %4379 = vmatmul.mubr.bf16.gmra.mrb[0].mxu0 %v4279
        %v4380 = vpop.f32.mrb[0].mxu0
        %v4381 = vadd.f32 %v4253, %v4380
        %v4382 = vpop.f32.mrb[0].mxu0
        %v4383 = vpop.f32.mrb[0].mxu0
        %v4384 = vadd.f32 %v4253, %v4383
        %v4385 = vpop.f32.mrb[0].mxu0
        %4386 = vmatprep.mubr.bf16.mxu0 0
        %4387 = vmatmul.mubr.bf16.gmra.mrb[0].mxu0 %v4282
        %v4388 = vpop.f32.mrb[0].mxu0
        %v4389 = vadd.f32 %v4253, %v4388
        %v4390 = vpop.f32.mrb[0].mxu0
        %v4391 = vpop.f32.mrb[0].mxu0
        %v4392 = vadd.f32 %v4253, %v4391
        %v4393 = vpop.f32.mrb[0].mxu0
        %4394 = vmatprep.mubr.bf16.mxu0 0
        %4395 = vmatmul.mubr.bf16.gmra.mrb[0].mxu0 %v4285
        %v4396 = vpop.f32.mrb[0].mxu0
        %v4397 = vadd.f32 %v4253, %v4396
        %v4398 = vpop.f32.mrb[0].mxu0
        %v4399 = vpop.f32.mrb[0].mxu0
        %v4400 = vadd.f32 %v4253, %v4399
        %v4401 = vpop.f32.mrb[0].mxu0
        %4402 = vmatprep.mubr.bf16.mxu0 0
        %4403 = vmatmul.mubr.bf16.gmra.mrb[0].mxu0 %v4288
        %v4404 = vpop.f32.mrb[0].mxu0
        %v4405 = vadd.f32 %v4253, %v4404
        %v4406 = vpop.f32.mrb[0].mxu0
        %v4407 = vpop.f32.mrb[0].mxu0
        %v4408 = vadd.f32 %v4253, %v4407
        %v4409 = vpop.f32.mrb[0].mxu0
        %4410 = vmatprep.mubr.bf16.mxu0 0
        %4411 = vmatmul.mubr.bf16.gmra.mrb[0].mxu0 %v4291
        %v4412 = vpop.f32.mrb[0].mxu0
        %v4413 = vadd.f32 %v4253, %v4412
        %v4414 = vpop.f32.mrb[0].mxu0
        %v4415 = vpop.f32.mrb[0].mxu0
        %v4416 = vadd.f32 %v4253, %v4415
        %v4417 = vpop.f32.mrb[0].mxu0
        %4418 = vmatprep.mubr.bf16.mxu0 0
        %4419 = vmatmul.mubr.bf16.gmra.mrb[0].mxu0 %v4294
        %v4420 = vpop.f32.mrb[0].mxu0
        %v4421 = vadd.f32 %v4253, %v4420
        %v4422 = vpop.f32.mrb[0].mxu0
        %v4423 = vpop.f32.mrb[0].mxu0
        %v4424 = vadd.f32 %v4253, %v4423
        %v4425 = vpop.f32.mrb[0].mxu0
        %4426 = vmatprep.mubr.bf16.mxu0 0
        %4427 = vmatmul.mubr.bf16.gmra.mrb[0].mxu0 %v4297
        %v4428 = vpop.f32.mrb[0].mxu0
        %v4429 = vadd.f32 %v4253, %v4428
        %v4430 = vpop.f32.mrb[0].mxu0
        %v4431 = vpop.f32.mrb[0].mxu0
        %v4432 = vadd.f32 %v4253, %v4431
        %v4433 = vpop.f32.mrb[0].mxu0
        %4434 = vmatprep.mubr.bf16.mxu0 0
        %4435 = vmatmul.mubr.bf16.gmra.mrb[0].mxu0 %v4300
        %v4436 = vpop.f32.mrb[0].mxu0
        %v4437 = vadd.f32 %v4253, %v4436
        %v4438 = vpop.f32.mrb[0].mxu0
        %v4439 = vpop.f32.mrb[0].mxu0
        %v4440 = vadd.f32 %v4253, %v4439
        %v4441 = vpop.f32.mrb[0].mxu0
        %4442 = vmatprep.mubr.bf16.mxu0 0
        %4443 = vmatmul.mubr.bf16.gmra.mrb[0].mxu0 %v4303
        %v4444 = vpop.f32.mrb[0].mxu0
        %v4445 = vadd.f32 %v4253, %v4444
        %v4446 = vpop.f32.mrb[0].mxu0
        %v4447 = vpop.f32.mrb[0].mxu0
        %v4448 = vadd.f32 %v4253, %v4447
        %v4449 = vpop.f32.mrb[0].mxu0
        %4450 = vmatprep.mubr.bf16.mxu0 0
        %4451 = vmatmul.mubr.bf16.gmra.mrb[0].mxu0 %v4306
        %v4452 = vpop.f32.mrb[0].mxu0
        %v4453 = vadd.f32 %v4253, %v4452
        %v4454 = vpop.f32.mrb[0].mxu0
        %v4455 = vpop.f32.mrb[0].mxu0
        %v4456 = vadd.f32 %v4253, %v4455
        %v4457 = vpop.f32.mrb[0].mxu0
        %4458 = vmatprep.mubr.bf16.mxu0 0
        %4459 = vmatmul.mubr.bf16.gmra.mrb[0].mxu0 %v4309
        %v4460 = vpop.f32.mrb[0].mxu0
        %v4461 = vadd.f32 %v4253, %v4460
        %v4462 = vpop.f32.mrb[0].mxu0
        %v4463 = vpop.f32.mrb[0].mxu0
        %v4464 = vadd.f32 %v4253, %v4463
        %v4465 = vpop.f32.mrb[0].mxu0
        %4466 = vmatprep.mubr.bf16.mxu0 0
        %4467 = vmatmul.mubr.bf16.gmra.mrb[0].mxu0 %v4312
        %v4468 = vpop.f32.mrb[0].mxu0
        %v4469 = vadd.f32 %v4253, %v4468
        %v4470 = vpop.f32.mrb[0].mxu0
        %v4471 = vpop.f32.mrb[0].mxu0
        %v4472 = vadd.f32 %v4253, %v4471
        %v4473 = vpop.f32.mrb[0].mxu0
        %4474 = vdwg.mxu0
        %v4475 = vadd.f32 %v4349, %v3918
        %v4476 = vadd.f32 %v4352, %v3919
        %v4477 = vadd.f32 %v4357, %v3920
        %v4478 = vadd.f32 %v4360, %v3921
        %v4479 = vadd.f32 %v4365, %v3922
        %v4480 = vadd.f32 %v4368, %v3923
        %v4481 = vadd.f32 %v4373, %v3924
        %v4482 = vadd.f32 %v4376, %v3925
        %v4483 = vadd.f32 %v4381, %v3926
        %v4484 = vadd.f32 %v4384, %v3927
        %v4485 = vadd.f32 %v4389, %v3928
        %v4486 = vadd.f32 %v4392, %v3929
        %v4487 = vadd.f32 %v4397, %v3930
        %v4488 = vadd.f32 %v4400, %v3931
        %v4489 = vadd.f32 %v4405, %v3932
        %v4490 = vadd.f32 %v4408, %v3933
        %v4491 = vadd.f32 %v4413, %v3934
        %v4492 = vadd.f32 %v4416, %v3935
        %v4493 = vadd.f32 %v4421, %v3936
        %v4494 = vadd.f32 %v4424, %v3937
        %v4495 = vadd.f32 %v4429, %v3938
        %v4496 = vadd.f32 %v4432, %v3939
        %v4497 = vadd.f32 %v4437, %v3940
        %v4498 = vadd.f32 %v4440, %v3941
        %v4499 = vadd.f32 %v4445, %v3942
        %v4500 = vadd.f32 %v4448, %v3943
        %v4501 = vadd.f32 %v4453, %v3944
        %v4502 = vadd.f32 %v4456, %v3945
        %v4503 = vadd.f32 %v4461, %v3946
        %v4504 = vadd.f32 %v4464, %v3947
        %v4505 = vadd.f32 %v4469, %v3948
        %v4506 = vadd.f32 %v4472, %v3949
        %v4507 = vmax.f32 %v4475, 0.0
        %v4508 = vmax.f32 %v4476, 0.0
        %v4509 = vmax.f32 %v4477, 0.0
        %v4510 = vmax.f32 %v4478, 0.0
        %v4511 = vmax.f32 %v4479, 0.0
        %v4512 = vmax.f32 %v4480, 0.0
        %v4513 = vmax.f32 %v4481, 0.0
        %v4514 = vmax.f32 %v4482, 0.0
        %v4515 = vmax.f32 %v4483, 0.0
        %v4516 = vmax.f32 %v4484, 0.0
        %v4517 = vmax.f32 %v4485, 0.0
        %v4518 = vmax.f32 %v4486, 0.0
        %v4519 = vmax.f32 %v4487, 0.0
        %v4520 = vmax.f32 %v4488, 0.0
        %v4521 = vmax.f32 %v4489, 0.0
        %v4522 = vmax.f32 %v4490, 0.0
        %v4523 = vmax.f32 %v4491, 0.0
        %v4524 = vmax.f32 %v4492, 0.0
        %v4525 = vmax.f32 %v4493, 0.0
        %v4526 = vmax.f32 %v4494, 0.0
        %v4527 = vmax.f32 %v4495, 0.0
        %v4528 = vmax.f32 %v4496, 0.0
        %v4529 = vmax.f32 %v4497, 0.0
        %v4530 = vmax.f32 %v4498, 0.0
        %v4531 = vmax.f32 %v4499, 0.0
        %v4532 = vmax.f32 %v4500, 0.0
        %v4533 = vmax.f32 %v4501, 0.0
        %v4534 = vmax.f32 %v4502, 0.0
        %v4535 = vmax.f32 %v4503, 0.0
        %v4536 = vmax.f32 %v4504, 0.0
        %v4537 = vmax.f32 %v4505, 0.0
        %v4538 = vmax.f32 %v4506, 0.0
        %v4539 = vpack.c.bf16 %v4508, %v4507
        %v4540 = vpack.c.bf16 %v4510, %v4509
        %v4541 = vpack.c.bf16 %v4512, %v4511
        %v4542 = vpack.c.bf16 %v4514, %v4513
        %v4543 = vpack.c.bf16 %v4516, %v4515
        %v4544 = vpack.c.bf16 %v4518, %v4517
        %v4545 = vpack.c.bf16 %v4520, %v4519
        %v4546 = vpack.c.bf16 %v4522, %v4521
        %v4547 = vpack.c.bf16 %v4524, %v4523
        %v4548 = vpack.c.bf16 %v4526, %v4525
        %v4549 = vpack.c.bf16 %v4528, %v4527
        %v4550 = vpack.c.bf16 %v4530, %v4529
        %v4551 = vpack.c.bf16 %v4532, %v4531
        %v4552 = vpack.c.bf16 %v4534, %v4533
        %v4553 = vpack.c.bf16 %v4536, %v4535
        %v4554 = vpack.c.bf16 %v4538, %v4537
        %v4555 = vld [vmem:[%s1 + $0x30] sm:$0xf]
        %v4556 = vld [vmem:[%s1 + $0x34] sm:$0xf]
        %v4557 = vld [vmem:[%s1 + $0x38] sm:$0xf]
        %v4558 = vld [vmem:[%s1 + $0x3c] sm:$0xf]
        %v4559 = vld [vmem:[%s2 + $0x28] sm:$0x1]
        %v4560 = vlaneseq
        %v4561 = vshrl.u32 %v4560, 7
        %v4562 = vsub.s32 0, %v4561
        %v4563 = vrot.slane %v4559, %v4562
        %v4568 = vunpack.c.l.b16 %v4555
        %v4569 = vunpack.c.l.b16 %v4556
        %v4570 = vunpack.c.l.b16 %v4557
        %v4571 = vunpack.c.l.b16 %v4558
        %v4572 = vpack.c.b16 %v4569, %v4568
        %v4573 = vpack.c.b16 %v4571, %v4570
        %v4577 = vsel %vm3987, %v4539, 0
        %v4580 = vsel %vm3987, %v4540, 0
        %v4583 = vsel %vm3987, %v4541, 0
        %v4586 = vsel %vm3987, %v4542, 0
        %v4589 = vsel %vm3987, %v4543, 0
        %v4592 = vsel %vm3987, %v4544, 0
        %v4595 = vsel %vm3987, %v4545, 0
        %v4598 = vsel %vm3987, %v4546, 0
        %v4601 = vsel %vm3987, %v4547, 0
        %v4604 = vsel %vm3987, %v4548, 0
        %v4607 = vsel %vm3987, %v4549, 0
        %v4610 = vsel %vm3987, %v4550, 0
        %v4613 = vsel %vm3987, %v4551, 0
        %v4616 = vsel %vm3987, %v4552, 0
        %v4619 = vsel %vm3987, %v4553, 0
        %v4622 = vsel %vm3987, %v4554, 0
        %4624 = vmatprep.subr.bf16.mxu0 0
        %4625 = vmatpush1.bf16.msra.mxu0 %v4572
        %4626 = vmatprep.subr.bf16.mxu0 0
        %4627 = vmatpush1.bf16.msra.mxu0 %v4573
        %4628 = vmatprep.subr.bf16.mxu0 0
        %4629 = vmatpush1.bf16.msra.mxu0 0
        %4630 = vmatprep.subr.bf16.mxu0 0
        %4631 = vmatpush1.bf16.msra.mxu0 0
        %4632 = vmatprep.subr.bf16.mxu0 0
        %4633 = vmatpush1.bf16.msra.mxu0 0
        %4634 = vmatprep.subr.bf16.mxu0 0
        %4635 = vmatpush1.bf16.msra.mxu0 0
        %4636 = vmatprep.subr.bf16.mxu0 0
        %4637 = vmatpush1.bf16.msra.mxu0 0
        %4638 = vmatprep.subr.bf16.mxu0 0
        %4639 = vmatpush1.bf16.msra.mxu0 0
        %4640 = vmatprep.subr.bf16.mxu0 0
        %4641 = vmatpush1.bf16.msra.mxu0 0
        %4642 = vmatprep.subr.bf16.mxu0 0
        %4643 = vmatpush1.bf16.msra.mxu0 0
        %4644 = vmatprep.subr.bf16.mxu0 0
        %4645 = vmatpush1.bf16.msra.mxu0 0
        %4646 = vmatprep.subr.bf16.mxu0 0
        %4647 = vmatpush1.bf16.msra.mxu0 0
        %4648 = vmatprep.subr.bf16.mxu0 0
        %4649 = vmatpush1.bf16.msra.mxu0 0
        %4650 = vmatprep.subr.bf16.mxu0 0
        %4651 = vmatpush1.bf16.msra.mxu0 0
        %4652 = vmatprep.subr.bf16.mxu0 0
        %4653 = vmatpush1.bf16.msra.mxu0 0
        %4654 = vmatprep.subr.bf16.mxu0 0
        %4655 = vmatpush1.bf16.msra.mxu0 0
        %4656 = vmatprep.mubr.bf16.mxu0 0
        %4657 = vmatmul.mubr.bf16.gmra.mrb[0].mxu0 %v4577
        %v4658 = vpop.f32.mrb[0].mxu0
        %v4659 = vadd.f32 %v4563, %v4658
        %v4660 = vpop.f32.mrb[0].mxu0
        %v4661 = vpop.f32.mrb[0].mxu0
        %v4662 = vadd.f32 %v4563, %v4661
        %v4663 = vpop.f32.mrb[0].mxu0
        %4664 = vmatprep.mubr.bf16.mxu0 0
        %4665 = vmatmul.mubr.bf16.gmra.mrb[0].mxu0 %v4580
        %v4666 = vpop.f32.mrb[0].mxu0
        %v4667 = vadd.f32 %v4563, %v4666
        %v4668 = vpop.f32.mrb[0].mxu0
        %v4669 = vpop.f32.mrb[0].mxu0
        %v4670 = vadd.f32 %v4563, %v4669
        %v4671 = vpop.f32.mrb[0].mxu0
        %4672 = vmatprep.mubr.bf16.mxu0 0
        %4673 = vmatmul.mubr.bf16.gmra.mrb[0].mxu0 %v4583
        %v4674 = vpop.f32.mrb[0].mxu0
        %v4675 = vadd.f32 %v4563, %v4674
        %v4676 = vpop.f32.mrb[0].mxu0
        %v4677 = vpop.f32.mrb[0].mxu0
        %v4678 = vadd.f32 %v4563, %v4677
        %v4679 = vpop.f32.mrb[0].mxu0
        %4680 = vmatprep.mubr.bf16.mxu0 0
        %4681 = vmatmul.mubr.bf16.gmra.mrb[0].mxu0 %v4586
        %v4682 = vpop.f32.mrb[0].mxu0
        %v4683 = vadd.f32 %v4563, %v4682
        %v4684 = vpop.f32.mrb[0].mxu0
        %v4685 = vpop.f32.mrb[0].mxu0
        %v4686 = vadd.f32 %v4563, %v4685
        %v4687 = vpop.f32.mrb[0].mxu0
        %4688 = vmatprep.mubr.bf16.mxu0 0
        %4689 = vmatmul.mubr.bf16.gmra.mrb[0].mxu0 %v4589
        %v4690 = vpop.f32.mrb[0].mxu0
        %v4691 = vadd.f32 %v4563, %v4690
        %v4692 = vpop.f32.mrb[0].mxu0
        %v4693 = vpop.f32.mrb[0].mxu0
        %v4694 = vadd.f32 %v4563, %v4693
        %v4695 = vpop.f32.mrb[0].mxu0
        %4696 = vmatprep.mubr.bf16.mxu0 0
        %4697 = vmatmul.mubr.bf16.gmra.mrb[0].mxu0 %v4592
        %v4698 = vpop.f32.mrb[0].mxu0
        %v4699 = vadd.f32 %v4563, %v4698
        %v4700 = vpop.f32.mrb[0].mxu0
        %v4701 = vpop.f32.mrb[0].mxu0
        %v4702 = vadd.f32 %v4563, %v4701
        %v4703 = vpop.f32.mrb[0].mxu0
        %4704 = vmatprep.mubr.bf16.mxu0 0
        %4705 = vmatmul.mubr.bf16.gmra.mrb[0].mxu0 %v4595
        %v4706 = vpop.f32.mrb[0].mxu0
        %v4707 = vadd.f32 %v4563, %v4706
        %v4708 = vpop.f32.mrb[0].mxu0
        %v4709 = vpop.f32.mrb[0].mxu0
        %v4710 = vadd.f32 %v4563, %v4709
        %v4711 = vpop.f32.mrb[0].mxu0
        %4712 = vmatprep.mubr.bf16.mxu0 0
        %4713 = vmatmul.mubr.bf16.gmra.mrb[0].mxu0 %v4598
        %v4714 = vpop.f32.mrb[0].mxu0
        %v4715 = vadd.f32 %v4563, %v4714
        %v4716 = vpop.f32.mrb[0].mxu0
        %v4717 = vpop.f32.mrb[0].mxu0
        %v4718 = vadd.f32 %v4563, %v4717
        %v4719 = vpop.f32.mrb[0].mxu0
        %4720 = vmatprep.mubr.bf16.mxu0 0
        %4721 = vmatmul.mubr.bf16.gmra.mrb[0].mxu0 %v4601
        %v4722 = vpop.f32.mrb[0].mxu0
        %v4723 = vadd.f32 %v4563, %v4722
        %v4724 = vpop.f32.mrb[0].mxu0
        %v4725 = vpop.f32.mrb[0].mxu0
        %v4726 = vadd.f32 %v4563, %v4725
        %v4727 = vpop.f32.mrb[0].mxu0
        %4728 = vmatprep.mubr.bf16.mxu0 0
        %4729 = vmatmul.mubr.bf16.gmra.mrb[0].mxu0 %v4604
        %v4730 = vpop.f32.mrb[0].mxu0
        %v4731 = vadd.f32 %v4563, %v4730
        %v4732 = vpop.f32.mrb[0].mxu0
        %v4733 = vpop.f32.mrb[0].mxu0
        %v4734 = vadd.f32 %v4563, %v4733
        %v4735 = vpop.f32.mrb[0].mxu0
        %4736 = vmatprep.mubr.bf16.mxu0 0
        %4737 = vmatmul.mubr.bf16.gmra.mrb[0].mxu0 %v4607
        %v4738 = vpop.f32.mrb[0].mxu0
        %v4739 = vadd.f32 %v4563, %v4738
        %v4740 = vpop.f32.mrb[0].mxu0
        %v4741 = vpop.f32.mrb[0].mxu0
        %v4742 = vadd.f32 %v4563, %v4741
        %v4743 = vpop.f32.mrb[0].mxu0
        %4744 = vmatprep.mubr.bf16.mxu0 0
        %4745 = vmatmul.mubr.bf16.gmra.mrb[0].mxu0 %v4610
        %v4746 = vpop.f32.mrb[0].mxu0
        %v4747 = vadd.f32 %v4563, %v4746
        %v4748 = vpop.f32.mrb[0].mxu0
        %v4749 = vpop.f32.mrb[0].mxu0
        %v4750 = vadd.f32 %v4563, %v4749
        %v4751 = vpop.f32.mrb[0].mxu0
        %4752 = vmatprep.mubr.bf16.mxu0 0
        %4753 = vmatmul.mubr.bf16.gmra.mrb[0].mxu0 %v4613
        %v4754 = vpop.f32.mrb[0].mxu0
        %v4755 = vadd.f32 %v4563, %v4754
        %v4756 = vpop.f32.mrb[0].mxu0
        %v4757 = vpop.f32.mrb[0].mxu0
        %v4758 = vadd.f32 %v4563, %v4757
        %v4759 = vpop.f32.mrb[0].mxu0
        %4760 = vmatprep.mubr.bf16.mxu0 0
        %4761 = vmatmul.mubr.bf16.gmra.mrb[0].mxu0 %v4616
        %v4762 = vpop.f32.mrb[0].mxu0
        %v4763 = vadd.f32 %v4563, %v4762
        %v4764 = vpop.f32.mrb[0].mxu0
        %v4765 = vpop.f32.mrb[0].mxu0
        %v4766 = vadd.f32 %v4563, %v4765
        %v4767 = vpop.f32.mrb[0].mxu0
        %4768 = vmatprep.mubr.bf16.mxu0 0
        %4769 = vmatmul.mubr.bf16.gmra.mrb[0].mxu0 %v4619
        %v4770 = vpop.f32.mrb[0].mxu0
        %v4771 = vadd.f32 %v4563, %v4770
        %v4772 = vpop.f32.mrb[0].mxu0
        %v4773 = vpop.f32.mrb[0].mxu0
        %v4774 = vadd.f32 %v4563, %v4773
        %v4775 = vpop.f32.mrb[0].mxu0
        %4776 = vmatprep.mubr.bf16.mxu0 0
        %4777 = vmatmul.mubr.bf16.gmra.mrb[0].mxu0 %v4622
        %v4778 = vpop.f32.mrb[0].mxu0
        %v4779 = vadd.f32 %v4563, %v4778
        %v4780 = vpop.f32.mrb[0].mxu0
        %v4781 = vpop.f32.mrb[0].mxu0
        %v4782 = vadd.f32 %v4563, %v4781
        %v4783 = vpop.f32.mrb[0].mxu0
        %4784 = vdwg.mxu0
        %v4785 = vmax.f32 %v4659, 0.0
        %v4786 = vmax.f32 %v4662, 0.0
        %v4787 = vmax.f32 %v4667, 0.0
        %v4788 = vmax.f32 %v4670, 0.0
        %v4789 = vmax.f32 %v4675, 0.0
        %v4790 = vmax.f32 %v4678, 0.0
        %v4791 = vmax.f32 %v4683, 0.0
        %v4792 = vmax.f32 %v4686, 0.0
        %v4793 = vmax.f32 %v4691, 0.0
        %v4794 = vmax.f32 %v4694, 0.0
        %v4795 = vmax.f32 %v4699, 0.0
        %v4796 = vmax.f32 %v4702, 0.0
        %v4797 = vmax.f32 %v4707, 0.0
        %v4798 = vmax.f32 %v4710, 0.0
        %v4799 = vmax.f32 %v4715, 0.0
        %v4800 = vmax.f32 %v4718, 0.0
        %v4801 = vmax.f32 %v4723, 0.0
        %v4802 = vmax.f32 %v4726, 0.0
        %v4803 = vmax.f32 %v4731, 0.0
        %v4804 = vmax.f32 %v4734, 0.0
        %v4805 = vmax.f32 %v4739, 0.0
        %v4806 = vmax.f32 %v4742, 0.0
        %v4807 = vmax.f32 %v4747, 0.0
        %v4808 = vmax.f32 %v4750, 0.0
        %v4809 = vmax.f32 %v4755, 0.0
        %v4810 = vmax.f32 %v4758, 0.0
        %v4811 = vmax.f32 %v4763, 0.0
        %v4812 = vmax.f32 %v4766, 0.0
        %v4813 = vmax.f32 %v4771, 0.0
        %v4814 = vmax.f32 %v4774, 0.0
        %v4815 = vmax.f32 %v4779, 0.0
        %v4816 = vmax.f32 %v4782, 0.0
        %v4817 = vpack.c.bf16 %v4786, %v4785
        %v4818 = vpack.c.bf16 %v4788, %v4787
        %v4819 = vpack.c.bf16 %v4790, %v4789
        %v4820 = vpack.c.bf16 %v4792, %v4791
        %v4821 = vpack.c.bf16 %v4794, %v4793
        %v4822 = vpack.c.bf16 %v4796, %v4795
        %v4823 = vpack.c.bf16 %v4798, %v4797
        %v4824 = vpack.c.bf16 %v4800, %v4799
        %v4825 = vpack.c.bf16 %v4802, %v4801
        %v4826 = vpack.c.bf16 %v4804, %v4803
        %v4827 = vpack.c.bf16 %v4806, %v4805
        %v4828 = vpack.c.bf16 %v4808, %v4807
        %v4829 = vpack.c.bf16 %v4810, %v4809
        %v4830 = vpack.c.bf16 %v4812, %v4811
        %v4831 = vpack.c.bf16 %v4814, %v4813
        %v4832 = vpack.c.bf16 %v4816, %v4815
        %4833 = vmatprep.subr.bf16.mxu0 0
        %4834 = vmatpush1.bf16.msra.mxu0 %v4817
        %4835 = vmatprep.subr.bf16.mxu0 0
        %4836 = vmatpush1.bf16.msra.mxu0 %v4818
        %4837 = vmatprep.subr.bf16.mxu0 0
        %4838 = vmatpush1.bf16.msra.mxu0 %v4819
        %4839 = vmatprep.subr.bf16.mxu0 0
        %4840 = vmatpush1.bf16.msra.mxu0 %v4820
        %4841 = vmatprep.subr.bf16.mxu0 0
        %4842 = vmatpush1.bf16.msra.mxu0 %v4821
        %4843 = vmatprep.subr.bf16.mxu0 0
        %4844 = vmatpush1.bf16.msra.mxu0 %v4822
        %4845 = vmatprep.subr.bf16.mxu0 0
        %4846 = vmatpush1.bf16.msra.mxu0 %v4823
        %4847 = vmatprep.subr.bf16.mxu0 0
        %4848 = vmatpush1.bf16.msra.mxu0 %v4824
        %4849 = vmatprep.subr.bf16.mxu0 0
        %4850 = vmatpush1.bf16.msra.mxu0 %v4825
        %4851 = vmatprep.subr.bf16.mxu0 0
        %4852 = vmatpush1.bf16.msra.mxu0 %v4826
        %4853 = vmatprep.subr.bf16.mxu0 0
        %4854 = vmatpush1.bf16.msra.mxu0 %v4827
        %4855 = vmatprep.subr.bf16.mxu0 0
        %4856 = vmatpush1.bf16.msra.mxu0 %v4828
        %4857 = vmatprep.subr.bf16.mxu0 0
        %4858 = vmatpush1.bf16.msra.mxu0 %v4829
        %4859 = vmatprep.subr.bf16.mxu0 0
        %4860 = vmatpush1.bf16.msra.mxu0 %v4830
        %4861 = vmatprep.subr.bf16.mxu0 0
        %4862 = vmatpush1.bf16.msra.mxu0 %v4831
        %4863 = vmatprep.subr.bf16.mxu0 0
        %4864 = vmatpush1.bf16.msra.mxu0 %v4832
        %4865 = vmatprep.mubr.bf16.mxu0 998259584
        %4866 = vmatmul.mubr.bf16.gmra.mrb[0].mxu0 998259584
        %v4867 = vpop.f32.mrb[0].mxu0
        %v4868 = vadd.f32 0.0, %v4867
        %v4869 = vpop.f32.mrb[0].mxu0
        %v4870 = vpop.f32.mrb[0].mxu0
        %v4871 = vpop.f32.mrb[0].mxu0
        %4872 = vdwg.mxu0
        %v4873 = vpack.c.bf16 %v4868, %v4868
        %v4874 = vld [vmem:[%s1 + $0x40] sm:$0xf]
        %v4875 = vld [vmem:[%s1 + $0x44] sm:$0xf]
        %v4876 = vld [vmem:[%s1 + $0x48] sm:$0xf]
        %v4877 = vld [vmem:[%s1 + $0x4c] sm:$0xf]
        %v4878 = vld [vmem:[%s1 + $0x50] sm:$0xf]
        %v4879 = vld [vmem:[%s1 + $0x54] sm:$0xf]
        %v4880 = vld [vmem:[%s1 + $0x58] sm:$0xf]
        %v4881 = vld [vmem:[%s1 + $0x5c] sm:$0xf]
        %v4882 = vld [vmem:[%s2 + $0x30] sm:$0x1]
        %v4891 = vunpack.c.l.b16 %v4874
        %v4892 = vunpack.c.l.b16 %v4875
        %v4893 = vunpack.c.l.b16 %v4876
        %v4894 = vunpack.c.l.b16 %v4877
        %v4895 = vunpack.c.l.b16 %v4878
        %v4896 = vunpack.c.l.b16 %v4879
        %v4897 = vunpack.c.l.b16 %v4880
        %v4898 = vunpack.c.l.b16 %v4881
        %v4899 = vpack.c.b16 %v4892, %v4891
        %v4900 = vpack.c.b16 %v4894, %v4893
        %v4901 = vpack.c.b16 %v4896, %v4895
        %v4902 = vpack.c.b16 %v4898, %v4897
        %vm4907 = vcmask 523264
        %v4909 = vsel %vm4907, %v4873, 0
        %4911 = vmatprep.subr.bf16.mxu0 0
        %4912 = vmatpush1.bf16.msra.mxu0 %v4899
        %4913 = vmatprep.subr.bf16.mxu0 0
        %4914 = vmatpush1.bf16.msra.mxu0 %v4900
        %4915 = vmatprep.subr.bf16.mxu0 0
        %4916 = vmatpush1.bf16.msra.mxu0 %v4901
        %4917 = vmatprep.subr.bf16.mxu0 0
        %4918 = vmatpush1.bf16.msra.mxu0 %v4902
        %4919 = vmatprep.subr.bf16.mxu0 0
        %4920 = vmatpush1.bf16.msra.mxu0 0
        %4921 = vmatprep.subr.bf16.mxu0 0
        %4922 = vmatpush1.bf16.msra.mxu0 0
        %4923 = vmatprep.subr.bf16.mxu0 0
        %4924 = vmatpush1.bf16.msra.mxu0 0
        %4925 = vmatprep.subr.bf16.mxu0 0
        %4926 = vmatpush1.bf16.msra.mxu0 0
        %4927 = vmatprep.subr.bf16.mxu0 0
        %4928 = vmatpush1.bf16.msra.mxu0 0
        %4929 = vmatprep.subr.bf16.mxu0 0
        %4930 = vmatpush1.bf16.msra.mxu0 0
        %4931 = vmatprep.subr.bf16.mxu0 0
        %4932 = vmatpush1.bf16.msra.mxu0 0
        %4933 = vmatprep.subr.bf16.mxu0 0
        %4934 = vmatpush1.bf16.msra.mxu0 0
        %4935 = vmatprep.subr.bf16.mxu0 0
        %4936 = vmatpush1.bf16.msra.mxu0 0
        %4937 = vmatprep.subr.bf16.mxu0 0
        %4938 = vmatpush1.bf16.msra.mxu0 0
        %4939 = vmatprep.subr.bf16.mxu0 0
        %4940 = vmatpush1.bf16.msra.mxu0 0
        %4941 = vmatprep.subr.bf16.mxu0 0
        %4942 = vmatpush1.bf16.msra.mxu0 0
        %4943 = vmatprep.mubr.bf16.mxu0 0
        %4944 = vmatmul.mubr.bf16.gmra.mrb[0].mxu0 %v4909
        %v4945 = vpop.f32.mrb[0].mxu0
        %v4946 = vadd.f32 %v4882, %v4945
        %v4947 = vpop.f32.mrb[0].mxu0
        %v4948 = vpop.f32.mrb[0].mxu0
        %v4949 = vpop.f32.mrb[0].mxu0
        %4950 = vdwg.mxu0
        %4951 = vst [vmem:[%s163] sm:$0x1] %v4946
        %s4952 = sand.u32 %s93, 1
        %s4953 = scalar_lea.sflag [#allocation5], %s4952
        %s4954 = sand.u32 %s93, 1
        %s4955 = scalar_lea.vmem [#allocation4], %s4954
        // Predicated region
        $region33: #{forward.1} parent=31 // pred_check
          %p4956 = pneg %p103
        $region34: #{forward.1} parent=31 // pred_check_branch
          %4958 = sbr.rel (%p4956) target = $region36
        $region35: #{forward.1} parent=31 // pred_region
          %s4960 = ssub.s32 16, 16
          %4961 = vsyncadd %s4953, %s4960
          %s4962 = smul.addr %s17, 16
          %s4963 = scalar_lea.hbm %s3, %s4962
          %s4965 = sshll.u32 %s4955, 4
          %s4966 = int_to_ptr.vmem [resolvable:$true] %s4965
          %4968 = dma.vmem_to_hbm [thread:$0]  %s4966, 16, %s4963, %s4953
        $region36: #{forward.1} parent=31 // pred_fallthru
          _
      $region32: #{forward.1} parent=5 // pred_fallthru
        _
      %p4969 = scmp.le.s32.totalorder 2, %s12
      // Predicated region
      $region37: #{forward.1} parent=5 // pred_check
        %p4970 = pneg %p4969
      $region38: #{forward.1} parent=5 // pred_check_branch
        %4972 = sbr.rel (%p4970) target = $region40
      $region39: #{forward.1} parent=5 // pred_region
        %s4973 = ssub.s32 %s12, 2
        // Predicated region
        $region41: #{forward.1} parent=39 // pred_check
          %p4974 = pneg %p109
        $region42: #{forward.1} parent=39 // pred_check_branch
          %4976 = sbr.rel (%p4974) target = $region44
        $region43: #{forward.1} parent=39 // pred_region
          %s4977 = sand.u32 %s94, 1
          %s4978 = scalar_lea.sflag [#allocation5], %s4977
          %s4979 = sand.u32 %s94, 1
          %s4980 = scalar_lea.vmem [#allocation4], %s4979
          %4981 = dma.done %s4978, 16
        $region44: #{forward.1} parent=39 // pred_fallthru
          _
      $region40: #{forward.1} parent=5 // pred_fallthru
        _
    $region6: #{forward.1} parent=1 // loop_footer
      %s16 = sadd.s32 1, %s12
    $region7: #{forward.1} parent=1 // loop_footer_branch
      %11 = sbr.rel target = $region3
    $region8: #{forward.1} parent=1 // loop_exit
      _
    %4982 = vsyncpa [#allocation5], 1
    %s4983 = scalar_lea.sflag [#allocation5], 1
    %4984 = vsyncpa %s4983, 1

</llo_original>
